<compile_context>
chip_gen: v7x
topology: tpu7x:2x2x1
jax: 0.10.0
libtpu: 0.0.40
codegen_flags: <defaults>
</compile_context>

<pallas_src>
import functools
import math

import jax
import jax.numpy as jnp
from jax.experimental import pallas as pl
from jax.experimental.pallas import tpu as pltpu

# ----------------------------- configuration --------------------------------
B = 2                 # batch size
N_VIEWS = 4           # n = aug_data.shape[0] // batch_size
NUM_CLASSES = 4
IMG_C, IMG_H, IMG_W = 4, 8, 8
HIDDEN = 32
PROJ = 16
HEADS_TOTAL = NUM_CLASSES + NUM_CLASSES * N_VIEWS + PROJ   # cls | mcls | proj

SUP_T = 0.1           # args.sup_t
MIX_T = 0.1           # args.mix_t
SOFT_T = 4.0          # args.distill_t
ALPHA = 1.0           # args.alpha
MVAVG = 0.999         # args.mvavg_rate
USE_GLOBAL_FEAT = True

_VMEM = pltpu.MemorySpace.VMEM
_SMEM = pltpu.MemorySpace.SMEM


def _vm(n):
    return [pl.BlockSpec(memory_space=_VMEM)] * n


# --------------------------- in-kernel math helpers --------------------------
def _matmul(x, w):
    # x:(N,in) @ w:(in,out) -> contraction on x's lane axis, lane-dense output
    return jax.lax.dot_general(x, w, (((1,), (0,)), ((), ())),
                               preferred_element_type=jnp.float32)


def _matmul_t(a, b):
    # a @ b.T without an explicit transpose (MXU handles trans_b)
    return jax.lax.dot_general(a, b, (((1,), (1,)), ((), ())),
                               preferred_element_type=jnp.float32)


def _softmax_rows(x):
    e = jnp.exp(x - jnp.max(x, axis=-1, keepdims=True))
    return e * pl.reciprocal(jnp.sum(e, axis=-1, keepdims=True), approx=True)


def _log_softmax_rows(x):
    s = x - jnp.max(x, axis=-1, keepdims=True)
    return s - jnp.log(jnp.sum(jnp.exp(s), axis=-1, keepdims=True))


def _l2norm_rows(x):
    # EUP rsqrt instead of sqrt + divide
    return x * jax.lax.rsqrt(jnp.sum(x * x, axis=-1, keepdims=True) + 1e-24)


def _dist_pair(s, t):
    # DIST (Huang et al.) with tau=1, beta=gamma=1.  Returns (1,1).
    ys = _softmax_rows(s)
    yt = _softmax_rows(t)
    n, c = ys.shape
    eps = 1e-8
    # inter-class (row-wise pearson)
    a = ys - jnp.mean(ys, axis=1, keepdims=True)
    b = yt - jnp.mean(yt, axis=1, keepdims=True)
    num = jnp.sum(a * b, axis=1, keepdims=True)
    inv_den = jax.lax.rsqrt(jnp.sum(a * a, axis=1, keepdims=True)
                            * jnp.sum(b * b, axis=1, keepdims=True) + eps)
    inter = 1.0 - jnp.sum(num * inv_den, axis=0, keepdims=True) * (1.0 / n)
    # intra-class (column-wise pearson)
    a2 = ys - jnp.mean(ys, axis=0, keepdims=True)
    b2 = yt - jnp.mean(yt, axis=0, keepdims=True)
    num2 = jnp.sum(a2 * b2, axis=0, keepdims=True)
    inv_den2 = jax.lax.rsqrt(jnp.sum(a2 * a2, axis=0, keepdims=True)
                             * jnp.sum(b2 * b2, axis=0, keepdims=True) + eps)
    intra = 1.0 - jnp.sum(num2 * inv_den2, axis=1, keepdims=True) * (1.0 / c)
    return inter + intra                                             # (1,1)


def _kl_pair(s, t, l2_normalize):
    if l2_normalize:
        s = _l2norm_rows(s)
        t = _l2norm_rows(t)
    log_ps = _log_softmax_rows(s)
    pt = _softmax_rows(t)
    log_pt = _log_softmax_rows(t)
    kl_rows = jnp.sum(pt * (log_pt - log_ps), axis=-1, keepdims=True)
    return jnp.sum(kl_rows, axis=0, keepdims=True) * (1.0 / s.shape[0])  # (1,1)


def _ce_pair(z, onehot):
    m = jnp.max(z, axis=-1, keepdims=True)
    lse = jnp.log(jnp.sum(jnp.exp(z - m), axis=-1, keepdims=True)) + m
    per_row = -jnp.sum(onehot * (z - lse), axis=-1, keepdims=True)
    return jnp.sum(per_row, axis=0, keepdims=True) * (1.0 / z.shape[0])  # (1,1)


def _mean_log_prob_pos(sim, mask, logits_mask):
    sim = sim - jnp.max(sim, axis=1, keepdims=True)
    exp_l = jnp.exp(sim) * logits_mask
    log_prob = sim - jnp.log(jnp.sum(exp_l, axis=1, keepdims=True) + 1e-12)
    cnt = jnp.sum(mask, axis=1, keepdims=True)
    return (jnp.sum(mask * log_prob, axis=1, keepdims=True)
            * pl.reciprocal(jnp.maximum(cnt, 1e-12), approx=True))   # (N,1)


def _lane_select(scalars):
    # Pack a list of (1,1) scalars into distinct lanes of one (1,128) tile
    # (lane-dense unmasked store; wrapper reads [0, i]).
    lanes = jax.lax.broadcasted_iota(jnp.int32, (1, 128), 1)
    out = jnp.zeros((1, 128), jnp.float32)
    for i, v in enumerate(scalars):
        out = out + jnp.where(lanes == i, v, 0.0)
    return out


# ------------------------------- Pallas kernels ------------------------------
def _encoder_qk_kernel(x_ref, bw_ref, bb_ref, hw_ref, hb_ref, oq_ref, ok_ref):
    # Fused student + teacher encoder over ALL rows (aug + both mixup batches):
    # pool = mean_{H*W}(x); feat = relu(pool@W_b+b); heads = feat@W_heads+b.
    pooled = jnp.mean(x_ref[...], axis=-1)                           # (N, C)
    fq = jnp.maximum(_matmul(pooled, bw_ref[0]) + bb_ref[0], 0.0)
    oq_ref[...] = _matmul(fq, hw_ref[0]) + hb_ref[0]
    fk = jnp.maximum(_matmul(pooled, bw_ref[1]) + bb_ref[1], 0.0)
    ok_ref[...] = _matmul(fk, hw_ref[1]) + hb_ref[1]


def _local_forward_kernel(x_ref, labr_ref, labc_ref,
                          cw_ref, cb_ref, lw_ref, lb_ref, o_ref):
    # entire local branch: in-kernel pooling, clu backbone + local head +
    # l2norm (q & k), SupCon on student features, DIST(student, teacher).
    pooled = jnp.mean(x_ref[...], axis=-1)                           # (P, C)
    fq = jnp.maximum(_matmul(pooled, cw_ref[0]) + cb_ref[0], 0.0)
    lq = _l2norm_rows(_matmul(fq, lw_ref[0]) + lb_ref[0])
    fk = jnp.maximum(_matmul(pooled, cw_ref[1]) + cb_ref[1], 0.0)
    lk = jax.lax.stop_gradient(
        _l2norm_rows(_matmul(fk, lw_ref[1]) + lb_ref[1]))            # teacher

    p = lq.shape[0]
    rows = jax.lax.broadcasted_iota(jnp.int32, (p, p), 0)
    cols = jax.lax.broadcasted_iota(jnp.int32, (p, p), 1)
    lmask = (rows != cols).astype(jnp.float32)
    mask = (labr_ref[...] == labc_ref[...]).astype(jnp.float32) * lmask
    sim = _matmul_t(lq, lq) * (1.0 / SUP_T)
    mlpp = _mean_log_prob_pos(sim, mask, lmask)
    local_agg = -jnp.sum(mlpp, axis=0, keepdims=True) * (1.0 / p)    # (1,1)
    distill = _dist_pair(lq, lk)                                     # (1,1)
    o_ref[...] = _lane_select([local_agg, distill])


def _mixup_contrast_kernel(*refs, inv_temp, bs, has_sub):
    # masks are built in-kernel from int32 label vectors; the shared
    # log-sum-exp runs over the main (2bs) block and the sub block without
    # materializing the concatenated sim matrix; lam1/lam2 come from SMEM and
    # the lam-weighted mean finishes in-kernel -> one lane-dense scalar tile.
    if has_sub:
        (mixf_ref, sub_ref, labr_ref, labcm_ref,
         labcs_ref, lams_ref, o_ref) = refs
    else:
        (mixf_ref, labr_ref, labcm_ref, lams_ref, o_ref) = refs

    mixf = mixf_ref[...]
    n2 = mixf.shape[0]                                               # 2*bs
    labr = labr_ref[...]                                             # (2bs,2)
    labcm = labcm_ref[...]                                           # (3,2bs)
    r1 = labr[:, 0:1]
    r2 = labr[:, 1:2]
    c1 = labcm[0:1, :]
    c2a = labcm[1:2, :]
    c2b = labcm[2:3, :]

    rows = jax.lax.broadcasted_iota(jnp.int32, (n2, n2), 0)
    cols = jax.lax.broadcasted_iota(jnp.int32, (n2, n2), 1)
    lmask = (rows != cols).astype(jnp.float32)                       # logits_mask
    top = (rows < bs).astype(jnp.float32)

    mask1_m = (r1 == c1).astype(jnp.float32) * lmask
    mask2_m = (top * (r2 == c2a).astype(jnp.float32)
               + (1.0 - top) * (r2 == c2b).astype(jnp.float32)) * lmask

    sim_m = _matmul_t(mixf, mixf) * inv_temp
    if has_sub:
        sub = sub_ref[...]
        csub = labcs_ref[...]                                        # (1, S)
        sim_s = _matmul_t(mixf, sub) * inv_temp
        row_max = jnp.maximum(jnp.max(sim_m, axis=1, keepdims=True),
                              jnp.max(sim_s, axis=1, keepdims=True))
        sm = sim_m - row_max
        ss = sim_s - row_max
        denom = (jnp.sum(jnp.exp(sm) * lmask, axis=1, keepdims=True)
                 + jnp.sum(jnp.exp(ss), axis=1, keepdims=True))
        mask1_s = (r1 == csub).astype(jnp.float32)
        mask2_s = (r2 == csub).astype(jnp.float32)
        num1 = (jnp.sum(mask1_m * sm, axis=1, keepdims=True)
                + jnp.sum(mask1_s * ss, axis=1, keepdims=True))
        num2 = (jnp.sum(mask2_m * sm, axis=1, keepdims=True)
                + jnp.sum(mask2_s * ss, axis=1, keepdims=True))
        cnt1 = (jnp.sum(mask1_m, axis=1, keepdims=True)
                + jnp.sum(mask1_s, axis=1, keepdims=True))
        cnt2 = (jnp.sum(mask2_m, axis=1, keepdims=True)
                + jnp.sum(mask2_s, axis=1, keepdims=True))
    else:
        row_max = jnp.max(sim_m, axis=1, keepdims=True)
        sm = sim_m - row_max
        denom = jnp.sum(jnp.exp(sm) * lmask, axis=1, keepdims=True)
        num1 = jnp.sum(mask1_m * sm, axis=1, keepdims=True)
        num2 = jnp.sum(mask2_m * sm, axis=1, keepdims=True)
        cnt1 = jnp.sum(mask1_m, axis=1, keepdims=True)
        cnt2 = jnp.sum(mask2_m, axis=1, keepdims=True)

    log_denom = jnp.log(denom + 1e-12)
    mlpp1 = (num1 - cnt1 * log_denom) * pl.reciprocal(
        jnp.maximum(cnt1, 1e-12), approx=True)
    mlpp2 = (num2 - cnt2 * log_denom) * pl.reciprocal(
        jnp.maximum(cnt2, 1e-12), approx=True)

    lam1 = lams_ref[0]
    lam2 = lams_ref[1]
    row_col = jax.lax.broadcasted_iota(jnp.int32, (n2, 1), 0)
    top_r = (row_col < bs).astype(jnp.float32)
    lam_row = top_r * lam1 + (1.0 - top_r) * lam2
    per_row = -lam_row * mlpp1 - (1.0 - lam_row) * mlpp2
    mix_loss = jnp.sum(per_row, axis=0, keepdims=True) * (1.0 / n2)  # (1,1)
    o_ref[...] = _lane_select([mix_loss])


def _fused_losses_kernel(outs_ref, outt_ref, lg_ref, lgt_ref, mlg_ref, mlgt_ref,
                         mixf_ref, mixft_ref, lsel_ref, agg_ref,
                         glabr_ref, glabc_ref, mlab_ref, slab_ref, o_ref):
    # lane 0: global SupCon on out_s
    # lane 1: DIST(out_s,out_t)+KL(logits)+KL(m_logits)+DIST(mix feats)
    # lane 2: CE(m_logits)+CE(logits[::n])+T^2*KL(logits/T, agg/T)
    outs = outs_ref[...]
    p = outs.shape[0]
    rows = jax.lax.broadcasted_iota(jnp.int32, (p, p), 0)
    cols = jax.lax.broadcasted_iota(jnp.int32, (p, p), 1)
    lmask = (rows != cols).astype(jnp.float32)
    mask = (glabr_ref[...] == glabc_ref[...]).astype(jnp.float32) * lmask
    sim = _matmul_t(outs, outs) * (1.0 / SUP_T)
    mlpp = _mean_log_prob_pos(sim, mask, lmask)
    global_agg = -jnp.sum(mlpp, axis=0, keepdims=True) * (1.0 / p)   # (1,1)

    distill = (_dist_pair(outs, outt_ref[...])
               + _kl_pair(lg_ref[...], lgt_ref[...], l2_normalize=True)
               + _kl_pair(mlg_ref[...], mlgt_ref[...], l2_normalize=True)
               + _dist_pair(mixf_ref[...], mixft_ref[...]))          # (1,1)

    mlg = mlg_ref[...]
    mcols = jax.lax.broadcasted_iota(jnp.int32, mlg.shape, 1)
    multi_onehot = (mcols == mlab_ref[...]).astype(jnp.float32)
    lsel = lsel_ref[...]
    scols = jax.lax.broadcasted_iota(jnp.int32, lsel.shape, 1)
    single_onehot = (scols == slab_ref[...]).astype(jnp.float32)
    kd = _kl_pair(lsel * (1.0 / SOFT_T), agg_ref[...] * (1.0 / SOFT_T),
                  l2_normalize=False)
    sup = (_ce_pair(mlg, multi_onehot) + _ce_pair(lsel, single_onehot)
           + kd * (SOFT_T ** 2))                                     # (1,1)

    o_ref[...] = _lane_select([global_agg, distill, sup])


# ------------------------------- wrappers ------------------------------------
def split_heads(h):
    c0 = NUM_CLASSES
    c1 = c0 + NUM_CLASSES * N_VIEWS
    return h[:, :c0], h[:, c0:c1], h[:, c1:]


def encoder_qk(params_q, params_k, x):
    """One launch: pooling + backbone + all heads for BOTH encoder_q / encoder_k."""
    n = x.shape[0]
    x_flat = x.reshape(n, IMG_C, IMG_H * IMG_W)          # pooling is in-kernel
    sg = jax.lax.stop_gradient                           # teacher is no-grad
    bw = jnp.stack([params_q["backbone_w"], sg(params_k["backbone_w"])])
    bb = jnp.stack([params_q["backbone_b"], sg(params_k["backbone_b"])])
    hw = jnp.stack([params_q["heads_w"], sg(params_k["heads_w"])])
    hb = jnp.stack([params_q["heads_b"], sg(params_k["heads_b"])])
    flops = (n * IMG_C * IMG_H * IMG_W
             + 2 * 2 * n * (IMG_C * HIDDEN + HIDDEN * HEADS_TOTAL))
    bytes_acc = 4 * (x_flat.size + bw.size + bb.size + hw.size + hb.size
                     + 2 * n * HEADS_TOTAL)
    heads_q, heads_k = pl.pallas_call(
        _encoder_qk_kernel,
        out_shape=(jax.ShapeDtypeStruct((n, HEADS_TOTAL), jnp.float32),
                   jax.ShapeDtypeStruct((n, HEADS_TOTAL), jnp.float32)),
        in_specs=_vm(5),
        out_specs=(pl.BlockSpec(memory_space=_VMEM),
                   pl.BlockSpec(memory_space=_VMEM)),
        cost_estimate=pl.CostEstimate(flops=flops, transcendentals=0,
                                      bytes_accessed=bytes_acc),
    )(x_flat, bw, bb, hw, hb)
    return heads_q, jax.lax.stop_gradient(heads_k)


def local_forward(params_q, params_k, jig_images, targets, key):
    m = int(math.sqrt(len(jig_images)))
    num_patch = m * m
    n = jig_images[0].shape[0]
    permute = jax.random.permutation(key, n * num_patch)
    images_gather = jnp.concatenate(jig_images, axis=0)[permute]   # (n*m*m,C,H,W)
    # With the synthetic per-patch avg-pool "clu" backbone, the montage patch at
    # grid (i,j) of batch b is exactly images_gather[(i*m+j)*n + b]; pooling the
    # gathered images directly therefore yields the decoupled feature rows in
    # the same (patch*n + b) order — no montage/transpose/concat round trip.
    # TODO(synk): a real conv encoder would need the actual assembled montage.
    x_flat = images_gather.reshape(n * num_patch, IMG_C, IMG_H * IMG_W)
    mix_targets = jnp.tile(targets, num_patch)[permute].astype(jnp.int32)

    sg = jax.lax.stop_gradient
    cw = jnp.stack([params_q["clu_w"], sg(params_k["clu_w"])])
    cb = jnp.stack([params_q["clu_b"], sg(params_k["clu_b"])])
    lw = jnp.stack([params_q["local_w"], sg(params_k["local_w"])])
    lb = jnp.stack([params_q["local_b"], sg(params_k["local_b"])])
    res = pl.pallas_call(
        _local_forward_kernel,
        out_shape=jax.ShapeDtypeStruct((1, 128), jnp.float32),
        in_specs=_vm(7),
        out_specs=pl.BlockSpec(memory_space=_VMEM),
    )(x_flat, mix_targets.reshape(-1, 1), mix_targets.reshape(1, -1),
      cw, cb, lw, lb)
    return res[0, 0], res[0, 1]          # (local_agg_loss, local_distill_loss)


def mix_data_lab(key, x, y, alpha=1.0):
    k1, k2 = jax.random.split(key)
    lam = jax.random.beta(k1, alpha, alpha)
    index = jax.random.permutation(k2, x.shape[0])
    lam = jnp.maximum(lam, 1.0 - lam)
    mixed_x = lam * x + (1.0 - lam) * x[index]
    return mixed_x, y, y[index], index, lam


def mixup_contrast_loss(mix_feature, target, index1, index2, lam1, lam2,
                        sub_feat=None, sub_num=None):
    bs = target.shape[0]
    t = target.astype(jnp.int32)
    ta = t[index1]
    tb = t[index2]
    # tiny int32 label vectors instead of (N, M) f32 masks
    lab_rows = jnp.stack([jnp.tile(t, 2), jnp.concatenate([ta, tb])], axis=1)
    lab_cols = jnp.stack([jnp.tile(t, 2), jnp.tile(ta, 2), jnp.tile(tb, 2)],
                         axis=0)
    lams = jnp.stack([lam1, lam2]).astype(jnp.float32)
    has_sub = sub_feat is not None
    kernel = functools.partial(_mixup_contrast_kernel, inv_temp=1.0 / MIX_T,
                               bs=bs, has_sub=has_sub)
    if has_sub:
        sub_feat = jax.lax.stop_gradient(sub_feat)
        lab_col_sub = jnp.tile(t, sub_num).reshape(1, -1)
        args = (mix_feature, sub_feat, lab_rows, lab_cols, lab_col_sub, lams)
        in_specs = _vm(5) + [pl.BlockSpec(memory_space=_SMEM)]
        m_cols = 2 * bs + sub_feat.shape[0]
        bytes_acc = 4 * (mix_feature.size + sub_feat.size)
    else:
        args = (mix_feature, lab_rows, lab_cols, lams)
        in_specs = _vm(3) + [pl.BlockSpec(memory_space=_SMEM)]
        m_cols = 2 * bs
        bytes_acc = 4 * mix_feature.size
    flops = 2 * (2 * bs) * m_cols * PROJ
    res = pl.pallas_call(
        kernel,
        out_shape=jax.ShapeDtypeStruct((1, 128), jnp.float32),
        in_specs=in_specs,
        out_specs=pl.BlockSpec(memory_space=_VMEM),
        cost_estimate=pl.CostEstimate(flops=flops,
                                      transcendentals=2 * bs * m_cols,
                                      bytes_accessed=bytes_acc),
    )(*args)
    return res[0, 0]


def fused_scalar_losses(out_s, out_t, logits, logits_t, m_logits, m_logits_t,
                        mix_feature, mix_feature_t, logits_sel, agg_preds,
                        global_labels, multi_labels, target):
    res = pl.pallas_call(
        _fused_losses_kernel,
        out_shape=jax.ShapeDtypeStruct((1, 128), jnp.float32),
        in_specs=_vm(14),
        out_specs=pl.BlockSpec(memory_space=_VMEM),
    )(out_s, out_t, logits, logits_t, m_logits, m_logits_t,
      mix_feature, mix_feature_t, logits_sel, agg_preds,
      global_labels.reshape(-1, 1), global_labels.reshape(1, -1),
      multi_labels.reshape(-1, 1), target.astype(jnp.int32).reshape(-1, 1))
    return res[0, 0], res[0, 1], res[0, 2]   # (global_agg, distill_sum, sup)


def momentum_update(params_k, params_q, m):
    # Plain jnp: one XLA elementwise fusion instead of many tiny pallas_calls.
    return jax.tree_util.tree_map(lambda k, q: k * m + q * (1.0 - m),
                                  params_k, params_q)


def init_encoder_params(key):
    ks = jax.random.split(key, 8)
    w = lambda k, s: (0.1 * jax.random.normal(k, s)).astype(jnp.float32)
    # weights stored (in, out); the three head weight matrices are concatenated
    # along the output axis (cls | mcls | proj) so one matmul serves all heads.
    return {
        "backbone_w": w(ks[0], (IMG_C, HIDDEN)), "backbone_b": w(ks[1], (1, HIDDEN)),
        "heads_w": w(ks[2], (HIDDEN, HEADS_TOTAL)), "heads_b": w(ks[3], (1, HEADS_TOTAL)),
        "clu_w": w(ks[4], (IMG_C, HIDDEN)), "clu_b": w(ks[5], (1, HIDDEN)),
        "local_w": w(ks[6], (HIDDEN, PROJ)), "local_b": w(ks[7], (1, PROJ)),
    }


def hcrd_forward(params_q, params_k, aug_data, data_x, x_mix, target, key):
    img1, img_k = data_x[0], data_x[1]
    batch_size = img_k.shape[0]
    n = aug_data.shape[0] // batch_size

    k_local, k_mix = jax.random.split(key)
    kA, kB = jax.random.split(k_mix)
    mix_x1, _, _, index1, lam1 = mix_data_lab(kA, img1, target)
    mix_x2, _, _, index2, lam2 = mix_data_lab(kB, img1, target)

    # ONE fused encoder launch (q & k) over aug_data + both mixup batches.
    n_aug = aug_data.shape[0]
    all_x = jnp.concatenate([aug_data, mix_x1, mix_x2], axis=0)
    heads_q, heads_k = encoder_qk(params_q, params_k, all_x)

    logits, m_logits, out_s = split_heads(heads_q[:n_aug])
    logits_t, m_logits_t, out_t = split_heads(heads_k[:n_aug])
    _, _, mix_feature = split_heads(heads_q[n_aug:])
    _, _, mix_feature_t = split_heads(heads_k[n_aug:])

    loss_local, local_distill_loss = local_forward(
        params_q, params_k, x_mix, target, k_local)

    if USE_GLOBAL_FEAT:
        out_s_sup = out_s.reshape(batch_size, n, -1).transpose(1, 0, 2)
        if n in (12, 24):
            s = n // 4
            out_s_subfeat = out_s_sup[0::s].reshape(-1, out_s.shape[1])
            global_num = 4
        else:
            out_s_subfeat = out_s_sup.reshape(-1, out_s.shape[1])
            global_num = n
        mix_loss = mixup_contrast_loss(mix_feature, target, index1, index2,
                                       lam1, lam2, out_s_subfeat, global_num)
    else:
        mix_loss = mixup_contrast_loss(mix_feature, target, index1, index2,
                                       lam1, lam2)

    logits_sel = logits[::n]
    agg_preds = jnp.zeros((batch_size, NUM_CLASSES), jnp.float32)
    for i in range(n):
        agg_preds = agg_preds + m_logits[i::n, i::n] / n
    multi_labels = jnp.stack([target * n + i for i in range(n)],
                             axis=1).reshape(-1).astype(jnp.int32)
    global_labels = jnp.stack([target for _ in range(n)],
                              axis=1).reshape(-1).astype(jnp.int32)

    # ONE fused launch: global SupCon + all DIST/KL distillation + CE/CE/KD.
    global_agg_loss, distill_sum, sup_loss = fused_scalar_losses(
        out_s, out_t, logits, logits_t, m_logits, m_logits_t,
        mix_feature, mix_feature_t, logits_sel,
        jax.lax.stop_gradient(agg_preds), global_labels, multi_labels, target)

    distill_loss = (distill_sum + local_distill_loss) * ALPHA
    loss = sup_loss + global_agg_loss + loss_local + mix_loss + distill_loss

    new_params_k = momentum_update(params_k, params_q, MVAVG)
    return loss, logits_sel, new_params_k


# --------------------------------- main --------------------------------------
if __name__ == "__main__":
    key = jax.random.PRNGKey(0)
    (k_aug, k_x1, k_x2, km0, km1, km2, km3, k_fwd) = jax.random.split(key, 8)

    aug_data = jax.random.normal(k_aug, (B * N_VIEWS, IMG_C, IMG_H, IMG_W),
                                 jnp.float32)
    img1 = jax.random.normal(k_x1, (B, IMG_C, IMG_H, IMG_W), jnp.float32)
    img2 = jax.random.normal(k_x2, (B, IMG_C, IMG_H, IMG_W), jnp.float32)
    x_mix = tuple(jax.random.normal(k, (B, IMG_C, IMG_H, IMG_W), jnp.float32)
                  for k in (km0, km1, km2, km3))
    target = jnp.array([0, 1], dtype=jnp.int32)

    params_q = init_encoder_params(jax.random.PRNGKey(42))
    params_k = jax.tree_util.tree_map(lambda x: x + 0.0, params_q)  # copy (as in __init__)

    fwd = jax.jit(hcrd_forward)
    loss, logits_out, new_params_k = fwd(params_q, params_k, aug_data,
                                         (img1, img2), x_mix, target, k_fwd)
    jax.block_until_ready((loss, logits_out, new_params_k))
    assert bool(jnp.isfinite(loss)) and logits_out.shape == (B, NUM_CLASSES)
    print("KERNEL_OK")
</pallas_src>

<mosaic_0001>
module attributes {stable_mosaic.version = 11 : i64} {
  func.func @_local_forward_kernel(%arg0: memref<8x4x64xf32, #tpu.memory_space<vmem>>, %arg1: memref<8x1xi32, #tpu.memory_space<vmem>>, %arg2: memref<1x8xi32, #tpu.memory_space<vmem>>, %arg3: memref<2x4x32xf32, #tpu.memory_space<vmem>>, %arg4: memref<2x1x32xf32, #tpu.memory_space<vmem>>, %arg5: memref<2x32x16xf32, #tpu.memory_space<vmem>>, %arg6: memref<2x1x16xf32, #tpu.memory_space<vmem>>, %arg7: memref<1x128xf32, #tpu.memory_space<vmem>>) attributes {dimension_semantics = [], scalar_prefetch = 0 : i64, scratch_operands = 0 : i64, tpu.core_type = #tpu.core_type<tc>} {
    %c0 = arith.constant 0 : index
    %c0_0 = arith.constant 0 : index
    %c0_1 = arith.constant 0 : index
    %0 = vector.load %arg0[%c0, %c0_0, %c0_1] : memref<8x4x64xf32, #tpu.memory_space<vmem>>, vector<8x4x64xf32>
    %cst = arith.constant dense<0.000000e+00> : vector<8x4xf32>
    %1 = vector.multi_reduction <add>, %0, %cst [2] : vector<8x4x64xf32> to vector<8x4xf32>
    %cst_2 = arith.constant 6.400000e+01 : f32
    %2 = vector.broadcast %cst_2 : f32 to vector<8x4xf32>
    %3 = arith.divf %1, %2 : vector<8x4xf32>
    %c0_3 = arith.constant 0 : index
    %c0_4 = arith.constant 0 : index
    %c0_5 = arith.constant 0 : index
    %4 = vector.load %arg3[%c0_3, %c0_4, %c0_5] : memref<2x4x32xf32, #tpu.memory_space<vmem>>, vector<1x4x32xf32>
    %5 = vector.shape_cast %4 : vector<1x4x32xf32> to vector<4x32xf32>
    %cst_6 = arith.constant dense<0.000000e+00> : vector<8x32xf32>
    %6 = tpu.matmul %3, %5, %cst_6 {dimension_numbers = #tpu.dot_dimension_numbers<[1], [0], [0], [1], [0, 0, 1, 1], [], []>} : vector<8x4xf32>, vector<4x32xf32>, vector<8x32xf32> -> vector<8x32xf32>
    %c0_7 = arith.constant 0 : index
    %c0_8 = arith.constant 0 : index
    %c0_9 = arith.constant 0 : index
    %7 = vector.load %arg4[%c0_7, %c0_8, %c0_9] : memref<2x1x32xf32, #tpu.memory_space<vmem>>, vector<1x1x32xf32>
    %8 = vector.shape_cast %7 : vector<1x1x32xf32> to vector<1x32xf32>
    %9 = vector.broadcast %8 : vector<1x32xf32> to vector<8x32xf32>
    %10 = arith.addf %6, %9 : vector<8x32xf32>
    %cst_10 = arith.constant 0.000000e+00 : f32
    %11 = vector.broadcast %cst_10 : f32 to vector<8x32xf32>
    %12 = arith.maximumf %10, %11 : vector<8x32xf32>
    %c0_11 = arith.constant 0 : index
    %c0_12 = arith.constant 0 : index
    %c0_13 = arith.constant 0 : index
    %13 = vector.load %arg5[%c0_11, %c0_12, %c0_13] : memref<2x32x16xf32, #tpu.memory_space<vmem>>, vector<1x32x16xf32>
    %14 = vector.shape_cast %13 : vector<1x32x16xf32> to vector<32x16xf32>
    %cst_14 = arith.constant dense<0.000000e+00> : vector<8x16xf32>
    %15 = tpu.matmul %12, %14, %cst_14 {dimension_numbers = #tpu.dot_dimension_numbers<[1], [0], [0], [1], [0, 0, 1, 1], [], []>} : vector<8x32xf32>, vector<32x16xf32>, vector<8x16xf32> -> vector<8x16xf32>
    %c0_15 = arith.constant 0 : index
    %c0_16 = arith.constant 0 : index
    %c0_17 = arith.constant 0 : index
    %16 = vector.load %arg6[%c0_15, %c0_16, %c0_17] : memref<2x1x16xf32, #tpu.memory_space<vmem>>, vector<1x1x16xf32>
    %17 = vector.shape_cast %16 : vector<1x1x16xf32> to vector<1x16xf32>
    %18 = vector.broadcast %17 : vector<1x16xf32> to vector<8x16xf32>
    %19 = arith.addf %15, %18 : vector<8x16xf32>
    %20 = arith.mulf %19, %19 : vector<8x16xf32>
    %cst_18 = arith.constant dense<0.000000e+00> : vector<8xf32>
    %21 = vector.multi_reduction <add>, %20, %cst_18 [1] : vector<8x16xf32> to vector<8xf32>
    %22 = vector.shape_cast %21 : vector<8xf32> to vector<8x1xf32>
    %cst_19 = arith.constant 1.000000e-24 : f32
    %23 = vector.broadcast %cst_19 : f32 to vector<8x1xf32>
    %24 = arith.addf %22, %23 : vector<8x1xf32>
    %25 = math.rsqrt %24 : vector<8x1xf32>
    %26 = vector.broadcast %25 : vector<8x1xf32> to vector<8x16xf32>
    %27 = arith.mulf %19, %26 : vector<8x16xf32>
    %c1 = arith.constant 1 : index
    %c0_20 = arith.constant 0 : index
    %c0_21 = arith.constant 0 : index
    %28 = vector.load %arg3[%c1, %c0_20, %c0_21] : memref<2x4x32xf32, #tpu.memory_space<vmem>>, vector<1x4x32xf32>
    %29 = vector.shape_cast %28 : vector<1x4x32xf32> to vector<4x32xf32>
    %cst_22 = arith.constant dense<0.000000e+00> : vector<8x32xf32>
    %30 = tpu.matmul %3, %29, %cst_22 {dimension_numbers = #tpu.dot_dimension_numbers<[1], [0], [0], [1], [0, 0, 1, 1], [], []>} : vector<8x4xf32>, vector<4x32xf32>, vector<8x32xf32> -> vector<8x32xf32>
    %c1_23 = arith.constant 1 : index
    %c0_24 = arith.constant 0 : index
    %c0_25 = arith.constant 0 : index
    %31 = vector.load %arg4[%c1_23, %c0_24, %c0_25] : memref<2x1x32xf32, #tpu.memory_space<vmem>>, vector<1x1x32xf32>
    %32 = vector.shape_cast %31 : vector<1x1x32xf32> to vector<1x32xf32>
    %33 = vector.broadcast %32 : vector<1x32xf32> to vector<8x32xf32>
    %34 = arith.addf %30, %33 : vector<8x32xf32>
    %cst_26 = arith.constant 0.000000e+00 : f32
    %35 = vector.broadcast %cst_26 : f32 to vector<8x32xf32>
    %36 = arith.maximumf %34, %35 : vector<8x32xf32>
    %c1_27 = arith.constant 1 : index
    %c0_28 = arith.constant 0 : index
    %c0_29 = arith.constant 0 : index
    %37 = vector.load %arg5[%c1_27, %c0_28, %c0_29] : memref<2x32x16xf32, #tpu.memory_space<vmem>>, vector<1x32x16xf32>
    %38 = vector.shape_cast %37 : vector<1x32x16xf32> to vector<32x16xf32>
    %cst_30 = arith.constant dense<0.000000e+00> : vector<8x16xf32>
    %39 = tpu.matmul %36, %38, %cst_30 {dimension_numbers = #tpu.dot_dimension_numbers<[1], [0], [0], [1], [0, 0, 1, 1], [], []>} : vector<8x32xf32>, vector<32x16xf32>, vector<8x16xf32> -> vector<8x16xf32>
    %c1_31 = arith.constant 1 : index
    %c0_32 = arith.constant 0 : index
    %c0_33 = arith.constant 0 : index
    %40 = vector.load %arg6[%c1_31, %c0_32, %c0_33] : memref<2x1x16xf32, #tpu.memory_space<vmem>>, vector<1x1x16xf32>
    %41 = vector.shape_cast %40 : vector<1x1x16xf32> to vector<1x16xf32>
    %42 = vector.broadcast %41 : vector<1x16xf32> to vector<8x16xf32>
    %43 = arith.addf %39, %42 : vector<8x16xf32>
    %44 = arith.mulf %43, %43 : vector<8x16xf32>
    %cst_34 = arith.constant dense<0.000000e+00> : vector<8xf32>
    %45 = vector.multi_reduction <add>, %44, %cst_34 [1] : vector<8x16xf32> to vector<8xf32>
    %46 = vector.shape_cast %45 : vector<8xf32> to vector<8x1xf32>
    %cst_35 = arith.constant 1.000000e-24 : f32
    %47 = vector.broadcast %cst_35 : f32 to vector<8x1xf32>
    %48 = arith.addf %46, %47 : vector<8x1xf32>
    %49 = math.rsqrt %48 : vector<8x1xf32>
    %50 = vector.broadcast %49 : vector<8x1xf32> to vector<8x16xf32>
    %51 = arith.mulf %43, %50 : vector<8x16xf32>
    %52 = tpu.iota {dimensions = array<i32: 0>} : vector<8x8xi32>
    %53 = tpu.iota {dimensions = array<i32: 1>} : vector<8x8xi32>
    %54 = arith.cmpi ne, %52, %53 : vector<8x8xi32>
    %55 = arith.extui %54 : vector<8x8xi1> to vector<8x8xi32>
    %56 = arith.sitofp %55 : vector<8x8xi32> to vector<8x8xf32>
    %c0_36 = arith.constant 0 : index
    %c0_37 = arith.constant 0 : index
    %57 = vector.load %arg1[%c0_36, %c0_37] : memref<8x1xi32, #tpu.memory_space<vmem>>, vector<8x1xi32>
    %c0_38 = arith.constant 0 : index
    %c0_39 = arith.constant 0 : index
    %58 = vector.load %arg2[%c0_38, %c0_39] : memref<1x8xi32, #tpu.memory_space<vmem>>, vector<1x8xi32>
    %59 = vector.broadcast %57 : vector<8x1xi32> to vector<8x8xi32>
    %60 = vector.broadcast %58 : vector<1x8xi32> to vector<8x8xi32>
    %61 = arith.cmpi eq, %59, %60 : vector<8x8xi32>
    %62 = arith.extui %61 : vector<8x8xi1> to vector<8x8xi32>
    %63 = arith.sitofp %62 : vector<8x8xi32> to vector<8x8xf32>
    %64 = arith.mulf %63, %56 : vector<8x8xf32>
    %cst_40 = arith.constant dense<0.000000e+00> : vector<8x8xf32>
    %65 = tpu.matmul %27, %27, %cst_40 {dimension_numbers = #tpu.dot_dimension_numbers<[1], [1], [0], [0], [0, 0, 1, 0], [], []>} : vector<8x16xf32>, vector<8x16xf32>, vector<8x8xf32> -> vector<8x8xf32>
    %cst_41 = arith.constant 1.000000e+01 : f32
    %66 = vector.broadcast %cst_41 : f32 to vector<8x8xf32>
    %67 = arith.mulf %65, %66 : vector<8x8xf32>
    %cst_42 = arith.constant dense<0xFF800000> : vector<8xf32>
    %68 = vector.multi_reduction <maximumf>, %67, %cst_42 [1] : vector<8x8xf32> to vector<8xf32>
    %69 = vector.shape_cast %68 : vector<8xf32> to vector<8x1xf32>
    %70 = vector.broadcast %69 : vector<8x1xf32> to vector<8x8xf32>
    %71 = arith.subf %67, %70 : vector<8x8xf32>
    %72 = math.exp %71 : vector<8x8xf32>
    %73 = arith.mulf %72, %56 : vector<8x8xf32>
    %cst_43 = arith.constant dense<0.000000e+00> : vector<8xf32>
    %74 = vector.multi_reduction <add>, %73, %cst_43 [1] : vector<8x8xf32> to vector<8xf32>
    %75 = vector.shape_cast %74 : vector<8xf32> to vector<8x1xf32>
    %cst_44 = arith.constant 9.99999996E-13 : f32
    %76 = vector.broadcast %cst_44 : f32 to vector<8x1xf32>
    %77 = arith.addf %75, %76 : vector<8x1xf32>
    %78 = math.log %77 : vector<8x1xf32>
    %79 = vector.broadcast %78 : vector<8x1xf32> to vector<8x8xf32>
    %80 = arith.subf %71, %79 : vector<8x8xf32>
    %cst_45 = arith.constant dense<0.000000e+00> : vector<8xf32>
    %81 = vector.multi_reduction <add>, %64, %cst_45 [1] : vector<8x8xf32> to vector<8xf32>
    %82 = vector.shape_cast %81 : vector<8xf32> to vector<8x1xf32>
    %83 = arith.mulf %64, %80 : vector<8x8xf32>
    %cst_46 = arith.constant dense<0.000000e+00> : vector<8xf32>
    %84 = vector.multi_reduction <add>, %83, %cst_46 [1] : vector<8x8xf32> to vector<8xf32>
    %85 = vector.shape_cast %84 : vector<8xf32> to vector<8x1xf32>
    %cst_47 = arith.constant 9.99999996E-13 : f32
    %86 = vector.broadcast %cst_47 : f32 to vector<8x1xf32>
    %87 = arith.maximumf %82, %86 : vector<8x1xf32>
    %88 = tpu.reciprocal %87 {approx = true} : vector<8x1xf32> -> vector<8x1xf32>
    %89 = arith.mulf %85, %88 : vector<8x1xf32>
    %cst_48 = arith.constant dense<0.000000e+00> : vector<1xf32>
    %90 = vector.multi_reduction <add>, %89, %cst_48 [0] : vector<8x1xf32> to vector<1xf32>
    %91 = vector.shape_cast %90 : vector<1xf32> to vector<1x1xf32>
    %cst_49 = arith.constant 0.000000e+00 : f32
    %92 = vector.broadcast %cst_49 : f32 to vector<1x1xf32>
    %93 = arith.subf %92, %91 : vector<1x1xf32>
    %cst_50 = arith.constant 1.250000e-01 : f32
    %94 = vector.broadcast %cst_50 : f32 to vector<1x1xf32>
    %95 = arith.mulf %93, %94 : vector<1x1xf32>
    %cst_51 = arith.constant dense<0xFF800000> : vector<8xf32>
    %96 = vector.multi_reduction <maximumf>, %27, %cst_51 [1] : vector<8x16xf32> to vector<8xf32>
    %97 = vector.shape_cast %96 : vector<8xf32> to vector<8x1xf32>
    %98 = vector.broadcast %97 : vector<8x1xf32> to vector<8x16xf32>
    %99 = arith.subf %27, %98 : vector<8x16xf32>
    %100 = math.exp %99 : vector<8x16xf32>
    %cst_52 = arith.constant dense<0.000000e+00> : vector<8xf32>
    %101 = vector.multi_reduction <add>, %100, %cst_52 [1] : vector<8x16xf32> to vector<8xf32>
    %102 = vector.shape_cast %101 : vector<8xf32> to vector<8x1xf32>
    %103 = tpu.reciprocal %102 {approx = true} : vector<8x1xf32> -> vector<8x1xf32>
    %104 = vector.broadcast %103 : vector<8x1xf32> to vector<8x16xf32>
    %105 = arith.mulf %100, %104 : vector<8x16xf32>
    %cst_53 = arith.constant dense<0xFF800000> : vector<8xf32>
    %106 = vector.multi_reduction <maximumf>, %51, %cst_53 [1] : vector<8x16xf32> to vector<8xf32>
    %107 = vector.shape_cast %106 : vector<8xf32> to vector<8x1xf32>
    %108 = vector.broadcast %107 : vector<8x1xf32> to vector<8x16xf32>
    %109 = arith.subf %51, %108 : vector<8x16xf32>
    %110 = math.exp %109 : vector<8x16xf32>
    %cst_54 = arith.constant dense<0.000000e+00> : vector<8xf32>
    %111 = vector.multi_reduction <add>, %110, %cst_54 [1] : vector<8x16xf32> to vector<8xf32>
    %112 = vector.shape_cast %111 : vector<8xf32> to vector<8x1xf32>
    %113 = tpu.reciprocal %112 {approx = true} : vector<8x1xf32> -> vector<8x1xf32>
    %114 = vector.broadcast %113 : vector<8x1xf32> to vector<8x16xf32>
    %115 = arith.mulf %110, %114 : vector<8x16xf32>
    %cst_55 = arith.constant dense<0.000000e+00> : vector<8xf32>
    %116 = vector.multi_reduction <add>, %105, %cst_55 [1] : vector<8x16xf32> to vector<8xf32>
    %117 = vector.shape_cast %116 : vector<8xf32> to vector<8x1xf32>
    %cst_56 = arith.constant 1.600000e+01 : f32
    %118 = vector.broadcast %cst_56 : f32 to vector<8x1xf32>
    %119 = arith.divf %117, %118 : vector<8x1xf32>
    %120 = vector.broadcast %119 : vector<8x1xf32> to vector<8x16xf32>
    %121 = arith.subf %105, %120 : vector<8x16xf32>
    %cst_57 = arith.constant dense<0.000000e+00> : vector<8xf32>
    %122 = vector.multi_reduction <add>, %115, %cst_57 [1] : vector<8x16xf32> to vector<8xf32>
    %123 = vector.shape_cast %122 : vector<8xf32> to vector<8x1xf32>
    %cst_58 = arith.constant 1.600000e+01 : f32
    %124 = vector.broadcast %cst_58 : f32 to vector<8x1xf32>
    %125 = arith.divf %123, %124 : vector<8x1xf32>
    %126 = vector.broadcast %125 : vector<8x1xf32> to vector<8x16xf32>
    %127 = arith.subf %115, %126 : vector<8x16xf32>
    %128 = arith.mulf %121, %127 : vector<8x16xf32>
    %cst_59 = arith.constant dense<0.000000e+00> : vector<8xf32>
    %129 = vector.multi_reduction <add>, %128, %cst_59 [1] : vector<8x16xf32> to vector<8xf32>
    %130 = vector.shape_cast %129 : vector<8xf32> to vector<8x1xf32>
    %131 = arith.mulf %121, %121 : vector<8x16xf32>
    %cst_60 = arith.constant dense<0.000000e+00> : vector<8xf32>
    %132 = vector.multi_reduction <add>, %131, %cst_60 [1] : vector<8x16xf32> to vector<8xf32>
    %133 = vector.shape_cast %132 : vector<8xf32> to vector<8x1xf32>
    %134 = arith.mulf %127, %127 : vector<8x16xf32>
    %cst_61 = arith.constant dense<0.000000e+00> : vector<8xf32>
    %135 = vector.multi_reduction <add>, %134, %cst_61 [1] : vector<8x16xf32> to vector<8xf32>
    %136 = vector.shape_cast %135 : vector<8xf32> to vector<8x1xf32>
    %137 = arith.mulf %133, %136 : vector<8x1xf32>
    %cst_62 = arith.constant 9.99999993E-9 : f32
    %138 = vector.broadcast %cst_62 : f32 to vector<8x1xf32>
    %139 = arith.addf %137, %138 : vector<8x1xf32>
    %140 = math.rsqrt %139 : vector<8x1xf32>
    %141 = arith.mulf %130, %140 : vector<8x1xf32>
    %cst_63 = arith.constant dense<0.000000e+00> : vector<1xf32>
    %142 = vector.multi_reduction <add>, %141, %cst_63 [0] : vector<8x1xf32> to vector<1xf32>
    %143 = vector.shape_cast %142 : vector<1xf32> to vector<1x1xf32>
    %cst_64 = arith.constant 1.250000e-01 : f32
    %144 = vector.broadcast %cst_64 : f32 to vector<1x1xf32>
    %145 = arith.mulf %143, %144 : vector<1x1xf32>
    %cst_65 = arith.constant 1.000000e+00 : f32
    %146 = vector.broadcast %cst_65 : f32 to vector<1x1xf32>
    %147 = arith.subf %146, %145 : vector<1x1xf32>
    %cst_66 = arith.constant dense<0.000000e+00> : vector<16xf32>
    %148 = vector.multi_reduction <add>, %105, %cst_66 [0] : vector<8x16xf32> to vector<16xf32>
    %149 = vector.shape_cast %148 : vector<16xf32> to vector<1x16xf32>
    %cst_67 = arith.constant 8.000000e+00 : f32
    %150 = vector.broadcast %cst_67 : f32 to vector<1x16xf32>
    %151 = arith.divf %149, %150 : vector<1x16xf32>
    %152 = vector.broadcast %151 : vector<1x16xf32> to vector<8x16xf32>
    %153 = arith.subf %105, %152 : vector<8x16xf32>
    %cst_68 = arith.constant dense<0.000000e+00> : vector<16xf32>
    %154 = vector.multi_reduction <add>, %115, %cst_68 [0] : vector<8x16xf32> to vector<16xf32>
    %155 = vector.shape_cast %154 : vector<16xf32> to vector<1x16xf32>
    %cst_69 = arith.constant 8.000000e+00 : f32
    %156 = vector.broadcast %cst_69 : f32 to vector<1x16xf32>
    %157 = arith.divf %155, %156 : vector<1x16xf32>
    %158 = vector.broadcast %157 : vector<1x16xf32> to vector<8x16xf32>
    %159 = arith.subf %115, %158 : vector<8x16xf32>
    %160 = arith.mulf %153, %159 : vector<8x16xf32>
    %cst_70 = arith.constant dense<0.000000e+00> : vector<16xf32>
    %161 = vector.multi_reduction <add>, %160, %cst_70 [0] : vector<8x16xf32> to vector<16xf32>
    %162 = vector.shape_cast %161 : vector<16xf32> to vector<1x16xf32>
    %163 = arith.mulf %153, %153 : vector<8x16xf32>
    %cst_71 = arith.constant dense<0.000000e+00> : vector<16xf32>
    %164 = vector.multi_reduction <add>, %163, %cst_71 [0] : vector<8x16xf32> to vector<16xf32>
    %165 = vector.shape_cast %164 : vector<16xf32> to vector<1x16xf32>
    %166 = arith.mulf %159, %159 : vector<8x16xf32>
    %cst_72 = arith.constant dense<0.000000e+00> : vector<16xf32>
    %167 = vector.multi_reduction <add>, %166, %cst_72 [0] : vector<8x16xf32> to vector<16xf32>
    %168 = vector.shape_cast %167 : vector<16xf32> to vector<1x16xf32>
    %169 = arith.mulf %165, %168 : vector<1x16xf32>
    %cst_73 = arith.constant 9.99999993E-9 : f32
    %170 = vector.broadcast %cst_73 : f32 to vector<1x16xf32>
    %171 = arith.addf %169, %170 : vector<1x16xf32>
    %172 = math.rsqrt %171 : vector<1x16xf32>
    %173 = arith.mulf %162, %172 : vector<1x16xf32>
    %cst_74 = arith.constant dense<0.000000e+00> : vector<1xf32>
    %174 = vector.multi_reduction <add>, %173, %cst_74 [1] : vector<1x16xf32> to vector<1xf32>
    %175 = vector.shape_cast %174 : vector<1xf32> to vector<1x1xf32>
    %cst_75 = arith.constant 6.250000e-02 : f32
    %176 = vector.broadcast %cst_75 : f32 to vector<1x1xf32>
    %177 = arith.mulf %175, %176 : vector<1x1xf32>
    %cst_76 = arith.constant 1.000000e+00 : f32
    %178 = vector.broadcast %cst_76 : f32 to vector<1x1xf32>
    %179 = arith.subf %178, %177 : vector<1x1xf32>
    %180 = arith.addf %147, %179 : vector<1x1xf32>
    %181 = tpu.iota {dimensions = array<i32: 1>} : vector<1x128xi32>
    %cst_77 = arith.constant 0.000000e+00 : f32
    %182 = vector.broadcast %cst_77 : f32 to vector<1x128xf32>
    %c0_i32 = arith.constant 0 : i32
    %183 = vector.broadcast %c0_i32 : i32 to vector<1x128xi32>
    %184 = arith.cmpi eq, %181, %183 : vector<1x128xi32>
    %cst_78 = arith.constant 0.000000e+00 : f32
    %185 = vector.shape_cast %95 : vector<1x1xf32> to vector<1x1xf32>
    %186 = vector.broadcast %185 : vector<1x1xf32> to vector<1x128xf32>
    %187 = vector.broadcast %cst_78 : f32 to vector<1x128xf32>
    %188 = arith.select %184, %186, %187 : vector<1x128xi1>, vector<1x128xf32>
    %189 = arith.addf %182, %188 : vector<1x128xf32>
    %c1_i32 = arith.constant 1 : i32
    %190 = vector.broadcast %c1_i32 : i32 to vector<1x128xi32>
    %191 = arith.cmpi eq, %181, %190 : vector<1x128xi32>
    %cst_79 = arith.constant 0.000000e+00 : f32
    %192 = vector.shape_cast %180 : vector<1x1xf32> to vector<1x1xf32>
    %193 = vector.broadcast %192 : vector<1x1xf32> to vector<1x128xf32>
    %194 = vector.broadcast %cst_79 : f32 to vector<1x128xf32>
    %195 = arith.select %191, %193, %194 : vector<1x128xi1>, vector<1x128xf32>
    %196 = arith.addf %189, %195 : vector<1x128xf32>
    %c0_80 = arith.constant 0 : index
    %c0_81 = arith.constant 0 : index
    %197 = vector.load %arg7[%c0_80, %c0_81] : memref<1x128xf32, #tpu.memory_space<vmem>>, vector<1x128xf32>
    tpu.vector_store %arg7[%c0_80, %c0_81], %196 {strides = array<i32>} : memref<1x128xf32, #tpu.memory_space<vmem>>, vector<1x128xf32>,
    return
  }
}

module attributes {stable_mosaic.version = 11 : i64} {
  func.func @_encoder_qk_kernel(%arg0: memref<12x4x64xf32, #tpu.memory_space<vmem>>, %arg1: memref<2x4x32xf32, #tpu.memory_space<vmem>>, %arg2: memref<2x1x32xf32, #tpu.memory_space<vmem>>, %arg3: memref<2x32x36xf32, #tpu.memory_space<vmem>>, %arg4: memref<2x1x36xf32, #tpu.memory_space<vmem>>, %arg5: memref<12x36xf32, #tpu.memory_space<vmem>>, %arg6: memref<12x36xf32, #tpu.memory_space<vmem>>) attributes {dimension_semantics = [], scalar_prefetch = 0 : i64, scratch_operands = 0 : i64, tpu.core_type = #tpu.core_type<tc>} {
    %c0 = arith.constant 0 : index
    %c0_0 = arith.constant 0 : index
    %c0_1 = arith.constant 0 : index
    %0 = vector.load %arg0[%c0, %c0_0, %c0_1] : memref<12x4x64xf32, #tpu.memory_space<vmem>>, vector<12x4x64xf32>
    %cst = arith.constant dense<0.000000e+00> : vector<12x4xf32>
    %1 = vector.multi_reduction <add>, %0, %cst [2] : vector<12x4x64xf32> to vector<12x4xf32>
    %cst_2 = arith.constant 6.400000e+01 : f32
    %2 = vector.broadcast %cst_2 : f32 to vector<12x4xf32>
    %3 = arith.divf %1, %2 : vector<12x4xf32>
    %c0_3 = arith.constant 0 : index
    %c0_4 = arith.constant 0 : index
    %c0_5 = arith.constant 0 : index
    %4 = vector.load %arg1[%c0_3, %c0_4, %c0_5] : memref<2x4x32xf32, #tpu.memory_space<vmem>>, vector<1x4x32xf32>
    %5 = vector.shape_cast %4 : vector<1x4x32xf32> to vector<4x32xf32>
    %cst_6 = arith.constant dense<0.000000e+00> : vector<12x32xf32>
    %6 = tpu.matmul %3, %5, %cst_6 {dimension_numbers = #tpu.dot_dimension_numbers<[1], [0], [0], [1], [0, 0, 1, 1], [], []>} : vector<12x4xf32>, vector<4x32xf32>, vector<12x32xf32> -> vector<12x32xf32>
    %c0_7 = arith.constant 0 : index
    %c0_8 = arith.constant 0 : index
    %c0_9 = arith.constant 0 : index
    %7 = vector.load %arg2[%c0_7, %c0_8, %c0_9] : memref<2x1x32xf32, #tpu.memory_space<vmem>>, vector<1x1x32xf32>
    %8 = vector.shape_cast %7 : vector<1x1x32xf32> to vector<1x32xf32>
    %9 = vector.broadcast %8 : vector<1x32xf32> to vector<12x32xf32>
    %10 = arith.addf %6, %9 : vector<12x32xf32>
    %cst_10 = arith.constant 0.000000e+00 : f32
    %11 = vector.broadcast %cst_10 : f32 to vector<12x32xf32>
    %12 = arith.maximumf %10, %11 : vector<12x32xf32>
    %c0_11 = arith.constant 0 : index
    %c0_12 = arith.constant 0 : index
    %c0_13 = arith.constant 0 : index
    %13 = vector.load %arg3[%c0_11, %c0_12, %c0_13] : memref<2x32x36xf32, #tpu.memory_space<vmem>>, vector<1x32x36xf32>
    %14 = vector.shape_cast %13 : vector<1x32x36xf32> to vector<32x36xf32>
    %cst_14 = arith.constant dense<0.000000e+00> : vector<12x36xf32>
    %15 = tpu.matmul %12, %14, %cst_14 {dimension_numbers = #tpu.dot_dimension_numbers<[1], [0], [0], [1], [0, 0, 1, 1], [], []>} : vector<12x32xf32>, vector<32x36xf32>, vector<12x36xf32> -> vector<12x36xf32>
    %c0_15 = arith.constant 0 : index
    %c0_16 = arith.constant 0 : index
    %c0_17 = arith.constant 0 : index
    %16 = vector.load %arg4[%c0_15, %c0_16, %c0_17] : memref<2x1x36xf32, #tpu.memory_space<vmem>>, vector<1x1x36xf32>
    %17 = vector.shape_cast %16 : vector<1x1x36xf32> to vector<1x36xf32>
    %18 = vector.broadcast %17 : vector<1x36xf32> to vector<12x36xf32>
    %19 = arith.addf %15, %18 : vector<12x36xf32>
    %c0_18 = arith.constant 0 : index
    %c0_19 = arith.constant 0 : index
    %20 = vector.load %arg5[%c0_18, %c0_19] : memref<12x36xf32, #tpu.memory_space<vmem>>, vector<12x36xf32>
    tpu.vector_store %arg5[%c0_18, %c0_19], %19 {strides = array<i32>} : memref<12x36xf32, #tpu.memory_space<vmem>>, vector<12x36xf32>,
    %c1 = arith.constant 1 : index
    %c0_20 = arith.constant 0 : index
    %c0_21 = arith.constant 0 : index
    %21 = vector.load %arg1[%c1, %c0_20, %c0_21] : memref<2x4x32xf32, #tpu.memory_space<vmem>>, vector<1x4x32xf32>
    %22 = vector.shape_cast %21 : vector<1x4x32xf32> to vector<4x32xf32>
    %cst_22 = arith.constant dense<0.000000e+00> : vector<12x32xf32>
    %23 = tpu.matmul %3, %22, %cst_22 {dimension_numbers = #tpu.dot_dimension_numbers<[1], [0], [0], [1], [0, 0, 1, 1], [], []>} : vector<12x4xf32>, vector<4x32xf32>, vector<12x32xf32> -> vector<12x32xf32>
    %c1_23 = arith.constant 1 : index
    %c0_24 = arith.constant 0 : index
    %c0_25 = arith.constant 0 : index
    %24 = vector.load %arg2[%c1_23, %c0_24, %c0_25] : memref<2x1x32xf32, #tpu.memory_space<vmem>>, vector<1x1x32xf32>
    %25 = vector.shape_cast %24 : vector<1x1x32xf32> to vector<1x32xf32>
    %26 = vector.broadcast %25 : vector<1x32xf32> to vector<12x32xf32>
    %27 = arith.addf %23, %26 : vector<12x32xf32>
    %cst_26 = arith.constant 0.000000e+00 : f32
    %28 = vector.broadcast %cst_26 : f32 to vector<12x32xf32>
    %29 = arith.maximumf %27, %28 : vector<12x32xf32>
    %c1_27 = arith.constant 1 : index
    %c0_28 = arith.constant 0 : index
    %c0_29 = arith.constant 0 : index
    %30 = vector.load %arg3[%c1_27, %c0_28, %c0_29] : memref<2x32x36xf32, #tpu.memory_space<vmem>>, vector<1x32x36xf32>
    %31 = vector.shape_cast %30 : vector<1x32x36xf32> to vector<32x36xf32>
    %cst_30 = arith.constant dense<0.000000e+00> : vector<12x36xf32>
    %32 = tpu.matmul %29, %31, %cst_30 {dimension_numbers = #tpu.dot_dimension_numbers<[1], [0], [0], [1], [0, 0, 1, 1], [], []>} : vector<12x32xf32>, vector<32x36xf32>, vector<12x36xf32> -> vector<12x36xf32>
    %c1_31 = arith.constant 1 : index
    %c0_32 = arith.constant 0 : index
    %c0_33 = arith.constant 0 : index
    %33 = vector.load %arg4[%c1_31, %c0_32, %c0_33] : memref<2x1x36xf32, #tpu.memory_space<vmem>>, vector<1x1x36xf32>
    %34 = vector.shape_cast %33 : vector<1x1x36xf32> to vector<1x36xf32>
    %35 = vector.broadcast %34 : vector<1x36xf32> to vector<12x36xf32>
    %36 = arith.addf %32, %35 : vector<12x36xf32>
    %c0_34 = arith.constant 0 : index
    %c0_35 = arith.constant 0 : index
    %37 = vector.load %arg6[%c0_34, %c0_35] : memref<12x36xf32, #tpu.memory_space<vmem>>, vector<12x36xf32>
    tpu.vector_store %arg6[%c0_34, %c0_35], %36 {strides = array<i32>} : memref<12x36xf32, #tpu.memory_space<vmem>>, vector<12x36xf32>,
    return
  }
}

module attributes {stable_mosaic.version = 11 : i64} {
  func.func @_fused_losses_kernel(%arg0: memref<8x16xf32, #tpu.memory_space<vmem>>, %arg1: memref<8x16xf32, #tpu.memory_space<vmem>>, %arg2: memref<8x4xf32, #tpu.memory_space<vmem>>, %arg3: memref<8x4xf32, #tpu.memory_space<vmem>>, %arg4: memref<8x16xf32, #tpu.memory_space<vmem>>, %arg5: memref<8x16xf32, #tpu.memory_space<vmem>>, %arg6: memref<4x16xf32, #tpu.memory_space<vmem>>, %arg7: memref<4x16xf32, #tpu.memory_space<vmem>>, %arg8: memref<2x4xf32, #tpu.memory_space<vmem>>, %arg9: memref<2x4xf32, #tpu.memory_space<vmem>>, %arg10: memref<8x1xi32, #tpu.memory_space<vmem>>, %arg11: memref<1x8xi32, #tpu.memory_space<vmem>>, %arg12: memref<8x1xi32, #tpu.memory_space<vmem>>, %arg13: memref<2x1xi32, #tpu.memory_space<vmem>>, %arg14: memref<1x128xf32, #tpu.memory_space<vmem>>) attributes {dimension_semantics = [], scalar_prefetch = 0 : i64, scratch_operands = 0 : i64, tpu.core_type = #tpu.core_type<tc>} {
    %c0 = arith.constant 0 : index
    %c0_0 = arith.constant 0 : index
    %0 = vector.load %arg0[%c0, %c0_0] : memref<8x16xf32, #tpu.memory_space<vmem>>, vector<8x16xf32>
    %1 = tpu.iota {dimensions = array<i32: 0>} : vector<8x8xi32>
    %2 = tpu.iota {dimensions = array<i32: 1>} : vector<8x8xi32>
    %3 = arith.cmpi ne, %1, %2 : vector<8x8xi32>
    %4 = arith.extui %3 : vector<8x8xi1> to vector<8x8xi32>
    %5 = arith.sitofp %4 : vector<8x8xi32> to vector<8x8xf32>
    %c0_1 = arith.constant 0 : index
    %c0_2 = arith.constant 0 : index
    %6 = vector.load %arg10[%c0_1, %c0_2] : memref<8x1xi32, #tpu.memory_space<vmem>>, vector<8x1xi32>
    %c0_3 = arith.constant 0 : index
    %c0_4 = arith.constant 0 : index
    %7 = vector.load %arg11[%c0_3, %c0_4] : memref<1x8xi32, #tpu.memory_space<vmem>>, vector<1x8xi32>
    %8 = vector.broadcast %6 : vector<8x1xi32> to vector<8x8xi32>
    %9 = vector.broadcast %7 : vector<1x8xi32> to vector<8x8xi32>
    %10 = arith.cmpi eq, %8, %9 : vector<8x8xi32>
    %11 = arith.extui %10 : vector<8x8xi1> to vector<8x8xi32>
    %12 = arith.sitofp %11 : vector<8x8xi32> to vector<8x8xf32>
    %13 = arith.mulf %12, %5 : vector<8x8xf32>
    %cst = arith.constant dense<0.000000e+00> : vector<8x8xf32>
    %14 = tpu.matmul %0, %0, %cst {dimension_numbers = #tpu.dot_dimension_numbers<[1], [1], [0], [0], [0, 0, 1, 0], [], []>} : vector<8x16xf32>, vector<8x16xf32>, vector<8x8xf32> -> vector<8x8xf32>
    %cst_5 = arith.constant 1.000000e+01 : f32
    %15 = vector.broadcast %cst_5 : f32 to vector<8x8xf32>
    %16 = arith.mulf %14, %15 : vector<8x8xf32>
    %cst_6 = arith.constant dense<0xFF800000> : vector<8xf32>
    %17 = vector.multi_reduction <maximumf>, %16, %cst_6 [1] : vector<8x8xf32> to vector<8xf32>
    %18 = vector.shape_cast %17 : vector<8xf32> to vector<8x1xf32>
    %19 = vector.broadcast %18 : vector<8x1xf32> to vector<8x8xf32>
    %20 = arith.subf %16, %19 : vector<8x8xf32>
    %21 = math.exp %20 : vector<8x8xf32>
    %22 = arith.mulf %21, %5 : vector<8x8xf32>
    %cst_7 = arith.constant dense<0.000000e+00> : vector<8xf32>
    %23 = vector.multi_reduction <add>, %22, %cst_7 [1] : vector<8x8xf32> to vector<8xf32>
    %24 = vector.shape_cast %23 : vector<8xf32> to vector<8x1xf32>
    %cst_8 = arith.constant 9.99999996E-13 : f32
    %25 = vector.broadcast %cst_8 : f32 to vector<8x1xf32>
    %26 = arith.addf %24, %25 : vector<8x1xf32>
    %27 = math.log %26 : vector<8x1xf32>
    %28 = vector.broadcast %27 : vector<8x1xf32> to vector<8x8xf32>
    %29 = arith.subf %20, %28 : vector<8x8xf32>
    %cst_9 = arith.constant dense<0.000000e+00> : vector<8xf32>
    %30 = vector.multi_reduction <add>, %13, %cst_9 [1] : vector<8x8xf32> to vector<8xf32>
    %31 = vector.shape_cast %30 : vector<8xf32> to vector<8x1xf32>
    %32 = arith.mulf %13, %29 : vector<8x8xf32>
    %cst_10 = arith.constant dense<0.000000e+00> : vector<8xf32>
    %33 = vector.multi_reduction <add>, %32, %cst_10 [1] : vector<8x8xf32> to vector<8xf32>
    %34 = vector.shape_cast %33 : vector<8xf32> to vector<8x1xf32>
    %cst_11 = arith.constant 9.99999996E-13 : f32
    %35 = vector.broadcast %cst_11 : f32 to vector<8x1xf32>
    %36 = arith.maximumf %31, %35 : vector<8x1xf32>
    %37 = tpu.reciprocal %36 {approx = true} : vector<8x1xf32> -> vector<8x1xf32>
    %38 = arith.mulf %34, %37 : vector<8x1xf32>
    %cst_12 = arith.constant dense<0.000000e+00> : vector<1xf32>
    %39 = vector.multi_reduction <add>, %38, %cst_12 [0] : vector<8x1xf32> to vector<1xf32>
    %40 = vector.shape_cast %39 : vector<1xf32> to vector<1x1xf32>
    %cst_13 = arith.constant 0.000000e+00 : f32
    %41 = vector.broadcast %cst_13 : f32 to vector<1x1xf32>
    %42 = arith.subf %41, %40 : vector<1x1xf32>
    %cst_14 = arith.constant 1.250000e-01 : f32
    %43 = vector.broadcast %cst_14 : f32 to vector<1x1xf32>
    %44 = arith.mulf %42, %43 : vector<1x1xf32>
    %c0_15 = arith.constant 0 : index
    %c0_16 = arith.constant 0 : index
    %45 = vector.load %arg1[%c0_15, %c0_16] : memref<8x16xf32, #tpu.memory_space<vmem>>, vector<8x16xf32>
    %cst_17 = arith.constant dense<0xFF800000> : vector<8xf32>
    %46 = vector.multi_reduction <maximumf>, %0, %cst_17 [1] : vector<8x16xf32> to vector<8xf32>
    %47 = vector.shape_cast %46 : vector<8xf32> to vector<8x1xf32>
    %48 = vector.broadcast %47 : vector<8x1xf32> to vector<8x16xf32>
    %49 = arith.subf %0, %48 : vector<8x16xf32>
    %50 = math.exp %49 : vector<8x16xf32>
    %cst_18 = arith.constant dense<0.000000e+00> : vector<8xf32>
    %51 = vector.multi_reduction <add>, %50, %cst_18 [1] : vector<8x16xf32> to vector<8xf32>
    %52 = vector.shape_cast %51 : vector<8xf32> to vector<8x1xf32>
    %53 = tpu.reciprocal %52 {approx = true} : vector<8x1xf32> -> vector<8x1xf32>
    %54 = vector.broadcast %53 : vector<8x1xf32> to vector<8x16xf32>
    %55 = arith.mulf %50, %54 : vector<8x16xf32>
    %cst_19 = arith.constant dense<0xFF800000> : vector<8xf32>
    %56 = vector.multi_reduction <maximumf>, %45, %cst_19 [1] : vector<8x16xf32> to vector<8xf32>
    %57 = vector.shape_cast %56 : vector<8xf32> to vector<8x1xf32>
    %58 = vector.broadcast %57 : vector<8x1xf32> to vector<8x16xf32>
    %59 = arith.subf %45, %58 : vector<8x16xf32>
    %60 = math.exp %59 : vector<8x16xf32>
    %cst_20 = arith.constant dense<0.000000e+00> : vector<8xf32>
    %61 = vector.multi_reduction <add>, %60, %cst_20 [1] : vector<8x16xf32> to vector<8xf32>
    %62 = vector.shape_cast %61 : vector<8xf32> to vector<8x1xf32>
    %63 = tpu.reciprocal %62 {approx = true} : vector<8x1xf32> -> vector<8x1xf32>
    %64 = vector.broadcast %63 : vector<8x1xf32> to vector<8x16xf32>
    %65 = arith.mulf %60, %64 : vector<8x16xf32>
    %cst_21 = arith.constant dense<0.000000e+00> : vector<8xf32>
    %66 = vector.multi_reduction <add>, %55, %cst_21 [1] : vector<8x16xf32> to vector<8xf32>
    %67 = vector.shape_cast %66 : vector<8xf32> to vector<8x1xf32>
    %cst_22 = arith.constant 1.600000e+01 : f32
    %68 = vector.broadcast %cst_22 : f32 to vector<8x1xf32>
    %69 = arith.divf %67, %68 : vector<8x1xf32>
    %70 = vector.broadcast %69 : vector<8x1xf32> to vector<8x16xf32>
    %71 = arith.subf %55, %70 : vector<8x16xf32>
    %cst_23 = arith.constant dense<0.000000e+00> : vector<8xf32>
    %72 = vector.multi_reduction <add>, %65, %cst_23 [1] : vector<8x16xf32> to vector<8xf32>
    %73 = vector.shape_cast %72 : vector<8xf32> to vector<8x1xf32>
    %cst_24 = arith.constant 1.600000e+01 : f32
    %74 = vector.broadcast %cst_24 : f32 to vector<8x1xf32>
    %75 = arith.divf %73, %74 : vector<8x1xf32>
    %76 = vector.broadcast %75 : vector<8x1xf32> to vector<8x16xf32>
    %77 = arith.subf %65, %76 : vector<8x16xf32>
    %78 = arith.mulf %71, %77 : vector<8x16xf32>
    %cst_25 = arith.constant dense<0.000000e+00> : vector<8xf32>
    %79 = vector.multi_reduction <add>, %78, %cst_25 [1] : vector<8x16xf32> to vector<8xf32>
    %80 = vector.shape_cast %79 : vector<8xf32> to vector<8x1xf32>
    %81 = arith.mulf %71, %71 : vector<8x16xf32>
    %cst_26 = arith.constant dense<0.000000e+00> : vector<8xf32>
    %82 = vector.multi_reduction <add>, %81, %cst_26 [1] : vector<8x16xf32> to vector<8xf32>
    %83 = vector.shape_cast %82 : vector<8xf32> to vector<8x1xf32>
    %84 = arith.mulf %77, %77 : vector<8x16xf32>
    %cst_27 = arith.constant dense<0.000000e+00> : vector<8xf32>
    %85 = vector.multi_reduction <add>, %84, %cst_27 [1] : vector<8x16xf32> to vector<8xf32>
    %86 = vector.shape_cast %85 : vector<8xf32> to vector<8x1xf32>
    %87 = arith.mulf %83, %86 : vector<8x1xf32>
    %cst_28 = arith.constant 9.99999993E-9 : f32
    %88 = vector.broadcast %cst_28 : f32 to vector<8x1xf32>
    %89 = arith.addf %87, %88 : vector<8x1xf32>
    %90 = math.rsqrt %89 : vector<8x1xf32>
    %91 = arith.mulf %80, %90 : vector<8x1xf32>
    %cst_29 = arith.constant dense<0.000000e+00> : vector<1xf32>
    %92 = vector.multi_reduction <add>, %91, %cst_29 [0] : vector<8x1xf32> to vector<1xf32>
    %93 = vector.shape_cast %92 : vector<1xf32> to vector<1x1xf32>
    %cst_30 = arith.constant 1.250000e-01 : f32
    %94 = vector.broadcast %cst_30 : f32 to vector<1x1xf32>
    %95 = arith.mulf %93, %94 : vector<1x1xf32>
    %cst_31 = arith.constant 1.000000e+00 : f32
    %96 = vector.broadcast %cst_31 : f32 to vector<1x1xf32>
    %97 = arith.subf %96, %95 : vector<1x1xf32>
    %cst_32 = arith.constant dense<0.000000e+00> : vector<16xf32>
    %98 = vector.multi_reduction <add>, %55, %cst_32 [0] : vector<8x16xf32> to vector<16xf32>
    %99 = vector.shape_cast %98 : vector<16xf32> to vector<1x16xf32>
    %cst_33 = arith.constant 8.000000e+00 : f32
    %100 = vector.broadcast %cst_33 : f32 to vector<1x16xf32>
    %101 = arith.divf %99, %100 : vector<1x16xf32>
    %102 = vector.broadcast %101 : vector<1x16xf32> to vector<8x16xf32>
    %103 = arith.subf %55, %102 : vector<8x16xf32>
    %cst_34 = arith.constant dense<0.000000e+00> : vector<16xf32>
    %104 = vector.multi_reduction <add>, %65, %cst_34 [0] : vector<8x16xf32> to vector<16xf32>
    %105 = vector.shape_cast %104 : vector<16xf32> to vector<1x16xf32>
    %cst_35 = arith.constant 8.000000e+00 : f32
    %106 = vector.broadcast %cst_35 : f32 to vector<1x16xf32>
    %107 = arith.divf %105, %106 : vector<1x16xf32>
    %108 = vector.broadcast %107 : vector<1x16xf32> to vector<8x16xf32>
    %109 = arith.subf %65, %108 : vector<8x16xf32>
    %110 = arith.mulf %103, %109 : vector<8x16xf32>
    %cst_36 = arith.constant dense<0.000000e+00> : vector<16xf32>
    %111 = vector.multi_reduction <add>, %110, %cst_36 [0] : vector<8x16xf32> to vector<16xf32>
    %112 = vector.shape_cast %111 : vector<16xf32> to vector<1x16xf32>
    %113 = arith.mulf %103, %103 : vector<8x16xf32>
    %cst_37 = arith.constant dense<0.000000e+00> : vector<16xf32>
    %114 = vector.multi_reduction <add>, %113, %cst_37 [0] : vector<8x16xf32> to vector<16xf32>
    %115 = vector.shape_cast %114 : vector<16xf32> to vector<1x16xf32>
    %116 = arith.mulf %109, %109 : vector<8x16xf32>
    %cst_38 = arith.constant dense<0.000000e+00> : vector<16xf32>
    %117 = vector.multi_reduction <add>, %116, %cst_38 [0] : vector<8x16xf32> to vector<16xf32>
    %118 = vector.shape_cast %117 : vector<16xf32> to vector<1x16xf32>
    %119 = arith.mulf %115, %118 : vector<1x16xf32>
    %cst_39 = arith.constant 9.99999993E-9 : f32
    %120 = vector.broadcast %cst_39 : f32 to vector<1x16xf32>
    %121 = arith.addf %119, %120 : vector<1x16xf32>
    %122 = math.rsqrt %121 : vector<1x16xf32>
    %123 = arith.mulf %112, %122 : vector<1x16xf32>
    %cst_40 = arith.constant dense<0.000000e+00> : vector<1xf32>
    %124 = vector.multi_reduction <add>, %123, %cst_40 [1] : vector<1x16xf32> to vector<1xf32>
    %125 = vector.shape_cast %124 : vector<1xf32> to vector<1x1xf32>
    %cst_41 = arith.constant 6.250000e-02 : f32
    %126 = vector.broadcast %cst_41 : f32 to vector<1x1xf32>
    %127 = arith.mulf %125, %126 : vector<1x1xf32>
    %cst_42 = arith.constant 1.000000e+00 : f32
    %128 = vector.broadcast %cst_42 : f32 to vector<1x1xf32>
    %129 = arith.subf %128, %127 : vector<1x1xf32>
    %130 = arith.addf %97, %129 : vector<1x1xf32>
    %c0_43 = arith.constant 0 : index
    %c0_44 = arith.constant 0 : index
    %131 = vector.load %arg2[%c0_43, %c0_44] : memref<8x4xf32, #tpu.memory_space<vmem>>, vector<8x4xf32>
    %c0_45 = arith.constant 0 : index
    %c0_46 = arith.constant 0 : index
    %132 = vector.load %arg3[%c0_45, %c0_46] : memref<8x4xf32, #tpu.memory_space<vmem>>, vector<8x4xf32>
    %133 = arith.mulf %131, %131 : vector<8x4xf32>
    %cst_47 = arith.constant dense<0.000000e+00> : vector<8xf32>
    %134 = vector.multi_reduction <add>, %133, %cst_47 [1] : vector<8x4xf32> to vector<8xf32>
    %135 = vector.shape_cast %134 : vector<8xf32> to vector<8x1xf32>
    %cst_48 = arith.constant 1.000000e-24 : f32
    %136 = vector.broadcast %cst_48 : f32 to vector<8x1xf32>
    %137 = arith.addf %135, %136 : vector<8x1xf32>
    %138 = math.rsqrt %137 : vector<8x1xf32>
    %139 = vector.broadcast %138 : vector<8x1xf32> to vector<8x4xf32>
    %140 = arith.mulf %131, %139 : vector<8x4xf32>
    %141 = arith.mulf %132, %132 : vector<8x4xf32>
    %cst_49 = arith.constant dense<0.000000e+00> : vector<8xf32>
    %142 = vector.multi_reduction <add>, %141, %cst_49 [1] : vector<8x4xf32> to vector<8xf32>
    %143 = vector.shape_cast %142 : vector<8xf32> to vector<8x1xf32>
    %cst_50 = arith.constant 1.000000e-24 : f32
    %144 = vector.broadcast %cst_50 : f32 to vector<8x1xf32>
    %145 = arith.addf %143, %144 : vector<8x1xf32>
    %146 = math.rsqrt %145 : vector<8x1xf32>
    %147 = vector.broadcast %146 : vector<8x1xf32> to vector<8x4xf32>
    %148 = arith.mulf %132, %147 : vector<8x4xf32>
    %cst_51 = arith.constant dense<0xFF800000> : vector<8xf32>
    %149 = vector.multi_reduction <maximumf>, %140, %cst_51 [1] : vector<8x4xf32> to vector<8xf32>
    %150 = vector.shape_cast %149 : vector<8xf32> to vector<8x1xf32>
    %151 = vector.broadcast %150 : vector<8x1xf32> to vector<8x4xf32>
    %152 = arith.subf %140, %151 : vector<8x4xf32>
    %153 = math.exp %152 : vector<8x4xf32>
    %cst_52 = arith.constant dense<0.000000e+00> : vector<8xf32>
    %154 = vector.multi_reduction <add>, %153, %cst_52 [1] : vector<8x4xf32> to vector<8xf32>
    %155 = vector.shape_cast %154 : vector<8xf32> to vector<8x1xf32>
    %156 = math.log %155 : vector<8x1xf32>
    %157 = vector.broadcast %156 : vector<8x1xf32> to vector<8x4xf32>
    %158 = arith.subf %152, %157 : vector<8x4xf32>
    %cst_53 = arith.constant dense<0xFF800000> : vector<8xf32>
    %159 = vector.multi_reduction <maximumf>, %148, %cst_53 [1] : vector<8x4xf32> to vector<8xf32>
    %160 = vector.shape_cast %159 : vector<8xf32> to vector<8x1xf32>
    %161 = vector.broadcast %160 : vector<8x1xf32> to vector<8x4xf32>
    %162 = arith.subf %148, %161 : vector<8x4xf32>
    %163 = math.exp %162 : vector<8x4xf32>
    %cst_54 = arith.constant dense<0.000000e+00> : vector<8xf32>
    %164 = vector.multi_reduction <add>, %163, %cst_54 [1] : vector<8x4xf32> to vector<8xf32>
    %165 = vector.shape_cast %164 : vector<8xf32> to vector<8x1xf32>
    %166 = tpu.reciprocal %165 {approx = true} : vector<8x1xf32> -> vector<8x1xf32>
    %167 = vector.broadcast %166 : vector<8x1xf32> to vector<8x4xf32>
    %168 = arith.mulf %163, %167 : vector<8x4xf32>
    %cst_55 = arith.constant dense<0xFF800000> : vector<8xf32>
    %169 = vector.multi_reduction <maximumf>, %148, %cst_55 [1] : vector<8x4xf32> to vector<8xf32>
    %170 = vector.shape_cast %169 : vector<8xf32> to vector<8x1xf32>
    %171 = vector.broadcast %170 : vector<8x1xf32> to vector<8x4xf32>
    %172 = arith.subf %148, %171 : vector<8x4xf32>
    %173 = math.exp %172 : vector<8x4xf32>
    %cst_56 = arith.constant dense<0.000000e+00> : vector<8xf32>
    %174 = vector.multi_reduction <add>, %173, %cst_56 [1] : vector<8x4xf32> to vector<8xf32>
    %175 = vector.shape_cast %174 : vector<8xf32> to vector<8x1xf32>
    %176 = math.log %175 : vector<8x1xf32>
    %177 = vector.broadcast %176 : vector<8x1xf32> to vector<8x4xf32>
    %178 = arith.subf %172, %177 : vector<8x4xf32>
    %179 = arith.subf %178, %158 : vector<8x4xf32>
    %180 = arith.mulf %168, %179 : vector<8x4xf32>
    %cst_57 = arith.constant dense<0.000000e+00> : vector<8xf32>
    %181 = vector.multi_reduction <add>, %180, %cst_57 [1] : vector<8x4xf32> to vector<8xf32>
    %182 = vector.shape_cast %181 : vector<8xf32> to vector<8x1xf32>
    %cst_58 = arith.constant dense<0.000000e+00> : vector<1xf32>
    %183 = vector.multi_reduction <add>, %182, %cst_58 [0] : vector<8x1xf32> to vector<1xf32>
    %184 = vector.shape_cast %183 : vector<1xf32> to vector<1x1xf32>
    %cst_59 = arith.constant 1.250000e-01 : f32
    %185 = vector.broadcast %cst_59 : f32 to vector<1x1xf32>
    %186 = arith.mulf %184, %185 : vector<1x1xf32>
    %187 = arith.addf %130, %186 : vector<1x1xf32>
    %c0_60 = arith.constant 0 : index
    %c0_61 = arith.constant 0 : index
    %188 = vector.load %arg4[%c0_60, %c0_61] : memref<8x16xf32, #tpu.memory_space<vmem>>, vector<8x16xf32>
    %c0_62 = arith.constant 0 : index
    %c0_63 = arith.constant 0 : index
    %189 = vector.load %arg5[%c0_62, %c0_63] : memref<8x16xf32, #tpu.memory_space<vmem>>, vector<8x16xf32>
    %190 = arith.mulf %188, %188 : vector<8x16xf32>
    %cst_64 = arith.constant dense<0.000000e+00> : vector<8xf32>
    %191 = vector.multi_reduction <add>, %190, %cst_64 [1] : vector<8x16xf32> to vector<8xf32>
    %192 = vector.shape_cast %191 : vector<8xf32> to vector<8x1xf32>
    %cst_65 = arith.constant 1.000000e-24 : f32
    %193 = vector.broadcast %cst_65 : f32 to vector<8x1xf32>
    %194 = arith.addf %192, %193 : vector<8x1xf32>
    %195 = math.rsqrt %194 : vector<8x1xf32>
    %196 = vector.broadcast %195 : vector<8x1xf32> to vector<8x16xf32>
    %197 = arith.mulf %188, %196 : vector<8x16xf32>
    %198 = arith.mulf %189, %189 : vector<8x16xf32>
    %cst_66 = arith.constant dense<0.000000e+00> : vector<8xf32>
    %199 = vector.multi_reduction <add>, %198, %cst_66 [1] : vector<8x16xf32> to vector<8xf32>
    %200 = vector.shape_cast %199 : vector<8xf32> to vector<8x1xf32>
    %cst_67 = arith.constant 1.000000e-24 : f32
    %201 = vector.broadcast %cst_67 : f32 to vector<8x1xf32>
    %202 = arith.addf %200, %201 : vector<8x1xf32>
    %203 = math.rsqrt %202 : vector<8x1xf32>
    %204 = vector.broadcast %203 : vector<8x1xf32> to vector<8x16xf32>
    %205 = arith.mulf %189, %204 : vector<8x16xf32>
    %cst_68 = arith.constant dense<0xFF800000> : vector<8xf32>
    %206 = vector.multi_reduction <maximumf>, %197, %cst_68 [1] : vector<8x16xf32> to vector<8xf32>
    %207 = vector.shape_cast %206 : vector<8xf32> to vector<8x1xf32>
    %208 = vector.broadcast %207 : vector<8x1xf32> to vector<8x16xf32>
    %209 = arith.subf %197, %208 : vector<8x16xf32>
    %210 = math.exp %209 : vector<8x16xf32>
    %cst_69 = arith.constant dense<0.000000e+00> : vector<8xf32>
    %211 = vector.multi_reduction <add>, %210, %cst_69 [1] : vector<8x16xf32> to vector<8xf32>
    %212 = vector.shape_cast %211 : vector<8xf32> to vector<8x1xf32>
    %213 = math.log %212 : vector<8x1xf32>
    %214 = vector.broadcast %213 : vector<8x1xf32> to vector<8x16xf32>
    %215 = arith.subf %209, %214 : vector<8x16xf32>
    %cst_70 = arith.constant dense<0xFF800000> : vector<8xf32>
    %216 = vector.multi_reduction <maximumf>, %205, %cst_70 [1] : vector<8x16xf32> to vector<8xf32>
    %217 = vector.shape_cast %216 : vector<8xf32> to vector<8x1xf32>
    %218 = vector.broadcast %217 : vector<8x1xf32> to vector<8x16xf32>
    %219 = arith.subf %205, %218 : vector<8x16xf32>
    %220 = math.exp %219 : vector<8x16xf32>
    %cst_71 = arith.constant dense<0.000000e+00> : vector<8xf32>
    %221 = vector.multi_reduction <add>, %220, %cst_71 [1] : vector<8x16xf32> to vector<8xf32>
    %222 = vector.shape_cast %221 : vector<8xf32> to vector<8x1xf32>
    %223 = tpu.reciprocal %222 {approx = true} : vector<8x1xf32> -> vector<8x1xf32>
    %224 = vector.broadcast %223 : vector<8x1xf32> to vector<8x16xf32>
    %225 = arith.mulf %220, %224 : vector<8x16xf32>
    %cst_72 = arith.constant dense<0xFF800000> : vector<8xf32>
    %226 = vector.multi_reduction <maximumf>, %205, %cst_72 [1] : vector<8x16xf32> to vector<8xf32>
    %227 = vector.shape_cast %226 : vector<8xf32> to vector<8x1xf32>
    %228 = vector.broadcast %227 : vector<8x1xf32> to vector<8x16xf32>
    %229 = arith.subf %205, %228 : vector<8x16xf32>
    %230 = math.exp %229 : vector<8x16xf32>
    %cst_73 = arith.constant dense<0.000000e+00> : vector<8xf32>
    %231 = vector.multi_reduction <add>, %230, %cst_73 [1] : vector<8x16xf32> to vector<8xf32>
    %232 = vector.shape_cast %231 : vector<8xf32> to vector<8x1xf32>
    %233 = math.log %232 : vector<8x1xf32>
    %234 = vector.broadcast %233 : vector<8x1xf32> to vector<8x16xf32>
    %235 = arith.subf %229, %234 : vector<8x16xf32>
    %236 = arith.subf %235, %215 : vector<8x16xf32>
    %237 = arith.mulf %225, %236 : vector<8x16xf32>
    %cst_74 = arith.constant dense<0.000000e+00> : vector<8xf32>
    %238 = vector.multi_reduction <add>, %237, %cst_74 [1] : vector<8x16xf32> to vector<8xf32>
    %239 = vector.shape_cast %238 : vector<8xf32> to vector<8x1xf32>
    %cst_75 = arith.constant dense<0.000000e+00> : vector<1xf32>
    %240 = vector.multi_reduction <add>, %239, %cst_75 [0] : vector<8x1xf32> to vector<1xf32>
    %241 = vector.shape_cast %240 : vector<1xf32> to vector<1x1xf32>
    %cst_76 = arith.constant 1.250000e-01 : f32
    %242 = vector.broadcast %cst_76 : f32 to vector<1x1xf32>
    %243 = arith.mulf %241, %242 : vector<1x1xf32>
    %244 = arith.addf %187, %243 : vector<1x1xf32>
    %c0_77 = arith.constant 0 : index
    %c0_78 = arith.constant 0 : index
    %245 = vector.load %arg6[%c0_77, %c0_78] : memref<4x16xf32, #tpu.memory_space<vmem>>, vector<4x16xf32>
    %c0_79 = arith.constant 0 : index
    %c0_80 = arith.constant 0 : index
    %246 = vector.load %arg7[%c0_79, %c0_80] : memref<4x16xf32, #tpu.memory_space<vmem>>, vector<4x16xf32>
    %cst_81 = arith.constant dense<0xFF800000> : vector<4xf32>
    %247 = vector.multi_reduction <maximumf>, %245, %cst_81 [1] : vector<4x16xf32> to vector<4xf32>
    %248 = vector.shape_cast %247 : vector<4xf32> to vector<4x1xf32>
    %249 = vector.broadcast %248 : vector<4x1xf32> to vector<4x16xf32>
    %250 = arith.subf %245, %249 : vector<4x16xf32>
    %251 = math.exp %250 : vector<4x16xf32>
    %cst_82 = arith.constant dense<0.000000e+00> : vector<4xf32>
    %252 = vector.multi_reduction <add>, %251, %cst_82 [1] : vector<4x16xf32> to vector<4xf32>
    %253 = vector.shape_cast %252 : vector<4xf32> to vector<4x1xf32>
    %254 = tpu.reciprocal %253 {approx = true} : vector<4x1xf32> -> vector<4x1xf32>
    %255 = vector.broadcast %254 : vector<4x1xf32> to vector<4x16xf32>
    %256 = arith.mulf %251, %255 : vector<4x16xf32>
    %cst_83 = arith.constant dense<0xFF800000> : vector<4xf32>
    %257 = vector.multi_reduction <maximumf>, %246, %cst_83 [1] : vector<4x16xf32> to vector<4xf32>
    %258 = vector.shape_cast %257 : vector<4xf32> to vector<4x1xf32>
    %259 = vector.broadcast %258 : vector<4x1xf32> to vector<4x16xf32>
    %260 = arith.subf %246, %259 : vector<4x16xf32>
    %261 = math.exp %260 : vector<4x16xf32>
    %cst_84 = arith.constant dense<0.000000e+00> : vector<4xf32>
    %262 = vector.multi_reduction <add>, %261, %cst_84 [1] : vector<4x16xf32> to vector<4xf32>
    %263 = vector.shape_cast %262 : vector<4xf32> to vector<4x1xf32>
    %264 = tpu.reciprocal %263 {approx = true} : vector<4x1xf32> -> vector<4x1xf32>
    %265 = vector.broadcast %264 : vector<4x1xf32> to vector<4x16xf32>
    %266 = arith.mulf %261, %265 : vector<4x16xf32>
    %cst_85 = arith.constant dense<0.000000e+00> : vector<4xf32>
    %267 = vector.multi_reduction <add>, %256, %cst_85 [1] : vector<4x16xf32> to vector<4xf32>
    %268 = vector.shape_cast %267 : vector<4xf32> to vector<4x1xf32>
    %cst_86 = arith.constant 1.600000e+01 : f32
    %269 = vector.broadcast %cst_86 : f32 to vector<4x1xf32>
    %270 = arith.divf %268, %269 : vector<4x1xf32>
    %271 = vector.broadcast %270 : vector<4x1xf32> to vector<4x16xf32>
    %272 = arith.subf %256, %271 : vector<4x16xf32>
    %cst_87 = arith.constant dense<0.000000e+00> : vector<4xf32>
    %273 = vector.multi_reduction <add>, %266, %cst_87 [1] : vector<4x16xf32> to vector<4xf32>
    %274 = vector.shape_cast %273 : vector<4xf32> to vector<4x1xf32>
    %cst_88 = arith.constant 1.600000e+01 : f32
    %275 = vector.broadcast %cst_88 : f32 to vector<4x1xf32>
    %276 = arith.divf %274, %275 : vector<4x1xf32>
    %277 = vector.broadcast %276 : vector<4x1xf32> to vector<4x16xf32>
    %278 = arith.subf %266, %277 : vector<4x16xf32>
    %279 = arith.mulf %272, %278 : vector<4x16xf32>
    %cst_89 = arith.constant dense<0.000000e+00> : vector<4xf32>
    %280 = vector.multi_reduction <add>, %279, %cst_89 [1] : vector<4x16xf32> to vector<4xf32>
    %281 = vector.shape_cast %280 : vector<4xf32> to vector<4x1xf32>
    %282 = arith.mulf %272, %272 : vector<4x16xf32>
    %cst_90 = arith.constant dense<0.000000e+00> : vector<4xf32>
    %283 = vector.multi_reduction <add>, %282, %cst_90 [1] : vector<4x16xf32> to vector<4xf32>
    %284 = vector.shape_cast %283 : vector<4xf32> to vector<4x1xf32>
    %285 = arith.mulf %278, %278 : vector<4x16xf32>
    %cst_91 = arith.constant dense<0.000000e+00> : vector<4xf32>
    %286 = vector.multi_reduction <add>, %285, %cst_91 [1] : vector<4x16xf32> to vector<4xf32>
    %287 = vector.shape_cast %286 : vector<4xf32> to vector<4x1xf32>
    %288 = arith.mulf %284, %287 : vector<4x1xf32>
    %cst_92 = arith.constant 9.99999993E-9 : f32
    %289 = vector.broadcast %cst_92 : f32 to vector<4x1xf32>
    %290 = arith.addf %288, %289 : vector<4x1xf32>
    %291 = math.rsqrt %290 : vector<4x1xf32>
    %292 = arith.mulf %281, %291 : vector<4x1xf32>
    %cst_93 = arith.constant dense<0.000000e+00> : vector<1xf32>
    %293 = vector.multi_reduction <add>, %292, %cst_93 [0] : vector<4x1xf32> to vector<1xf32>
    %294 = vector.shape_cast %293 : vector<1xf32> to vector<1x1xf32>
    %cst_94 = arith.constant 2.500000e-01 : f32
    %295 = vector.broadcast %cst_94 : f32 to vector<1x1xf32>
    %296 = arith.mulf %294, %295 : vector<1x1xf32>
    %cst_95 = arith.constant 1.000000e+00 : f32
    %297 = vector.broadcast %cst_95 : f32 to vector<1x1xf32>
    %298 = arith.subf %297, %296 : vector<1x1xf32>
    %cst_96 = arith.constant dense<0.000000e+00> : vector<16xf32>
    %299 = vector.multi_reduction <add>, %256, %cst_96 [0] : vector<4x16xf32> to vector<16xf32>
    %300 = vector.shape_cast %299 : vector<16xf32> to vector<1x16xf32>
    %cst_97 = arith.constant 4.000000e+00 : f32
    %301 = vector.broadcast %cst_97 : f32 to vector<1x16xf32>
    %302 = arith.divf %300, %301 : vector<1x16xf32>
    %303 = vector.broadcast %302 : vector<1x16xf32> to vector<4x16xf32>
    %304 = arith.subf %256, %303 : vector<4x16xf32>
    %cst_98 = arith.constant dense<0.000000e+00> : vector<16xf32>
    %305 = vector.multi_reduction <add>, %266, %cst_98 [0] : vector<4x16xf32> to vector<16xf32>
    %306 = vector.shape_cast %305 : vector<16xf32> to vector<1x16xf32>
    %cst_99 = arith.constant 4.000000e+00 : f32
    %307 = vector.broadcast %cst_99 : f32 to vector<1x16xf32>
    %308 = arith.divf %306, %307 : vector<1x16xf32>
    %309 = vector.broadcast %308 : vector<1x16xf32> to vector<4x16xf32>
    %310 = arith.subf %266, %309 : vector<4x16xf32>
    %311 = arith.mulf %304, %310 : vector<4x16xf32>
    %cst_100 = arith.constant dense<0.000000e+00> : vector<16xf32>
    %312 = vector.multi_reduction <add>, %311, %cst_100 [0] : vector<4x16xf32> to vector<16xf32>
    %313 = vector.shape_cast %312 : vector<16xf32> to vector<1x16xf32>
    %314 = arith.mulf %304, %304 : vector<4x16xf32>
    %cst_101 = arith.constant dense<0.000000e+00> : vector<16xf32>
    %315 = vector.multi_reduction <add>, %314, %cst_101 [0] : vector<4x16xf32> to vector<16xf32>
    %316 = vector.shape_cast %315 : vector<16xf32> to vector<1x16xf32>
    %317 = arith.mulf %310, %310 : vector<4x16xf32>
    %cst_102 = arith.constant dense<0.000000e+00> : vector<16xf32>
    %318 = vector.multi_reduction <add>, %317, %cst_102 [0] : vector<4x16xf32> to vector<16xf32>
    %319 = vector.shape_cast %318 : vector<16xf32> to vector<1x16xf32>
    %320 = arith.mulf %316, %319 : vector<1x16xf32>
    %cst_103 = arith.constant 9.99999993E-9 : f32
    %321 = vector.broadcast %cst_103 : f32 to vector<1x16xf32>
    %322 = arith.addf %320, %321 : vector<1x16xf32>
    %323 = math.rsqrt %322 : vector<1x16xf32>
    %324 = arith.mulf %313, %323 : vector<1x16xf32>
    %cst_104 = arith.constant dense<0.000000e+00> : vector<1xf32>
    %325 = vector.multi_reduction <add>, %324, %cst_104 [1] : vector<1x16xf32> to vector<1xf32>
    %326 = vector.shape_cast %325 : vector<1xf32> to vector<1x1xf32>
    %cst_105 = arith.constant 6.250000e-02 : f32
    %327 = vector.broadcast %cst_105 : f32 to vector<1x1xf32>
    %328 = arith.mulf %326, %327 : vector<1x1xf32>
    %cst_106 = arith.constant 1.000000e+00 : f32
    %329 = vector.broadcast %cst_106 : f32 to vector<1x1xf32>
    %330 = arith.subf %329, %328 : vector<1x1xf32>
    %331 = arith.addf %298, %330 : vector<1x1xf32>
    %332 = arith.addf %244, %331 : vector<1x1xf32>
    %c0_107 = arith.constant 0 : index
    %c0_108 = arith.constant 0 : index
    %333 = vector.load %arg4[%c0_107, %c0_108] : memref<8x16xf32, #tpu.memory_space<vmem>>, vector<8x16xf32>
    %334 = tpu.iota {dimensions = array<i32: 1>} : vector<8x16xi32>
    %c0_109 = arith.constant 0 : index
    %c0_110 = arith.constant 0 : index
    %335 = vector.load %arg12[%c0_109, %c0_110] : memref<8x1xi32, #tpu.memory_space<vmem>>, vector<8x1xi32>
    %336 = vector.broadcast %335 : vector<8x1xi32> to vector<8x16xi32>
    %337 = arith.cmpi eq, %334, %336 : vector<8x16xi32>
    %338 = arith.extui %337 : vector<8x16xi1> to vector<8x16xi32>
    %339 = arith.sitofp %338 : vector<8x16xi32> to vector<8x16xf32>
    %c0_111 = arith.constant 0 : index
    %c0_112 = arith.constant 0 : index
    %340 = vector.load %arg8[%c0_111, %c0_112] : memref<2x4xf32, #tpu.memory_space<vmem>>, vector<2x4xf32>
    %341 = tpu.iota {dimensions = array<i32: 1>} : vector<2x4xi32>
    %c0_113 = arith.constant 0 : index
    %c0_114 = arith.constant 0 : index
    %342 = vector.load %arg13[%c0_113, %c0_114] : memref<2x1xi32, #tpu.memory_space<vmem>>, vector<2x1xi32>
    %343 = vector.broadcast %342 : vector<2x1xi32> to vector<2x4xi32>
    %344 = arith.cmpi eq, %341, %343 : vector<2x4xi32>
    %345 = arith.extui %344 : vector<2x4xi1> to vector<2x4xi32>
    %346 = arith.sitofp %345 : vector<2x4xi32> to vector<2x4xf32>
    %cst_115 = arith.constant 2.500000e-01 : f32
    %347 = vector.broadcast %cst_115 : f32 to vector<2x4xf32>
    %348 = arith.mulf %340, %347 : vector<2x4xf32>
    %c0_116 = arith.constant 0 : index
    %c0_117 = arith.constant 0 : index
    %349 = vector.load %arg9[%c0_116, %c0_117] : memref<2x4xf32, #tpu.memory_space<vmem>>, vector<2x4xf32>
    %cst_118 = arith.constant 2.500000e-01 : f32
    %350 = vector.broadcast %cst_118 : f32 to vector<2x4xf32>
    %351 = arith.mulf %349, %350 : vector<2x4xf32>
    %cst_119 = arith.constant dense<0xFF800000> : vector<2xf32>
    %352 = vector.multi_reduction <maximumf>, %348, %cst_119 [1] : vector<2x4xf32> to vector<2xf32>
    %353 = vector.shape_cast %352 : vector<2xf32> to vector<2x1xf32>
    %354 = vector.broadcast %353 : vector<2x1xf32> to vector<2x4xf32>
    %355 = arith.subf %348, %354 : vector<2x4xf32>
    %356 = math.exp %355 : vector<2x4xf32>
    %cst_120 = arith.constant dense<0.000000e+00> : vector<2xf32>
    %357 = vector.multi_reduction <add>, %356, %cst_120 [1] : vector<2x4xf32> to vector<2xf32>
    %358 = vector.shape_cast %357 : vector<2xf32> to vector<2x1xf32>
    %359 = math.log %358 : vector<2x1xf32>
    %360 = vector.broadcast %359 : vector<2x1xf32> to vector<2x4xf32>
    %361 = arith.subf %355, %360 : vector<2x4xf32>
    %cst_121 = arith.constant dense<0xFF800000> : vector<2xf32>
    %362 = vector.multi_reduction <maximumf>, %351, %cst_121 [1] : vector<2x4xf32> to vector<2xf32>
    %363 = vector.shape_cast %362 : vector<2xf32> to vector<2x1xf32>
    %364 = vector.broadcast %363 : vector<2x1xf32> to vector<2x4xf32>
    %365 = arith.subf %351, %364 : vector<2x4xf32>
    %366 = math.exp %365 : vector<2x4xf32>
    %cst_122 = arith.constant dense<0.000000e+00> : vector<2xf32>
    %367 = vector.multi_reduction <add>, %366, %cst_122 [1] : vector<2x4xf32> to vector<2xf32>
    %368 = vector.shape_cast %367 : vector<2xf32> to vector<2x1xf32>
    %369 = tpu.reciprocal %368 {approx = true} : vector<2x1xf32> -> vector<2x1xf32>
    %370 = vector.broadcast %369 : vector<2x1xf32> to vector<2x4xf32>
    %371 = arith.mulf %366, %370 : vector<2x4xf32>
    %cst_123 = arith.constant dense<0xFF800000> : vector<2xf32>
    %372 = vector.multi_reduction <maximumf>, %351, %cst_123 [1] : vector<2x4xf32> to vector<2xf32>
    %373 = vector.shape_cast %372 : vector<2xf32> to vector<2x1xf32>
    %374 = vector.broadcast %373 : vector<2x1xf32> to vector<2x4xf32>
    %375 = arith.subf %351, %374 : vector<2x4xf32>
    %376 = math.exp %375 : vector<2x4xf32>
    %cst_124 = arith.constant dense<0.000000e+00> : vector<2xf32>
    %377 = vector.multi_reduction <add>, %376, %cst_124 [1] : vector<2x4xf32> to vector<2xf32>
    %378 = vector.shape_cast %377 : vector<2xf32> to vector<2x1xf32>
    %379 = math.log %378 : vector<2x1xf32>
    %380 = vector.broadcast %379 : vector<2x1xf32> to vector<2x4xf32>
    %381 = arith.subf %375, %380 : vector<2x4xf32>
    %382 = arith.subf %381, %361 : vector<2x4xf32>
    %383 = arith.mulf %371, %382 : vector<2x4xf32>
    %cst_125 = arith.constant dense<0.000000e+00> : vector<2xf32>
    %384 = vector.multi_reduction <add>, %383, %cst_125 [1] : vector<2x4xf32> to vector<2xf32>
    %385 = vector.shape_cast %384 : vector<2xf32> to vector<2x1xf32>
    %cst_126 = arith.constant dense<0.000000e+00> : vector<1xf32>
    %386 = vector.multi_reduction <add>, %385, %cst_126 [0] : vector<2x1xf32> to vector<1xf32>
    %387 = vector.shape_cast %386 : vector<1xf32> to vector<1x1xf32>
    %cst_127 = arith.constant 5.000000e-01 : f32
    %388 = vector.broadcast %cst_127 : f32 to vector<1x1xf32>
    %389 = arith.mulf %387, %388 : vector<1x1xf32>
    %cst_128 = arith.constant dense<0xFF800000> : vector<8xf32>
    %390 = vector.multi_reduction <maximumf>, %333, %cst_128 [1] : vector<8x16xf32> to vector<8xf32>
    %391 = vector.shape_cast %390 : vector<8xf32> to vector<8x1xf32>
    %392 = vector.broadcast %391 : vector<8x1xf32> to vector<8x16xf32>
    %393 = arith.subf %333, %392 : vector<8x16xf32>
    %394 = math.exp %393 : vector<8x16xf32>
    %cst_129 = arith.constant dense<0.000000e+00> : vector<8xf32>
    %395 = vector.multi_reduction <add>, %394, %cst_129 [1] : vector<8x16xf32> to vector<8xf32>
    %396 = vector.shape_cast %395 : vector<8xf32> to vector<8x1xf32>
    %397 = math.log %396 : vector<8x1xf32>
    %398 = arith.addf %397, %391 : vector<8x1xf32>
    %399 = vector.broadcast %398 : vector<8x1xf32> to vector<8x16xf32>
    %400 = arith.subf %333, %399 : vector<8x16xf32>
    %401 = arith.mulf %339, %400 : vector<8x16xf32>
    %cst_130 = arith.constant dense<0.000000e+00> : vector<8xf32>
    %402 = vector.multi_reduction <add>, %401, %cst_130 [1] : vector<8x16xf32> to vector<8xf32>
    %403 = vector.shape_cast %402 : vector<8xf32> to vector<8x1xf32>
    %cst_131 = arith.constant 0.000000e+00 : f32
    %404 = vector.broadcast %cst_131 : f32 to vector<8x1xf32>
    %405 = arith.subf %404, %403 : vector<8x1xf32>
    %cst_132 = arith.constant dense<0.000000e+00> : vector<1xf32>
    %406 = vector.multi_reduction <add>, %405, %cst_132 [0] : vector<8x1xf32> to vector<1xf32>
    %407 = vector.shape_cast %406 : vector<1xf32> to vector<1x1xf32>
    %cst_133 = arith.constant 1.250000e-01 : f32
    %408 = vector.broadcast %cst_133 : f32 to vector<1x1xf32>
    %409 = arith.mulf %407, %408 : vector<1x1xf32>
    %cst_134 = arith.constant dense<0xFF800000> : vector<2xf32>
    %410 = vector.multi_reduction <maximumf>, %340, %cst_134 [1] : vector<2x4xf32> to vector<2xf32>
    %411 = vector.shape_cast %410 : vector<2xf32> to vector<2x1xf32>
    %412 = vector.broadcast %411 : vector<2x1xf32> to vector<2x4xf32>
    %413 = arith.subf %340, %412 : vector<2x4xf32>
    %414 = math.exp %413 : vector<2x4xf32>
    %cst_135 = arith.constant dense<0.000000e+00> : vector<2xf32>
    %415 = vector.multi_reduction <add>, %414, %cst_135 [1] : vector<2x4xf32> to vector<2xf32>
    %416 = vector.shape_cast %415 : vector<2xf32> to vector<2x1xf32>
    %417 = math.log %416 : vector<2x1xf32>
    %418 = arith.addf %417, %411 : vector<2x1xf32>
    %419 = vector.broadcast %418 : vector<2x1xf32> to vector<2x4xf32>
    %420 = arith.subf %340, %419 : vector<2x4xf32>
    %421 = arith.mulf %346, %420 : vector<2x4xf32>
    %cst_136 = arith.constant dense<0.000000e+00> : vector<2xf32>
    %422 = vector.multi_reduction <add>, %421, %cst_136 [1] : vector<2x4xf32> to vector<2xf32>
    %423 = vector.shape_cast %422 : vector<2xf32> to vector<2x1xf32>
    %cst_137 = arith.constant 0.000000e+00 : f32
    %424 = vector.broadcast %cst_137 : f32 to vector<2x1xf32>
    %425 = arith.subf %424, %423 : vector<2x1xf32>
    %cst_138 = arith.constant dense<0.000000e+00> : vector<1xf32>
    %426 = vector.multi_reduction <add>, %425, %cst_138 [0] : vector<2x1xf32> to vector<1xf32>
    %427 = vector.shape_cast %426 : vector<1xf32> to vector<1x1xf32>
    %cst_139 = arith.constant 5.000000e-01 : f32
    %428 = vector.broadcast %cst_139 : f32 to vector<1x1xf32>
    %429 = arith.mulf %427, %428 : vector<1x1xf32>
    %430 = arith.addf %409, %429 : vector<1x1xf32>
    %cst_140 = arith.constant 1.600000e+01 : f32
    %431 = vector.broadcast %cst_140 : f32 to vector<1x1xf32>
    %432 = arith.mulf %389, %431 : vector<1x1xf32>
    %433 = arith.addf %430, %432 : vector<1x1xf32>
    %434 = tpu.iota {dimensions = array<i32: 1>} : vector<1x128xi32>
    %cst_141 = arith.constant 0.000000e+00 : f32
    %435 = vector.broadcast %cst_141 : f32 to vector<1x128xf32>
    %c0_i32 = arith.constant 0 : i32
    %436 = vector.broadcast %c0_i32 : i32 to vector<1x128xi32>
    %437 = arith.cmpi eq, %434, %436 : vector<1x128xi32>
    %cst_142 = arith.constant 0.000000e+00 : f32
    %438 = vector.shape_cast %44 : vector<1x1xf32> to vector<1x1xf32>
    %439 = vector.broadcast %438 : vector<1x1xf32> to vector<1x128xf32>
    %440 = vector.broadcast %cst_142 : f32 to vector<1x128xf32>
    %441 = arith.select %437, %439, %440 : vector<1x128xi1>, vector<1x128xf32>
    %442 = arith.addf %435, %441 : vector<1x128xf32>
    %c1_i32 = arith.constant 1 : i32
    %443 = vector.broadcast %c1_i32 : i32 to vector<1x128xi32>
    %444 = arith.cmpi eq, %434, %443 : vector<1x128xi32>
    %cst_143 = arith.constant 0.000000e+00 : f32
    %445 = vector.shape_cast %332 : vector<1x1xf32> to vector<1x1xf32>
    %446 = vector.broadcast %445 : vector<1x1xf32> to vector<1x128xf32>
    %447 = vector.broadcast %cst_143 : f32 to vector<1x128xf32>
    %448 = arith.select %444, %446, %447 : vector<1x128xi1>, vector<1x128xf32>
    %449 = arith.addf %442, %448 : vector<1x128xf32>
    %c2_i32 = arith.constant 2 : i32
    %450 = vector.broadcast %c2_i32 : i32 to vector<1x128xi32>
    %451 = arith.cmpi eq, %434, %450 : vector<1x128xi32>
    %cst_144 = arith.constant 0.000000e+00 : f32
    %452 = vector.shape_cast %433 : vector<1x1xf32> to vector<1x1xf32>
    %453 = vector.broadcast %452 : vector<1x1xf32> to vector<1x128xf32>
    %454 = vector.broadcast %cst_144 : f32 to vector<1x128xf32>
    %455 = arith.select %451, %453, %454 : vector<1x128xi1>, vector<1x128xf32>
    %456 = arith.addf %449, %455 : vector<1x128xf32>
    %c0_145 = arith.constant 0 : index
    %c0_146 = arith.constant 0 : index
    %457 = vector.load %arg14[%c0_145, %c0_146] : memref<1x128xf32, #tpu.memory_space<vmem>>, vector<1x128xf32>
    tpu.vector_store %arg14[%c0_145, %c0_146], %456 {strides = array<i32>} : memref<1x128xf32, #tpu.memory_space<vmem>>, vector<1x128xf32>,
    return
  }
}

module attributes {stable_mosaic.version = 11 : i64} {
  func.func @_mixup_contrast_kernel(%arg0: memref<4x16xf32, #tpu.memory_space<vmem>>, %arg1: memref<8x16xf32, #tpu.memory_space<vmem>>, %arg2: memref<4x2xi32, #tpu.memory_space<vmem>>, %arg3: memref<3x4xi32, #tpu.memory_space<vmem>>, %arg4: memref<1x8xi32, #tpu.memory_space<vmem>>, %arg5: memref<2xf32, #tpu.memory_space<smem>>, %arg6: memref<1x128xf32, #tpu.memory_space<vmem>>) attributes {dimension_semantics = [], scalar_prefetch = 0 : i64, scratch_operands = 0 : i64, tpu.core_type = #tpu.core_type<tc>} {
    %c0 = arith.constant 0 : index
    %c0_0 = arith.constant 0 : index
    %0 = vector.load %arg0[%c0, %c0_0] : memref<4x16xf32, #tpu.memory_space<vmem>>, vector<4x16xf32>
    %c0_1 = arith.constant 0 : index
    %c0_2 = arith.constant 0 : index
    %1 = vector.load %arg2[%c0_1, %c0_2] : memref<4x2xi32, #tpu.memory_space<vmem>>, vector<4x2xi32>
    %c0_3 = arith.constant 0 : index
    %c0_4 = arith.constant 0 : index
    %2 = vector.load %arg3[%c0_3, %c0_4] : memref<3x4xi32, #tpu.memory_space<vmem>>, vector<3x4xi32>
    %3 = vector.extract_strided_slice %1 {offsets = [0, 0], sizes = [4, 1], strides = [1, 1]} : vector<4x2xi32> to vector<4x1xi32>
    %4 = vector.extract_strided_slice %1 {offsets = [0, 1], sizes = [4, 1], strides = [1, 1]} : vector<4x2xi32> to vector<4x1xi32>
    %5 = vector.extract_strided_slice %2 {offsets = [0, 0], sizes = [1, 4], strides = [1, 1]} : vector<3x4xi32> to vector<1x4xi32>
    %6 = vector.extract_strided_slice %2 {offsets = [1, 0], sizes = [1, 4], strides = [1, 1]} : vector<3x4xi32> to vector<1x4xi32>
    %7 = vector.extract_strided_slice %2 {offsets = [2, 0], sizes = [1, 4], strides = [1, 1]} : vector<3x4xi32> to vector<1x4xi32>
    %8 = tpu.iota {dimensions = array<i32: 0>} : vector<4x4xi32>
    %9 = tpu.iota {dimensions = array<i32: 1>} : vector<4x4xi32>
    %10 = arith.cmpi ne, %8, %9 : vector<4x4xi32>
    %11 = arith.extui %10 : vector<4x4xi1> to vector<4x4xi32>
    %12 = arith.sitofp %11 : vector<4x4xi32> to vector<4x4xf32>
    %c2_i32 = arith.constant 2 : i32
    %13 = vector.broadcast %c2_i32 : i32 to vector<4x4xi32>
    %14 = arith.cmpi slt, %8, %13 : vector<4x4xi32>
    %15 = arith.extui %14 : vector<4x4xi1> to vector<4x4xi32>
    %16 = arith.sitofp %15 : vector<4x4xi32> to vector<4x4xf32>
    %17 = vector.broadcast %3 : vector<4x1xi32> to vector<4x4xi32>
    %18 = vector.broadcast %5 : vector<1x4xi32> to vector<4x4xi32>
    %19 = arith.cmpi eq, %17, %18 : vector<4x4xi32>
    %20 = arith.extui %19 : vector<4x4xi1> to vector<4x4xi32>
    %21 = arith.sitofp %20 : vector<4x4xi32> to vector<4x4xf32>
    %22 = arith.mulf %21, %12 : vector<4x4xf32>
    %23 = vector.broadcast %4 : vector<4x1xi32> to vector<4x4xi32>
    %24 = vector.broadcast %6 : vector<1x4xi32> to vector<4x4xi32>
    %25 = arith.cmpi eq, %23, %24 : vector<4x4xi32>
    %26 = arith.extui %25 : vector<4x4xi1> to vector<4x4xi32>
    %27 = arith.sitofp %26 : vector<4x4xi32> to vector<4x4xf32>
    %28 = arith.mulf %16, %27 : vector<4x4xf32>
    %cst = arith.constant 1.000000e+00 : f32
    %29 = vector.broadcast %cst : f32 to vector<4x4xf32>
    %30 = arith.subf %29, %16 : vector<4x4xf32>
    %31 = vector.broadcast %4 : vector<4x1xi32> to vector<4x4xi32>
    %32 = vector.broadcast %7 : vector<1x4xi32> to vector<4x4xi32>
    %33 = arith.cmpi eq, %31, %32 : vector<4x4xi32>
    %34 = arith.extui %33 : vector<4x4xi1> to vector<4x4xi32>
    %35 = arith.sitofp %34 : vector<4x4xi32> to vector<4x4xf32>
    %36 = arith.mulf %30, %35 : vector<4x4xf32>
    %37 = arith.addf %28, %36 : vector<4x4xf32>
    %38 = arith.mulf %37, %12 : vector<4x4xf32>
    %cst_5 = arith.constant dense<0.000000e+00> : vector<4x4xf32>
    %39 = tpu.matmul %0, %0, %cst_5 {dimension_numbers = #tpu.dot_dimension_numbers<[1], [1], [0], [0], [0, 0, 1, 0], [], []>} : vector<4x16xf32>, vector<4x16xf32>, vector<4x4xf32> -> vector<4x4xf32>
    %cst_6 = arith.constant 1.000000e+01 : f32
    %40 = vector.broadcast %cst_6 : f32 to vector<4x4xf32>
    %41 = arith.mulf %39, %40 : vector<4x4xf32>
    %c0_7 = arith.constant 0 : index
    %c0_8 = arith.constant 0 : index
    %42 = vector.load %arg1[%c0_7, %c0_8] : memref<8x16xf32, #tpu.memory_space<vmem>>, vector<8x16xf32>
    %c0_9 = arith.constant 0 : index
    %c0_10 = arith.constant 0 : index
    %43 = vector.load %arg4[%c0_9, %c0_10] : memref<1x8xi32, #tpu.memory_space<vmem>>, vector<1x8xi32>
    %cst_11 = arith.constant dense<0.000000e+00> : vector<4x8xf32>
    %44 = tpu.matmul %0, %42, %cst_11 {dimension_numbers = #tpu.dot_dimension_numbers<[1], [1], [0], [0], [0, 0, 1, 0], [], []>} : vector<4x16xf32>, vector<8x16xf32>, vector<4x8xf32> -> vector<4x8xf32>
    %cst_12 = arith.constant 1.000000e+01 : f32
    %45 = vector.broadcast %cst_12 : f32 to vector<4x8xf32>
    %46 = arith.mulf %44, %45 : vector<4x8xf32>
    %cst_13 = arith.constant dense<0xFF800000> : vector<4xf32>
    %47 = vector.multi_reduction <maximumf>, %41, %cst_13 [1] : vector<4x4xf32> to vector<4xf32>
    %48 = vector.shape_cast %47 : vector<4xf32> to vector<4x1xf32>
    %cst_14 = arith.constant dense<0xFF800000> : vector<4xf32>
    %49 = vector.multi_reduction <maximumf>, %46, %cst_14 [1] : vector<4x8xf32> to vector<4xf32>
    %50 = vector.shape_cast %49 : vector<4xf32> to vector<4x1xf32>
    %51 = arith.maximumf %48, %50 : vector<4x1xf32>
    %52 = vector.broadcast %51 : vector<4x1xf32> to vector<4x4xf32>
    %53 = arith.subf %41, %52 : vector<4x4xf32>
    %54 = vector.broadcast %51 : vector<4x1xf32> to vector<4x8xf32>
    %55 = arith.subf %46, %54 : vector<4x8xf32>
    %56 = math.exp %53 : vector<4x4xf32>
    %57 = arith.mulf %56, %12 : vector<4x4xf32>
    %cst_15 = arith.constant dense<0.000000e+00> : vector<4xf32>
    %58 = vector.multi_reduction <add>, %57, %cst_15 [1] : vector<4x4xf32> to vector<4xf32>
    %59 = vector.shape_cast %58 : vector<4xf32> to vector<4x1xf32>
    %60 = math.exp %55 : vector<4x8xf32>
    %cst_16 = arith.constant dense<0.000000e+00> : vector<4xf32>
    %61 = vector.multi_reduction <add>, %60, %cst_16 [1] : vector<4x8xf32> to vector<4xf32>
    %62 = vector.shape_cast %61 : vector<4xf32> to vector<4x1xf32>
    %63 = arith.addf %59, %62 : vector<4x1xf32>
    %64 = vector.broadcast %3 : vector<4x1xi32> to vector<4x8xi32>
    %65 = vector.broadcast %43 : vector<1x8xi32> to vector<4x8xi32>
    %66 = arith.cmpi eq, %64, %65 : vector<4x8xi32>
    %67 = arith.extui %66 : vector<4x8xi1> to vector<4x8xi32>
    %68 = arith.sitofp %67 : vector<4x8xi32> to vector<4x8xf32>
    %69 = vector.broadcast %4 : vector<4x1xi32> to vector<4x8xi32>
    %70 = vector.broadcast %43 : vector<1x8xi32> to vector<4x8xi32>
    %71 = arith.cmpi eq, %69, %70 : vector<4x8xi32>
    %72 = arith.extui %71 : vector<4x8xi1> to vector<4x8xi32>
    %73 = arith.sitofp %72 : vector<4x8xi32> to vector<4x8xf32>
    %74 = arith.mulf %22, %53 : vector<4x4xf32>
    %cst_17 = arith.constant dense<0.000000e+00> : vector<4xf32>
    %75 = vector.multi_reduction <add>, %74, %cst_17 [1] : vector<4x4xf32> to vector<4xf32>
    %76 = vector.shape_cast %75 : vector<4xf32> to vector<4x1xf32>
    %77 = arith.mulf %68, %55 : vector<4x8xf32>
    %cst_18 = arith.constant dense<0.000000e+00> : vector<4xf32>
    %78 = vector.multi_reduction <add>, %77, %cst_18 [1] : vector<4x8xf32> to vector<4xf32>
    %79 = vector.shape_cast %78 : vector<4xf32> to vector<4x1xf32>
    %80 = arith.addf %76, %79 : vector<4x1xf32>
    %81 = arith.mulf %38, %53 : vector<4x4xf32>
    %cst_19 = arith.constant dense<0.000000e+00> : vector<4xf32>
    %82 = vector.multi_reduction <add>, %81, %cst_19 [1] : vector<4x4xf32> to vector<4xf32>
    %83 = vector.shape_cast %82 : vector<4xf32> to vector<4x1xf32>
    %84 = arith.mulf %73, %55 : vector<4x8xf32>
    %cst_20 = arith.constant dense<0.000000e+00> : vector<4xf32>
    %85 = vector.multi_reduction <add>, %84, %cst_20 [1] : vector<4x8xf32> to vector<4xf32>
    %86 = vector.shape_cast %85 : vector<4xf32> to vector<4x1xf32>
    %87 = arith.addf %83, %86 : vector<4x1xf32>
    %cst_21 = arith.constant dense<0.000000e+00> : vector<4xf32>
    %88 = vector.multi_reduction <add>, %22, %cst_21 [1] : vector<4x4xf32> to vector<4xf32>
    %89 = vector.shape_cast %88 : vector<4xf32> to vector<4x1xf32>
    %cst_22 = arith.constant dense<0.000000e+00> : vector<4xf32>
    %90 = vector.multi_reduction <add>, %68, %cst_22 [1] : vector<4x8xf32> to vector<4xf32>
    %91 = vector.shape_cast %90 : vector<4xf32> to vector<4x1xf32>
    %92 = arith.addf %89, %91 : vector<4x1xf32>
    %cst_23 = arith.constant dense<0.000000e+00> : vector<4xf32>
    %93 = vector.multi_reduction <add>, %38, %cst_23 [1] : vector<4x4xf32> to vector<4xf32>
    %94 = vector.shape_cast %93 : vector<4xf32> to vector<4x1xf32>
    %cst_24 = arith.constant dense<0.000000e+00> : vector<4xf32>
    %95 = vector.multi_reduction <add>, %73, %cst_24 [1] : vector<4x8xf32> to vector<4xf32>
    %96 = vector.shape_cast %95 : vector<4xf32> to vector<4x1xf32>
    %97 = arith.addf %94, %96 : vector<4x1xf32>
    %cst_25 = arith.constant 9.99999996E-13 : f32
    %98 = vector.broadcast %cst_25 : f32 to vector<4x1xf32>
    %99 = arith.addf %63, %98 : vector<4x1xf32>
    %100 = math.log %99 : vector<4x1xf32>
    %101 = arith.mulf %92, %100 : vector<4x1xf32>
    %102 = arith.subf %80, %101 : vector<4x1xf32>
    %cst_26 = arith.constant 9.99999996E-13 : f32
    %103 = vector.broadcast %cst_26 : f32 to vector<4x1xf32>
    %104 = arith.maximumf %92, %103 : vector<4x1xf32>
    %105 = tpu.reciprocal %104 {approx = true} : vector<4x1xf32> -> vector<4x1xf32>
    %106 = arith.mulf %102, %105 : vector<4x1xf32>
    %107 = arith.mulf %97, %100 : vector<4x1xf32>
    %108 = arith.subf %87, %107 : vector<4x1xf32>
    %cst_27 = arith.constant 9.99999996E-13 : f32
    %109 = vector.broadcast %cst_27 : f32 to vector<4x1xf32>
    %110 = arith.maximumf %97, %109 : vector<4x1xf32>
    %111 = tpu.reciprocal %110 {approx = true} : vector<4x1xf32> -> vector<4x1xf32>
    %112 = arith.mulf %108, %111 : vector<4x1xf32>
    %c0_28 = arith.constant 0 : index
    %113 = memref.load %arg5[%c0_28] : memref<2xf32, #tpu.memory_space<smem>>
    %c1 = arith.constant 1 : index
    %114 = memref.load %arg5[%c1] : memref<2xf32, #tpu.memory_space<smem>>
    %115 = tpu.iota {dimensions = array<i32: 0>} : vector<4x1xi32>
    %c2_i32_29 = arith.constant 2 : i32
    %116 = vector.broadcast %c2_i32_29 : i32 to vector<4x1xi32>
    %117 = arith.cmpi slt, %115, %116 : vector<4x1xi32>
    %118 = arith.extui %117 : vector<4x1xi1> to vector<4x1xi32>
    %119 = arith.sitofp %118 : vector<4x1xi32> to vector<4x1xf32>
    %120 = vector.broadcast %113 : f32 to vector<4x1xf32>
    %121 = arith.mulf %119, %120 : vector<4x1xf32>
    %cst_30 = arith.constant 1.000000e+00 : f32
    %122 = vector.broadcast %cst_30 : f32 to vector<4x1xf32>
    %123 = arith.subf %122, %119 : vector<4x1xf32>
    %124 = vector.broadcast %114 : f32 to vector<4x1xf32>
    %125 = arith.mulf %123, %124 : vector<4x1xf32>
    %126 = arith.addf %121, %125 : vector<4x1xf32>
    %cst_31 = arith.constant 0.000000e+00 : f32
    %127 = vector.broadcast %cst_31 : f32 to vector<4x1xf32>
    %128 = arith.subf %127, %126 : vector<4x1xf32>
    %129 = arith.mulf %128, %106 : vector<4x1xf32>
    %cst_32 = arith.constant 1.000000e+00 : f32
    %130 = vector.broadcast %cst_32 : f32 to vector<4x1xf32>
    %131 = arith.subf %130, %126 : vector<4x1xf32>
    %132 = arith.mulf %131, %112 : vector<4x1xf32>
    %133 = arith.subf %129, %132 : vector<4x1xf32>
    %cst_33 = arith.constant dense<0.000000e+00> : vector<1xf32>
    %134 = vector.multi_reduction <add>, %133, %cst_33 [0] : vector<4x1xf32> to vector<1xf32>
    %135 = vector.shape_cast %134 : vector<1xf32> to vector<1x1xf32>
    %cst_34 = arith.constant 2.500000e-01 : f32
    %136 = vector.broadcast %cst_34 : f32 to vector<1x1xf32>
    %137 = arith.mulf %135, %136 : vector<1x1xf32>
    %138 = tpu.iota {dimensions = array<i32: 1>} : vector<1x128xi32>
    %cst_35 = arith.constant 0.000000e+00 : f32
    %139 = vector.broadcast %cst_35 : f32 to vector<1x128xf32>
    %c0_i32 = arith.constant 0 : i32
    %140 = vector.broadcast %c0_i32 : i32 to vector<1x128xi32>
    %141 = arith.cmpi eq, %138, %140 : vector<1x128xi32>
    %cst_36 = arith.constant 0.000000e+00 : f32
    %142 = vector.shape_cast %137 : vector<1x1xf32> to vector<1x1xf32>
    %143 = vector.broadcast %142 : vector<1x1xf32> to vector<1x128xf32>
    %144 = vector.broadcast %cst_36 : f32 to vector<1x128xf32>
    %145 = arith.select %141, %143, %144 : vector<1x128xi1>, vector<1x128xf32>
    %146 = arith.addf %139, %145 : vector<1x128xf32>
    %c0_37 = arith.constant 0 : index
    %c0_38 = arith.constant 0 : index
    %147 = vector.load %arg6[%c0_37, %c0_38] : memref<1x128xf32, #tpu.memory_space<vmem>>, vector<1x128xf32>
    tpu.vector_store %arg6[%c0_37, %c0_38], %146 {strides = array<i32>} : memref<1x128xf32, #tpu.memory_space<vmem>>, vector<1x128xf32>,
    return
  }
}

</mosaic_0001>

<llo_original>
// kernel: tile.33
$region0: #{tile.33}
  #allocation0 [shape = 's32[1]{0}', space=sflag, size = 0x4, scoped, tag = 'scoped memory for tile.33']
  %s0 = inlined_call_operand.vmem [shape: s32[2], index: 0, kind: input, shape index: {}]
  %s1 = inlined_call_operand.vmem [shape: s32[4,2], index: 1, kind: output, shape index: {}]
  // Predicated region
  $region2: #{tile.33} parent=0 // pred_check
    _
  $region3: #{tile.33} parent=0 // pred_check_branch
    %3 = sbr.rel (0) target = $region5
  $region4: #{tile.33} parent=0 // pred_region
    _
  $region5: #{tile.33} parent=0 // pred_fallthru
    _
  %v4 = vld [vmem:[%s0] ss:$0 sm:$0xff]
  %5 = vst [vmem:[%s1] sm:$0xf] %v4

// kernel: tile.34
$region0: #{tile.34}
  %s0 = inlined_call_operand.vmem [shape: s32[4,2], index: 0, kind: input, shape index: {}]
  %s1 = inlined_call_operand.vmem [shape: s32[8], index: 1, kind: output, shape index: {}]
  $region1: #{tile.34} parent=0
    #allocation0 [shape = 'u8[4096]{0}', space=vmem, size = 0x1000, scoped, tag = 'scoped mem for output reshape']
    #allocation1 [shape = 'u8[4096]{0}', space=vmem, size = 0x1000, scoped, tag = 'scoped mem for input reshape']
    %s3 = sshllo.u32 0, 4
    %v4 = vld [vmem:[%s0] sm:%s3]
    %5 = vst [vmem:[#allocation1] sm:%s3] %v4
    %v6 = vld [vmem:[#allocation1] sm:$0x1]
    %vm7 = vcmask 15360
    %8 = vst.msk [vmem:[#allocation0] sm:$0x1] %vm7, %v6
    %s9 = scalar_lea.vmem [#allocation1], 3
    %v10 = vld [vmem:[%s9] sm:$0x1]
    %11 = vrot.lane.b32.xlu0 %v10, 6
    %v12 = vpop.permute.xlu0 %11
    %vm13 = vcmask 64560
    %14 = vst.msk [vmem:[#allocation0] sm:$0x1] %vm13, %v12
    %s15 = scalar_lea.vmem [#allocation1], 2
    %v16 = vld [vmem:[%s15] sm:$0x1]
    %17 = vrot.lane.b32.xlu0 %v16, 4
    %v18 = vpop.permute.xlu0 %17
    %vm19 = vcmask 48160
    %20 = vst.msk [vmem:[#allocation0] sm:$0x1] %vm19, %v18
    %s21 = scalar_lea.vmem [#allocation1], 1
    %v22 = vld [vmem:[%s21] sm:$0x1]
    %23 = vrot.lane.b32.xlu0 %v22, 2
    %v24 = vpop.permute.xlu0 %23
    %vm25 = vcmask 31760
    %26 = vst.msk [vmem:[#allocation0] sm:$0x1] %vm25, %v24
    %s28 = sshllo.u32 0, 1
    %v30 = vld [vmem:[#allocation0] sm:%s28]
    %s31 = sshllo.u32 0, 1
    %32 = vst [vmem:[%s1] sm:%s31] %v30

// kernel: hcrd_forward.74
$region0: #{hcrd_forward.74}
  #allocation0 [shape = 'u32[]', space=smem, size = 0x4, offset = 0x4, fixed_abs, tag = 'smem constant byte address 0x4 - core index']
  #allocation1 [shape = 'u32[144,128]{1,0:T(1,128)}', space=vmem, size = 0x12000, scoped, tag = 'internal scratch']
  %s0 = inlined_call_operand.vmem [shape: f32[8,4,64], index: 0, kind: input, shape index: {}]
  %s1 = inlined_call_operand.vmem [shape: s32[8,1], index: 1, kind: input, shape index: {}]
  %s2 = inlined_call_operand.vmem [shape: s32[1,8], index: 2, kind: input, shape index: {}]
  %s3 = inlined_call_operand.vmem [shape: f32[2,4,32], index: 3, kind: input, shape index: {}]
  %s4 = inlined_call_operand.vmem [shape: f32[2,1,32], index: 4, kind: input, shape index: {}]
  %s5 = inlined_call_operand.vmem [shape: f32[2,32,16], index: 5, kind: input, shape index: {}]
  %s6 = inlined_call_operand.vmem [shape: f32[2,1,16], index: 6, kind: input, shape index: {}]
  %s7 = inlined_call_operand.vmem [shape: f32[1,128], index: 7, kind: output, shape index: {}]
  %s8 = sld [smem:[#allocation0]]
  $region38: #{hcrd_forward.74} parent=0
    _
  %s10 = ssub.s32 1, %s8
  %s11 = scalar_select 0, %s10, %s8
  // Predicated region
  $region2: #{hcrd_forward.74} parent=0 // pred_check
    _
  $region3: #{hcrd_forward.74} parent=0 // pred_check_branch
    %13 = sbr.rel (0) target = $region5
  $region4: #{hcrd_forward.74} parent=0 // pred_region
    _
  $region5: #{hcrd_forward.74} parent=0 // pred_fallthru
    _
  // Predicated region
  $region6: #{hcrd_forward.74} parent=0 // pred_check
    _
  $region7: #{hcrd_forward.74} parent=0 // pred_check_branch
    %15 = sbr.rel (0) target = $region9
  $region8: #{hcrd_forward.74} parent=0 // pred_region
    _
  $region9: #{hcrd_forward.74} parent=0 // pred_fallthru
    _
  // Predicated region
  $region10: #{hcrd_forward.74} parent=0 // pred_check
    _
  $region11: #{hcrd_forward.74} parent=0 // pred_check_branch
    %17 = sbr.rel (0) target = $region13
  $region12: #{hcrd_forward.74} parent=0 // pred_region
    _
  $region13: #{hcrd_forward.74} parent=0 // pred_fallthru
    _
  // Predicated region
  $region14: #{hcrd_forward.74} parent=0 // pred_check
    _
  $region15: #{hcrd_forward.74} parent=0 // pred_check_branch
    %19 = sbr.rel (0) target = $region17
  $region16: #{hcrd_forward.74} parent=0 // pred_region
    _
  $region17: #{hcrd_forward.74} parent=0 // pred_fallthru
    _
  // Predicated region
  $region18: #{hcrd_forward.74} parent=0 // pred_check
    _
  $region19: #{hcrd_forward.74} parent=0 // pred_check_branch
    %21 = sbr.rel (0) target = $region21
  $region20: #{hcrd_forward.74} parent=0 // pred_region
    _
  $region21: #{hcrd_forward.74} parent=0 // pred_fallthru
    _
  // Predicated region
  $region22: #{hcrd_forward.74} parent=0 // pred_check
    _
  $region23: #{hcrd_forward.74} parent=0 // pred_check_branch
    %23 = sbr.rel (0) target = $region25
  $region24: #{hcrd_forward.74} parent=0 // pred_region
    _
  $region25: #{hcrd_forward.74} parent=0 // pred_fallthru
    _
  // Predicated region
  $region26: #{hcrd_forward.74} parent=0 // pred_check
    _
  $region27: #{hcrd_forward.74} parent=0 // pred_check_branch
    %25 = sbr.rel (0) target = $region29
  $region28: #{hcrd_forward.74} parent=0 // pred_region
    _
  $region29: #{hcrd_forward.74} parent=0 // pred_fallthru
    _
  %v26 = vld [vmem:[%s0] sm:$0xf]
  %v27 = vld [vmem:[%s0 + $0x4] sm:$0xf]
  %v28 = vld [vmem:[%s0 + $0x8] sm:$0xf]
  %v29 = vld [vmem:[%s0 + $0xc] sm:$0xf]
  %v30 = vld [vmem:[%s0 + $0x10] sm:$0xf]
  %v31 = vld [vmem:[%s0 + $0x14] sm:$0xf]
  %v32 = vld [vmem:[%s0 + $0x18] sm:$0xf]
  %v33 = vld [vmem:[%s0 + $0x1c] sm:$0xf]
  %vm34 = vcmask 519168
  %v35 = vsel %vm34, %v26, 0.0
  %36 = vadd.xlane.f32.xlu0 %v35
  %v37 = vpop.xlane.xlu0 %36
  %v38 = vsel %vm34, %v27, 0.0
  %39 = vadd.xlane.f32.xlu0 %v38
  %v40 = vpop.xlane.xlu0 %39
  %v41 = vsel %vm34, %v28, 0.0
  %42 = vadd.xlane.f32.xlu0 %v41
  %v43 = vpop.xlane.xlu0 %42
  %v44 = vsel %vm34, %v29, 0.0
  %45 = vadd.xlane.f32.xlu0 %v44
  %v46 = vpop.xlane.xlu0 %45
  %v47 = vsel %vm34, %v30, 0.0
  %48 = vadd.xlane.f32.xlu0 %v47
  %v49 = vpop.xlane.xlu0 %48
  %v50 = vsel %vm34, %v31, 0.0
  %51 = vadd.xlane.f32.xlu0 %v50
  %v52 = vpop.xlane.xlu0 %51
  %v53 = vsel %vm34, %v32, 0.0
  %54 = vadd.xlane.f32.xlu0 %v53
  %v55 = vpop.xlane.xlu0 %54
  %v56 = vsel %vm34, %v33, 0.0
  %57 = vadd.xlane.f32.xlu0 %v56
  %v58 = vpop.xlane.xlu0 %57
  %v59 = vrcp.pop 64.0
  %v60 = vmul.f32 %v37, %v59
  %v61 = vmul.f32 %v40, %v59
  %v62 = vmul.f32 %v43, %v59
  %v63 = vmul.f32 %v46, %v59
  %v64 = vmul.f32 %v49, %v59
  %v65 = vmul.f32 %v52, %v59
  %v66 = vmul.f32 %v55, %v59
  %v67 = vmul.f32 %v58, %v59
  %v68 = vld [vmem:[%s3] sm:$0xf]
  %v69 = vld [vmem:[%s4] sm:$0x1]
  %v71 = vlaneseq
  %v72 = vshrl.u32 %v71, 7
  %v73 = vsub.s32 0, %v72
  %v74 = vrot.slane %v69, %v73
  %v84 = vlaneseq
  %v85 = vand.u32 %v84, 127
  %v86 = vlaneseq
  %v87 = vshrl.u32 %v86, 7
  %v88 = vsub.s32 %v85, %v87
  %v89 = vrot.slane %v60, %v88
  %v90 = vlaneseq
  %v91 = vshrl.u32 %v90, 7
  %v92 = vsub.s32 %v85, %v91
  %v93 = vrot.slane %v61, %v92
  %v94 = vlaneseq
  %v95 = vshrl.u32 %v94, 7
  %v96 = vsub.s32 %v85, %v95
  %v97 = vrot.slane %v62, %v96
  %v98 = vlaneseq
  %v99 = vshrl.u32 %v98, 7
  %v100 = vsub.s32 %v85, %v99
  %v101 = vrot.slane %v63, %v100
  %v102 = vlaneseq
  %v103 = vshrl.u32 %v102, 7
  %v104 = vsub.s32 %v85, %v103
  %v105 = vrot.slane %v64, %v104
  %v106 = vlaneseq
  %v107 = vshrl.u32 %v106, 7
  %v108 = vsub.s32 %v85, %v107
  %v109 = vrot.slane %v65, %v108
  %v110 = vlaneseq
  %v111 = vshrl.u32 %v110, 7
  %v112 = vsub.s32 %v85, %v111
  %v113 = vrot.slane %v66, %v112
  %v114 = vlaneseq
  %v115 = vshrl.u32 %v114, 7
  %v116 = vsub.s32 %v85, %v115
  %v117 = vrot.slane %v67, %v116
  %vm118 = vcmask 1041409
  %v119 = vsel %vm118, %v93, %v89
  %vm120 = vcmask 1042434
  %v121 = vsel %vm120, %v97, %v119
  %vm122 = vcmask 1043459
  %v123 = vsel %vm122, %v101, %v121
  %vm124 = vcmask 1044484
  %v125 = vsel %vm124, %v105, %v123
  %vm126 = vcmask 1045509
  %v127 = vsel %vm126, %v109, %v125
  %vm128 = vcmask 1046534
  %v129 = vsel %vm128, %v113, %v127
  %vm130 = vcmask 1047559
  %v131 = vsel %vm130, %v117, %v129
  %vm132 = vcmask 31744
  %v133 = vsel %vm132, %v131, 0
  %vm135 = vcmask 1043456
  %v137 = vsel %vm135, %v68, 0
  %139 = vmatprep.subr.mxu0 0.0
  %140 = vmatpush1.msra.mxu0 %v137
  %141 = vmatprep.subr.mxu0 0.0
  %142 = vmatpush1.msra.mxu0 0.0
  %143 = vmatprep.subr.mxu0 0.0
  %144 = vmatpush1.msra.mxu0 0.0
  %145 = vmatprep.subr.mxu0 0.0
  %146 = vmatpush1.msra.mxu0 0.0
  %147 = vmatprep.subr.mxu0 0.0
  %148 = vmatpush1.msra.mxu0 0.0
  %149 = vmatprep.subr.mxu0 0.0
  %150 = vmatpush1.msra.mxu0 0.0
  %151 = vmatprep.subr.mxu0 0.0
  %152 = vmatpush1.msra.mxu0 0.0
  %153 = vmatprep.subr.mxu0 0.0
  %154 = vmatpush1.msra.mxu0 0.0
  %155 = vmatprep.subr.mxu0 0.0
  %156 = vmatpush1.msra.mxu0 0.0
  %157 = vmatprep.subr.mxu0 0.0
  %158 = vmatpush1.msra.mxu0 0.0
  %159 = vmatprep.subr.mxu0 0.0
  %160 = vmatpush1.msra.mxu0 0.0
  %161 = vmatprep.subr.mxu0 0.0
  %162 = vmatpush1.msra.mxu0 0.0
  %163 = vmatprep.subr.mxu0 0.0
  %164 = vmatpush1.msra.mxu0 0.0
  %165 = vmatprep.subr.mxu0 0.0
  %166 = vmatpush1.msra.mxu0 0.0
  %167 = vmatprep.subr.mxu0 0.0
  %168 = vmatpush1.msra.mxu0 0.0
  %169 = vmatprep.subr.mxu0 0.0
  %170 = vmatpush1.msra.mxu0 0.0
  %171 = vmatprep.subr.mxu0 0.0
  %172 = vmatpush1.msra.mxu0 0.0
  %173 = vmatprep.subr.mxu0 0.0
  %174 = vmatpush1.msra.mxu0 0.0
  %175 = vmatprep.subr.mxu0 0.0
  %176 = vmatpush1.msra.mxu0 0.0
  %177 = vmatprep.subr.mxu0 0.0
  %178 = vmatpush1.msra.mxu0 0.0
  %179 = vmatprep.subr.mxu0 0.0
  %180 = vmatpush1.msra.mxu0 0.0
  %181 = vmatprep.subr.mxu0 0.0
  %182 = vmatpush1.msra.mxu0 0.0
  %183 = vmatprep.subr.mxu0 0.0
  %184 = vmatpush1.msra.mxu0 0.0
  %185 = vmatprep.subr.mxu0 0.0
  %186 = vmatpush1.msra.mxu0 0.0
  %187 = vmatprep.subr.mxu0 0.0
  %188 = vmatpush1.msra.mxu0 0.0
  %189 = vmatprep.subr.mxu0 0.0
  %190 = vmatpush1.msra.mxu0 0.0
  %191 = vmatprep.subr.mxu0 0.0
  %192 = vmatpush1.msra.mxu0 0.0
  %193 = vmatprep.subr.mxu0 0.0
  %194 = vmatpush1.msra.mxu0 0.0
  %195 = vmatprep.subr.mxu0 0.0
  %196 = vmatpush1.msra.mxu0 0.0
  %197 = vmatprep.subr.mxu0 0.0
  %198 = vmatpush1.msra.mxu0 0.0
  %199 = vmatprep.subr.mxu0 0.0
  %200 = vmatpush1.msra.mxu0 0.0
  %201 = vmatprep.subr.mxu0 0.0
  %202 = vmatpush1.msra.mxu0 0.0
  %203 = vmatprep.mubr.f32.mxu0 0.0
  %204 = vmatmul.mubr.f32.gmra.mrb[0].mxu0 %v133
  %v205 = vpop.f32.mrb[0].mxu0
  %v206 = vadd.f32 %v74, %v205
  %v207 = vpop.f32.mrb[0].mxu0
  %208 = vdwg.mxu0
  %v209 = vmax.f32 %v206, 0.0
  %v210 = vld [vmem:[%s5] sm:$0xff]
  %v211 = vld [vmem:[%s5 + $0x8] sm:$0xff]
  %v212 = vld [vmem:[%s5 + $0x10] sm:$0xff]
  %v213 = vld [vmem:[%s5 + $0x18] sm:$0xff]
  %v214 = vld [vmem:[%s6] sm:$0x1]
  %v216 = vlaneseq
  %v217 = vshrl.u32 %v216, 7
  %v218 = vsub.s32 0, %v217
  %v219 = vrot.slane %v214, %v218
  %vm221 = vcmask 261120
  %v223 = vsel %vm221, %v209, 0
  %225 = vmatprep.subr.mxu0 0.0
  %226 = vmatpush1.msra.mxu0 %v210
  %227 = vmatprep.subr.mxu0 0.0
  %228 = vmatpush1.msra.mxu0 %v211
  %229 = vmatprep.subr.mxu0 0.0
  %230 = vmatpush1.msra.mxu0 %v212
  %231 = vmatprep.subr.mxu0 0.0
  %232 = vmatpush1.msra.mxu0 %v213
  %233 = vmatprep.subr.mxu0 0.0
  %234 = vmatpush1.msra.mxu0 0.0
  %235 = vmatprep.subr.mxu0 0.0
  %236 = vmatpush1.msra.mxu0 0.0
  %237 = vmatprep.subr.mxu0 0.0
  %238 = vmatpush1.msra.mxu0 0.0
  %239 = vmatprep.subr.mxu0 0.0
  %240 = vmatpush1.msra.mxu0 0.0
  %241 = vmatprep.subr.mxu0 0.0
  %242 = vmatpush1.msra.mxu0 0.0
  %243 = vmatprep.subr.mxu0 0.0
  %244 = vmatpush1.msra.mxu0 0.0
  %245 = vmatprep.subr.mxu0 0.0
  %246 = vmatpush1.msra.mxu0 0.0
  %247 = vmatprep.subr.mxu0 0.0
  %248 = vmatpush1.msra.mxu0 0.0
  %249 = vmatprep.subr.mxu0 0.0
  %250 = vmatpush1.msra.mxu0 0.0
  %251 = vmatprep.subr.mxu0 0.0
  %252 = vmatpush1.msra.mxu0 0.0
  %253 = vmatprep.subr.mxu0 0.0
  %254 = vmatpush1.msra.mxu0 0.0
  %255 = vmatprep.subr.mxu0 0.0
  %256 = vmatpush1.msra.mxu0 0.0
  %257 = vmatprep.subr.mxu0 0.0
  %258 = vmatpush1.msra.mxu0 0.0
  %259 = vmatprep.subr.mxu0 0.0
  %260 = vmatpush1.msra.mxu0 0.0
  %261 = vmatprep.subr.mxu0 0.0
  %262 = vmatpush1.msra.mxu0 0.0
  %263 = vmatprep.subr.mxu0 0.0
  %264 = vmatpush1.msra.mxu0 0.0
  %265 = vmatprep.subr.mxu0 0.0
  %266 = vmatpush1.msra.mxu0 0.0
  %267 = vmatprep.subr.mxu0 0.0
  %268 = vmatpush1.msra.mxu0 0.0
  %269 = vmatprep.subr.mxu0 0.0
  %270 = vmatpush1.msra.mxu0 0.0
  %271 = vmatprep.subr.mxu0 0.0
  %272 = vmatpush1.msra.mxu0 0.0
  %273 = vmatprep.subr.mxu0 0.0
  %274 = vmatpush1.msra.mxu0 0.0
  %275 = vmatprep.subr.mxu0 0.0
  %276 = vmatpush1.msra.mxu0 0.0
  %277 = vmatprep.subr.mxu0 0.0
  %278 = vmatpush1.msra.mxu0 0.0
  %279 = vmatprep.subr.mxu0 0.0
  %280 = vmatpush1.msra.mxu0 0.0
  %281 = vmatprep.subr.mxu0 0.0
  %282 = vmatpush1.msra.mxu0 0.0
  %283 = vmatprep.subr.mxu0 0.0
  %284 = vmatpush1.msra.mxu0 0.0
  %285 = vmatprep.subr.mxu0 0.0
  %286 = vmatpush1.msra.mxu0 0.0
  %287 = vmatprep.subr.mxu0 0.0
  %288 = vmatpush1.msra.mxu0 0.0
  %289 = vmatprep.mubr.f32.mxu0 0.0
  %290 = vmatmul.mubr.f32.gmra.mrb[0].mxu0 %v223
  %v291 = vpop.f32.mrb[0].mxu0
  %v292 = vadd.f32 %v219, %v291
  %v293 = vpop.f32.mrb[0].mxu0
  %294 = vdwg.mxu0
  %v295 = vmul.f32 %v292, %v292
  %vm296 = vcmask 130048
  %v297 = vsel %vm296, %v295, 0.0
  %298 = vadd.xlane.f32.xlu0 %v297
  %v299 = vpop.xlane.xlu0 %298
  %v300 = vadd.f32 %v299, 1e-24
  %v301 = vrsqrt.pop %v300
  %v302 = vmul.f32 %v292, %v301
  %s303 = scalar_lea.vmem %s3, 4
  %v304 = vld [vmem:[%s303] sm:$0xf]
  %s305 = scalar_lea.vmem %s4, 1
  %v306 = vld [vmem:[%s305] sm:$0x1]
  %v308 = vlaneseq
  %v309 = vshrl.u32 %v308, 7
  %v310 = vsub.s32 0, %v309
  %v311 = vrot.slane %v306, %v310
  %v314 = vsel %vm135, %v304, 0
  %316 = vmatprep.subr.mxu0 0.0
  %317 = vmatpush1.msra.mxu0 %v314
  %318 = vmatprep.subr.mxu0 0.0
  %319 = vmatpush1.msra.mxu0 0.0
  %320 = vmatprep.subr.mxu0 0.0
  %321 = vmatpush1.msra.mxu0 0.0
  %322 = vmatprep.subr.mxu0 0.0
  %323 = vmatpush1.msra.mxu0 0.0
  %324 = vmatprep.subr.mxu0 0.0
  %325 = vmatpush1.msra.mxu0 0.0
  %326 = vmatprep.subr.mxu0 0.0
  %327 = vmatpush1.msra.mxu0 0.0
  %328 = vmatprep.subr.mxu0 0.0
  %329 = vmatpush1.msra.mxu0 0.0
  %330 = vmatprep.subr.mxu0 0.0
  %331 = vmatpush1.msra.mxu0 0.0
  %332 = vmatprep.subr.mxu0 0.0
  %333 = vmatpush1.msra.mxu0 0.0
  %334 = vmatprep.subr.mxu0 0.0
  %335 = vmatpush1.msra.mxu0 0.0
  %336 = vmatprep.subr.mxu0 0.0
  %337 = vmatpush1.msra.mxu0 0.0
  %338 = vmatprep.subr.mxu0 0.0
  %339 = vmatpush1.msra.mxu0 0.0
  %340 = vmatprep.subr.mxu0 0.0
  %341 = vmatpush1.msra.mxu0 0.0
  %342 = vmatprep.subr.mxu0 0.0
  %343 = vmatpush1.msra.mxu0 0.0
  %344 = vmatprep.subr.mxu0 0.0
  %345 = vmatpush1.msra.mxu0 0.0
  %346 = vmatprep.subr.mxu0 0.0
  %347 = vmatpush1.msra.mxu0 0.0
  %348 = vmatprep.subr.mxu0 0.0
  %349 = vmatpush1.msra.mxu0 0.0
  %350 = vmatprep.subr.mxu0 0.0
  %351 = vmatpush1.msra.mxu0 0.0
  %352 = vmatprep.subr.mxu0 0.0
  %353 = vmatpush1.msra.mxu0 0.0
  %354 = vmatprep.subr.mxu0 0.0
  %355 = vmatpush1.msra.mxu0 0.0
  %356 = vmatprep.subr.mxu0 0.0
  %357 = vmatpush1.msra.mxu0 0.0
  %358 = vmatprep.subr.mxu0 0.0
  %359 = vmatpush1.msra.mxu0 0.0
  %360 = vmatprep.subr.mxu0 0.0
  %361 = vmatpush1.msra.mxu0 0.0
  %362 = vmatprep.subr.mxu0 0.0
  %363 = vmatpush1.msra.mxu0 0.0
  %364 = vmatprep.subr.mxu0 0.0
  %365 = vmatpush1.msra.mxu0 0.0
  %366 = vmatprep.subr.mxu0 0.0
  %367 = vmatpush1.msra.mxu0 0.0
  %368 = vmatprep.subr.mxu0 0.0
  %369 = vmatpush1.msra.mxu0 0.0
  %370 = vmatprep.subr.mxu0 0.0
  %371 = vmatpush1.msra.mxu0 0.0
  %372 = vmatprep.subr.mxu0 0.0
  %373 = vmatpush1.msra.mxu0 0.0
  %374 = vmatprep.subr.mxu0 0.0
  %375 = vmatpush1.msra.mxu0 0.0
  %376 = vmatprep.subr.mxu0 0.0
  %377 = vmatpush1.msra.mxu0 0.0
  %378 = vmatprep.subr.mxu0 0.0
  %379 = vmatpush1.msra.mxu0 0.0
  %380 = vmatprep.mubr.f32.mxu0 0.0
  %381 = vmatmul.mubr.f32.gmra.mrb[0].mxu0 %v133
  %v382 = vpop.f32.mrb[0].mxu0
  %v383 = vadd.f32 %v311, %v382
  %v384 = vpop.f32.mrb[0].mxu0
  %385 = vdwg.mxu0
  %v386 = vmax.f32 %v383, 0.0
  %s387 = scalar_lea.vmem %s5, 32
  %v388 = vld [vmem:[%s387] sm:$0xff]
  %v389 = vld [vmem:[%s387 + $0x8] sm:$0xff]
  %v390 = vld [vmem:[%s387 + $0x10] sm:$0xff]
  %v391 = vld [vmem:[%s387 + $0x18] sm:$0xff]
  %s392 = scalar_lea.vmem %s6, 1
  %v393 = vld [vmem:[%s392] sm:$0x1]
  %v395 = vlaneseq
  %v396 = vshrl.u32 %v395, 7
  %v397 = vsub.s32 0, %v396
  %v398 = vrot.slane %v393, %v397
  %v401 = vsel %vm221, %v386, 0
  %403 = vmatprep.subr.mxu0 0.0
  %404 = vmatpush1.msra.mxu0 %v388
  %405 = vmatprep.subr.mxu0 0.0
  %406 = vmatpush1.msra.mxu0 %v389
  %407 = vmatprep.subr.mxu0 0.0
  %408 = vmatpush1.msra.mxu0 %v390
  %409 = vmatprep.subr.mxu0 0.0
  %410 = vmatpush1.msra.mxu0 %v391
  %411 = vmatprep.subr.mxu0 0.0
  %412 = vmatpush1.msra.mxu0 0.0
  %413 = vmatprep.subr.mxu0 0.0
  %414 = vmatpush1.msra.mxu0 0.0
  %415 = vmatprep.subr.mxu0 0.0
  %416 = vmatpush1.msra.mxu0 0.0
  %417 = vmatprep.subr.mxu0 0.0
  %418 = vmatpush1.msra.mxu0 0.0
  %419 = vmatprep.subr.mxu0 0.0
  %420 = vmatpush1.msra.mxu0 0.0
  %421 = vmatprep.subr.mxu0 0.0
  %422 = vmatpush1.msra.mxu0 0.0
  %423 = vmatprep.subr.mxu0 0.0
  %424 = vmatpush1.msra.mxu0 0.0
  %425 = vmatprep.subr.mxu0 0.0
  %426 = vmatpush1.msra.mxu0 0.0
  %427 = vmatprep.subr.mxu0 0.0
  %428 = vmatpush1.msra.mxu0 0.0
  %429 = vmatprep.subr.mxu0 0.0
  %430 = vmatpush1.msra.mxu0 0.0
  %431 = vmatprep.subr.mxu0 0.0
  %432 = vmatpush1.msra.mxu0 0.0
  %433 = vmatprep.subr.mxu0 0.0
  %434 = vmatpush1.msra.mxu0 0.0
  %435 = vmatprep.subr.mxu0 0.0
  %436 = vmatpush1.msra.mxu0 0.0
  %437 = vmatprep.subr.mxu0 0.0
  %438 = vmatpush1.msra.mxu0 0.0
  %439 = vmatprep.subr.mxu0 0.0
  %440 = vmatpush1.msra.mxu0 0.0
  %441 = vmatprep.subr.mxu0 0.0
  %442 = vmatpush1.msra.mxu0 0.0
  %443 = vmatprep.subr.mxu0 0.0
  %444 = vmatpush1.msra.mxu0 0.0
  %445 = vmatprep.subr.mxu0 0.0
  %446 = vmatpush1.msra.mxu0 0.0
  %447 = vmatprep.subr.mxu0 0.0
  %448 = vmatpush1.msra.mxu0 0.0
  %449 = vmatprep.subr.mxu0 0.0
  %450 = vmatpush1.msra.mxu0 0.0
  %451 = vmatprep.subr.mxu0 0.0
  %452 = vmatpush1.msra.mxu0 0.0
  %453 = vmatprep.subr.mxu0 0.0
  %454 = vmatpush1.msra.mxu0 0.0
  %455 = vmatprep.subr.mxu0 0.0
  %456 = vmatpush1.msra.mxu0 0.0
  %457 = vmatprep.subr.mxu0 0.0
  %458 = vmatpush1.msra.mxu0 0.0
  %459 = vmatprep.subr.mxu0 0.0
  %460 = vmatpush1.msra.mxu0 0.0
  %461 = vmatprep.subr.mxu0 0.0
  %462 = vmatpush1.msra.mxu0 0.0
  %463 = vmatprep.subr.mxu0 0.0
  %464 = vmatpush1.msra.mxu0 0.0
  %465 = vmatprep.subr.mxu0 0.0
  %466 = vmatpush1.msra.mxu0 0.0
  %467 = vmatprep.mubr.f32.mxu0 0.0
  %468 = vmatmul.mubr.f32.gmra.mrb[0].mxu0 %v401
  %v469 = vpop.f32.mrb[0].mxu0
  %v470 = vadd.f32 %v398, %v469
  %v471 = vpop.f32.mrb[0].mxu0
  %472 = vdwg.mxu0
  %v473 = vmul.f32 %v470, %v470
  %v474 = vsel %vm296, %v473, 0.0
  %475 = vadd.xlane.f32.xlu0 %v474
  %v476 = vpop.xlane.xlu0 %475
  %v477 = vadd.f32 %v476, 1e-24
  %v478 = vrsqrt.pop %v477
  %v479 = vmul.f32 %v470, %v478
  %v480 = vlaneseq
  %v481 = vshrl.u32 %v480, 7
  %vm482 = vcmp.ne.s32.totalorder %v481, %v85
  %v483 = vsel %vm482, 1, 0
  %v484 = vcvt.s32.f32 %v483
  %v485 = vld [vmem:[%s1] sm:$0xff]
  %v486 = vld [vmem:[%s2] sm:$0x1]
  %487 = vset.pattern.permute.xlu0 0
  %488 = vperm.xlu0 %487, %v485
  %v489 = vpop.permute.xlu0 %488
  %v490 = vlaneseq
  %v491 = vshrl.u32 %v490, 7
  %v492 = vsub.s32 0, %v491
  %v493 = vrot.slane %v486, %v492
  %vm494 = vcmp.eq.s32.totalorder %v489, %v493
  %v495 = vsel %vm494, 1, 0
  %v496 = vcvt.s32.f32 %v495
  %v497 = vmul.f32 %v496, %v484
  %v499 = vsel %vm296, %v302, 0
  %501 = vmatprep.subr.mxu0 0.0
  %502 = vmatpush1.xpose.msra.mxu0 %v499
  %503 = vmatprep.subr.mxu0 0.0
  %504 = vmatpush1.xpose.msra.mxu0 0.0
  %505 = vmatprep.subr.mxu0 0.0
  %506 = vmatpush1.xpose.msra.mxu0 0.0
  %507 = vmatprep.subr.mxu0 0.0
  %508 = vmatpush1.xpose.msra.mxu0 0.0
  %509 = vmatprep.subr.mxu0 0.0
  %510 = vmatpush1.xpose.msra.mxu0 0.0
  %511 = vmatprep.subr.mxu0 0.0
  %512 = vmatpush1.xpose.msra.mxu0 0.0
  %513 = vmatprep.subr.mxu0 0.0
  %514 = vmatpush1.xpose.msra.mxu0 0.0
  %515 = vmatprep.subr.mxu0 0.0
  %516 = vmatpush1.xpose.msra.mxu0 0.0
  %517 = vmatprep.subr.mxu0 0.0
  %518 = vmatpush1.xpose.msra.mxu0 0.0
  %519 = vmatprep.subr.mxu0 0.0
  %520 = vmatpush1.xpose.msra.mxu0 0.0
  %521 = vmatprep.subr.mxu0 0.0
  %522 = vmatpush1.xpose.msra.mxu0 0.0
  %523 = vmatprep.subr.mxu0 0.0
  %524 = vmatpush1.xpose.msra.mxu0 0.0
  %525 = vmatprep.subr.mxu0 0.0
  %526 = vmatpush1.xpose.msra.mxu0 0.0
  %527 = vmatprep.subr.mxu0 0.0
  %528 = vmatpush1.xpose.msra.mxu0 0.0
  %529 = vmatprep.subr.mxu0 0.0
  %530 = vmatpush1.xpose.msra.mxu0 0.0
  %531 = vmatprep.subr.mxu0 0.0
  %532 = vmatpush1.xpose.msra.mxu0 0.0
  %533 = vmatprep.subr.mxu0 0.0
  %534 = vmatpush1.xpose.msra.mxu0 0.0
  %535 = vmatprep.subr.mxu0 0.0
  %536 = vmatpush1.xpose.msra.mxu0 0.0
  %537 = vmatprep.subr.mxu0 0.0
  %538 = vmatpush1.xpose.msra.mxu0 0.0
  %539 = vmatprep.subr.mxu0 0.0
  %540 = vmatpush1.xpose.msra.mxu0 0.0
  %541 = vmatprep.subr.mxu0 0.0
  %542 = vmatpush1.xpose.msra.mxu0 0.0
  %543 = vmatprep.subr.mxu0 0.0
  %544 = vmatpush1.xpose.msra.mxu0 0.0
  %545 = vmatprep.subr.mxu0 0.0
  %546 = vmatpush1.xpose.msra.mxu0 0.0
  %547 = vmatprep.subr.mxu0 0.0
  %548 = vmatpush1.xpose.msra.mxu0 0.0
  %549 = vmatprep.subr.mxu0 0.0
  %550 = vmatpush1.xpose.msra.mxu0 0.0
  %551 = vmatprep.subr.mxu0 0.0
  %552 = vmatpush1.xpose.msra.mxu0 0.0
  %553 = vmatprep.subr.mxu0 0.0
  %554 = vmatpush1.xpose.msra.mxu0 0.0
  %555 = vmatprep.subr.mxu0 0.0
  %556 = vmatpush1.xpose.msra.mxu0 0.0
  %557 = vmatprep.subr.mxu0 0.0
  %558 = vmatpush1.xpose.msra.mxu0 0.0
  %559 = vmatprep.subr.mxu0 0.0
  %560 = vmatpush1.xpose.msra.mxu0 0.0
  %561 = vmatprep.subr.mxu0 0.0
  %562 = vmatpush1.xpose.msra.mxu0 0.0
  %563 = vmatprep.subr.mxu0 0.0
  %564 = vmatpush1.xpose.msra.mxu0 0.0
  %565 = vmatprep.mubr.f32.mxu0 0.0
  %566 = vmatmul.mubr.f32.gmra.mrb[0].mxu0 %v499
  %v567 = vpop.f32.mrb[0].mxu0
  %v568 = vadd.f32 0.0, %v567
  %v569 = vpop.f32.mrb[0].mxu0
  %570 = vdwg.mxu0
  %v571 = vmul.f32 %v568, 10.0
  %vm572 = vcmask 64512
  %v573 = vsel %vm572, %v571, -inf
  %574 = vmax.xlane.f32.xlu0 %v573
  %v575 = vpop.xlane.xlu0 %574
  %v576 = vsub.f32 %v571, %v575
  %v577 = vmul.f32 %v576, 1.442695
  %v578 = vpow.pop %v577
  %v579 = vmul.f32 %v578, %v484
  %v580 = vsel %vm572, %v579, 0.0
  %581 = vadd.xlane.f32.xlu0 %v580
  %v582 = vpop.xlane.xlu0 %581
  %v583 = vadd.f32 %v582, 1e-12
  %v584 = vlog2.pop %v583
  %v585 = vmul.f32 %v584, 0.6931472
  %v586 = vsub.f32 %v576, %v585
  %v587 = vsel %vm572, %v497, 0.0
  %588 = vadd.xlane.f32.xlu0 %v587
  %v589 = vpop.xlane.xlu0 %588
  %v590 = vmul.f32 %v497, %v586
  %v591 = vsel %vm572, %v590, 0.0
  %592 = vadd.xlane.f32.xlu0 %v591
  %v593 = vpop.xlane.xlu0 %592
  %v594 = vmax.f32 %v589, 1e-12
  %v595 = vrcp.pop %v594
  %v596 = vmul.f32 %v593, %v595
  %v597 = vrot.slane %v596, 4
  %v598 = vadd.f32 %v596, %v597
  %v599 = vrot.slane %v598, 2
  %v600 = vadd.f32 %v598, %v599
  %v601 = vrot.slane %v600, 1
  %v602 = vadd.f32 %v600, %v601
  %v603 = vsub.f32 0.0, %v602
  %v604 = vmul.f32 %v603, 0.125
  %v605 = vsel %vm296, %v302, -inf
  %606 = vmax.xlane.f32.xlu0 %v605
  %v607 = vpop.xlane.xlu0 %606
  %v608 = vsub.f32 %v302, %v607
  %v609 = vmul.f32 %v608, 1.442695
  %v610 = vpow.pop %v609
  %v611 = vsel %vm296, %v610, 0.0
  %612 = vadd.xlane.f32.xlu0 %v611
  %v613 = vpop.xlane.xlu0 %612
  %v614 = vrcp.pop %v613
  %v615 = vmul.f32 %v610, %v614
  %v616 = vsel %vm296, %v479, -inf
  %617 = vmax.xlane.f32.xlu0 %v616
  %v618 = vpop.xlane.xlu0 %617
  %v619 = vsub.f32 %v479, %v618
  %v620 = vmul.f32 %v619, 1.442695
  %v621 = vpow.pop %v620
  %v622 = vsel %vm296, %v621, 0.0
  %623 = vadd.xlane.f32.xlu0 %v622
  %v624 = vpop.xlane.xlu0 %623
  %v625 = vrcp.pop %v624
  %v626 = vmul.f32 %v621, %v625
  %v627 = vsel %vm296, %v615, 0.0
  %628 = vadd.xlane.f32.xlu0 %v627
  %v629 = vpop.xlane.xlu0 %628
  %v630 = vrcp.pop 16.0
  %v631 = vmul.f32 %v629, %v630
  %v632 = vsub.f32 %v615, %v631
  %v633 = vsel %vm296, %v626, 0.0
  %634 = vadd.xlane.f32.xlu0 %v633
  %v635 = vpop.xlane.xlu0 %634
  %v636 = vmul.f32 %v635, %v630
  %v637 = vsub.f32 %v626, %v636
  %v638 = vmul.f32 %v632, %v637
  %v639 = vsel %vm296, %v638, 0.0
  %640 = vadd.xlane.f32.xlu0 %v639
  %v641 = vpop.xlane.xlu0 %640
  %v642 = vmul.f32 %v632, %v632
  %v643 = vsel %vm296, %v642, 0.0
  %644 = vadd.xlane.f32.xlu0 %v643
  %v645 = vpop.xlane.xlu0 %644
  %v646 = vmul.f32 %v637, %v637
  %v647 = vsel %vm296, %v646, 0.0
  %648 = vadd.xlane.f32.xlu0 %v647
  %v649 = vpop.xlane.xlu0 %648
  %v650 = vmul.f32 %v645, %v649
  %v651 = vadd.f32 %v650, 1e-08
  %v652 = vrsqrt.pop %v651
  %v653 = vmul.f32 %v641, %v652
  %v654 = vrot.slane %v653, 4
  %v655 = vadd.f32 %v653, %v654
  %v656 = vrot.slane %v655, 2
  %v657 = vadd.f32 %v655, %v656
  %v658 = vrot.slane %v657, 1
  %v659 = vadd.f32 %v657, %v658
  %v660 = vmul.f32 %v659, 0.125
  %v661 = vsub.f32 1.0, %v660
  %v662 = vrot.slane %v627, 4
  %v663 = vadd.f32 %v627, %v662
  %v664 = vrot.slane %v663, 2
  %v665 = vadd.f32 %v663, %v664
  %v666 = vrot.slane %v665, 1
  %v667 = vadd.f32 %v665, %v666
  %v668 = vrcp.pop 8.0
  %v669 = vmul.f32 %v667, %v668
  %v670 = vsub.f32 %v615, %v669
  %v671 = vrot.slane %v633, 4
  %v672 = vadd.f32 %v633, %v671
  %v673 = vrot.slane %v672, 2
  %v674 = vadd.f32 %v672, %v673
  %v675 = vrot.slane %v674, 1
  %v676 = vadd.f32 %v674, %v675
  %v677 = vmul.f32 %v676, %v668
  %v678 = vsub.f32 %v626, %v677
  %v679 = vmul.f32 %v670, %v678
  %v680 = vsel %vm296, %v679, 0.0
  %v681 = vrot.slane %v680, 4
  %v682 = vadd.f32 %v680, %v681
  %v683 = vrot.slane %v682, 2
  %v684 = vadd.f32 %v682, %v683
  %v685 = vrot.slane %v684, 1
  %v686 = vadd.f32 %v684, %v685
  %v687 = vmul.f32 %v670, %v670
  %v688 = vsel %vm296, %v687, 0.0
  %v689 = vrot.slane %v688, 4
  %v690 = vadd.f32 %v688, %v689
  %v691 = vrot.slane %v690, 2
  %v692 = vadd.f32 %v690, %v691
  %v693 = vrot.slane %v692, 1
  %v694 = vadd.f32 %v692, %v693
  %v695 = vmul.f32 %v678, %v678
  %v696 = vsel %vm296, %v695, 0.0
  %v697 = vrot.slane %v696, 4
  %v698 = vadd.f32 %v696, %v697
  %v699 = vrot.slane %v698, 2
  %v700 = vadd.f32 %v698, %v699
  %v701 = vrot.slane %v700, 1
  %v702 = vadd.f32 %v700, %v701
  %v703 = vmul.f32 %v694, %v702
  %v704 = vadd.f32 %v703, 1e-08
  %v705 = vrsqrt.pop %v704
  %v706 = vmul.f32 %v686, %v705
  %v707 = vsel %vm296, %v706, 0.0
  %708 = vadd.xlane.f32.xlu0 %v707
  %v709 = vpop.xlane.xlu0 %708
  %v710 = vmul.f32 %v709, 0.0625
  %v711 = vsub.f32 1.0, %v710
  %v712 = vadd.f32 %v661, %v711
  %vm713 = vcmp.eq.s32.totalorder %v85, 0
  %v714 = vsel %vm713, %v604, 0.0
  %v715 = vadd.f32 %v714, 0.0
  %vm716 = vcmp.eq.s32.totalorder %v85, 1
  %v717 = vsel %vm716, %v712, 0.0
  %v718 = vadd.f32 %v715, %v717
  %719 = vst [vmem:[%s7] sm:$0x1] %v718
  // Predicated region
  $region30: #{hcrd_forward.74} parent=0 // pred_check
    _
  $region31: #{hcrd_forward.74} parent=0 // pred_check_branch
    %721 = sbr.rel (0) target = $region33
  $region32: #{hcrd_forward.74} parent=0 // pred_region
    _
  $region33: #{hcrd_forward.74} parent=0 // pred_fallthru
    _
  // Predicated region
  $region34: #{hcrd_forward.74} parent=0 // pred_check
    _
  $region35: #{hcrd_forward.74} parent=0 // pred_check_branch
    %723 = sbr.rel (0) target = $region37
  $region36: #{hcrd_forward.74} parent=0 // pred_region
    _
  $region37: #{hcrd_forward.74} parent=0 // pred_fallthru
    _

// kernel: tile.38
$region0: #{tile.38}
  #allocation0 [shape = 's32[1]{0}', space=sflag, size = 0x4, scoped, tag = 'scoped memory for tile.38']
  %s0 = inlined_call_operand.vmem [shape: s32[2], index: 0, kind: input, shape index: {}]
  %s1 = inlined_call_operand.vmem [shape: s32[2,2], index: 1, kind: output, shape index: {}]
  // Predicated region
  $region2: #{tile.38} parent=0 // pred_check
    _
  $region3: #{tile.38} parent=0 // pred_check_branch
    %3 = sbr.rel (0) target = $region5
  $region4: #{tile.38} parent=0 // pred_region
    _
  $region5: #{tile.38} parent=0 // pred_fallthru
    _
  %v4 = vld [vmem:[%s0] ss:$0 sm:$0xff]
  %5 = vst [vmem:[%s1] sm:$0x3] %v4

// kernel: tile.0
$region0: #{tile.0}
  %s0 = inlined_call_operand.vmem [shape: s32[2,2], index: 0, kind: input, shape index: {}]
  %s1 = inlined_call_operand.vmem [shape: s32[4,1], index: 1, kind: output, shape index: {}]
  $region1: #{tile.0} parent=0
    #allocation0 [shape = 'u8[4096]{0}', space=vmem, size = 0x1000, scoped, tag = 'scoped mem for output reshape']
    #allocation1 [shape = 'u8[4096]{0}', space=vmem, size = 0x1000, scoped, tag = 'scoped mem for input reshape']
    %s3 = sshllo.u32 0, 2
    %v4 = vld [vmem:[%s0] sm:%s3]
    %5 = vst [vmem:[#allocation1] sm:%s3] %v4
    %v6 = vld [vmem:[#allocation1] sm:$0x3]
    %vm7 = vcmask 7168
    %8 = vst.msk [vmem:[#allocation0] ss:$2 sm:$0x3] %vm7, %v6
    %v9 = vld [vmem:[#allocation1] sm:$0x3]
    %10 = vrot.lane.b32.xlu0 %v9, 127
    %v11 = vpop.permute.xlu0 %10
    %vm12 = vcmask 7168
    %s13 = scalar_lea.vmem [#allocation0], 1
    %14 = vst.msk [vmem:[%s13] ss:$2 sm:$0x3] %vm12, %v11
    %s16 = sshllo.u32 0, 4
    %v18 = vld [vmem:[#allocation0] sm:%s16]
    %s19 = sshllo.u32 0, 4
    %20 = vst [vmem:[%s1] sm:%s19] %v18

// kernel: tile.54
$region0: #{tile.54}
  %s0 = inlined_call_operand.vmem [shape: s32[2,2], index: 0, kind: input, shape index: {}]
  %s1 = inlined_call_operand.vmem [shape: s32[1,4], index: 1, kind: output, shape index: {}]
  $region1: #{tile.54} parent=0
    #allocation0 [shape = 'u8[4096]{0}', space=vmem, size = 0x1000, scoped, tag = 'scoped mem for output reshape']
    #allocation1 [shape = 'u8[4096]{0}', space=vmem, size = 0x1000, scoped, tag = 'scoped mem for input reshape']
    %s3 = sshllo.u32 0, 2
    %v4 = vld [vmem:[%s0] sm:%s3]
    %5 = vst [vmem:[#allocation1] sm:%s3] %v4
    %v6 = vld [vmem:[#allocation1] sm:$0x1]
    %vm7 = vcmask 15360
    %8 = vst.msk [vmem:[#allocation0] sm:$0x1] %vm7, %v6
    %s9 = scalar_lea.vmem [#allocation1], 1
    %v10 = vld [vmem:[%s9] sm:$0x1]
    %11 = vrot.lane.b32.xlu0 %v10, 2
    %v12 = vpop.permute.xlu0 %11
    %vm13 = vcmask 31760
    %14 = vst.msk [vmem:[#allocation0] sm:$0x1] %vm13, %v12
    %s16 = sshllo.u32 0, 1
    %v18 = vld [vmem:[#allocation0] sm:%s16]
    %s19 = sshllo.u32 0, 1
    %20 = vst [vmem:[%s1] sm:%s19] %v18

// kernel: hcrd_forward.72
$region0: #{hcrd_forward.72}
  #allocation0 [shape = 'u32[]', space=smem, size = 0x4, offset = 0x4, fixed_abs, tag = 'smem constant byte address 0x4 - core index']
  #allocation1 [shape = 'u32[144,128]{1,0:T(1,128)}', space=vmem, size = 0x12000, scoped, tag = 'internal scratch']
  %s0 = inlined_call_operand.vmem [shape: f32[12,4,64], index: 0, kind: input, shape index: {}]
  %s1 = inlined_call_operand.vmem [shape: f32[2,4,32], index: 1, kind: input, shape index: {}]
  %s2 = inlined_call_operand.vmem [shape: f32[2,1,32], index: 2, kind: input, shape index: {}]
  %s3 = inlined_call_operand.vmem [shape: f32[2,32,36], index: 3, kind: input, shape index: {}]
  %s4 = inlined_call_operand.vmem [shape: f32[2,1,36], index: 4, kind: input, shape index: {}]
  %s5 = inlined_call_operand.vmem [shape: f32[12,36], index: 5, kind: output, shape index: {0}]
  %s6 = inlined_call_operand.vmem [shape: f32[12,36], index: 6, kind: output, shape index: {1}]
  %7 = xla_tuple %s5, %s6
  %s8 = sld [smem:[#allocation0]]
  $region38: #{hcrd_forward.72} parent=0
    _
  %s10 = ssub.s32 1, %s8
  %s11 = scalar_select 0, %s10, %s8
  // Predicated region
  $region2: #{hcrd_forward.72} parent=0 // pred_check
    _
  $region3: #{hcrd_forward.72} parent=0 // pred_check_branch
    %13 = sbr.rel (0) target = $region5
  $region4: #{hcrd_forward.72} parent=0 // pred_region
    _
  $region5: #{hcrd_forward.72} parent=0 // pred_fallthru
    _
  // Predicated region
  $region6: #{hcrd_forward.72} parent=0 // pred_check
    _
  $region7: #{hcrd_forward.72} parent=0 // pred_check_branch
    %15 = sbr.rel (0) target = $region9
  $region8: #{hcrd_forward.72} parent=0 // pred_region
    _
  $region9: #{hcrd_forward.72} parent=0 // pred_fallthru
    _
  // Predicated region
  $region10: #{hcrd_forward.72} parent=0 // pred_check
    _
  $region11: #{hcrd_forward.72} parent=0 // pred_check_branch
    %17 = sbr.rel (0) target = $region13
  $region12: #{hcrd_forward.72} parent=0 // pred_region
    _
  $region13: #{hcrd_forward.72} parent=0 // pred_fallthru
    _
  // Predicated region
  $region14: #{hcrd_forward.72} parent=0 // pred_check
    _
  $region15: #{hcrd_forward.72} parent=0 // pred_check_branch
    %19 = sbr.rel (0) target = $region17
  $region16: #{hcrd_forward.72} parent=0 // pred_region
    _
  $region17: #{hcrd_forward.72} parent=0 // pred_fallthru
    _
  // Predicated region
  $region18: #{hcrd_forward.72} parent=0 // pred_check
    _
  $region19: #{hcrd_forward.72} parent=0 // pred_check_branch
    %21 = sbr.rel (0) target = $region21
  $region20: #{hcrd_forward.72} parent=0 // pred_region
    _
  $region21: #{hcrd_forward.72} parent=0 // pred_fallthru
    _
  %v22 = vld [vmem:[%s0] sm:$0xf]
  %v23 = vld [vmem:[%s0 + $0x4] sm:$0xf]
  %v24 = vld [vmem:[%s0 + $0x8] sm:$0xf]
  %v25 = vld [vmem:[%s0 + $0xc] sm:$0xf]
  %v26 = vld [vmem:[%s0 + $0x10] sm:$0xf]
  %v27 = vld [vmem:[%s0 + $0x14] sm:$0xf]
  %v28 = vld [vmem:[%s0 + $0x18] sm:$0xf]
  %v29 = vld [vmem:[%s0 + $0x1c] sm:$0xf]
  %v30 = vld [vmem:[%s0 + $0x20] sm:$0xf]
  %v31 = vld [vmem:[%s0 + $0x24] sm:$0xf]
  %v32 = vld [vmem:[%s0 + $0x28] sm:$0xf]
  %v33 = vld [vmem:[%s0 + $0x2c] sm:$0xf]
  %vm34 = vcmask 519168
  %v35 = vsel %vm34, %v22, 0.0
  %36 = vadd.xlane.f32.xlu0 %v35
  %v37 = vpop.xlane.xlu0 %36
  %v38 = vsel %vm34, %v23, 0.0
  %39 = vadd.xlane.f32.xlu0 %v38
  %v40 = vpop.xlane.xlu0 %39
  %v41 = vsel %vm34, %v24, 0.0
  %42 = vadd.xlane.f32.xlu0 %v41
  %v43 = vpop.xlane.xlu0 %42
  %v44 = vsel %vm34, %v25, 0.0
  %45 = vadd.xlane.f32.xlu0 %v44
  %v46 = vpop.xlane.xlu0 %45
  %v47 = vsel %vm34, %v26, 0.0
  %48 = vadd.xlane.f32.xlu0 %v47
  %v49 = vpop.xlane.xlu0 %48
  %v50 = vsel %vm34, %v27, 0.0
  %51 = vadd.xlane.f32.xlu0 %v50
  %v52 = vpop.xlane.xlu0 %51
  %v53 = vsel %vm34, %v28, 0.0
  %54 = vadd.xlane.f32.xlu0 %v53
  %v55 = vpop.xlane.xlu0 %54
  %v56 = vsel %vm34, %v29, 0.0
  %57 = vadd.xlane.f32.xlu0 %v56
  %v58 = vpop.xlane.xlu0 %57
  %v59 = vsel %vm34, %v30, 0.0
  %60 = vadd.xlane.f32.xlu0 %v59
  %v61 = vpop.xlane.xlu0 %60
  %v62 = vsel %vm34, %v31, 0.0
  %63 = vadd.xlane.f32.xlu0 %v62
  %v64 = vpop.xlane.xlu0 %63
  %v65 = vsel %vm34, %v32, 0.0
  %66 = vadd.xlane.f32.xlu0 %v65
  %v67 = vpop.xlane.xlu0 %66
  %v68 = vsel %vm34, %v33, 0.0
  %69 = vadd.xlane.f32.xlu0 %v68
  %v70 = vpop.xlane.xlu0 %69
  %v71 = vrcp.pop 64.0
  %v72 = vmul.f32 %v37, %v71
  %v73 = vmul.f32 %v40, %v71
  %v74 = vmul.f32 %v43, %v71
  %v75 = vmul.f32 %v46, %v71
  %v76 = vmul.f32 %v49, %v71
  %v77 = vmul.f32 %v52, %v71
  %v78 = vmul.f32 %v55, %v71
  %v79 = vmul.f32 %v58, %v71
  %v80 = vmul.f32 %v61, %v71
  %v81 = vmul.f32 %v64, %v71
  %v82 = vmul.f32 %v67, %v71
  %v83 = vmul.f32 %v70, %v71
  %v84 = vld [vmem:[%s1] sm:$0xf]
  %v85 = vld [vmem:[%s2] sm:$0x1]
  %v87 = vlaneseq
  %v88 = vshrl.u32 %v87, 7
  %v89 = vsub.s32 0, %v88
  %v90 = vrot.slane %v85, %v89
  %v104 = vlaneseq
  %v105 = vand.u32 %v104, 127
  %v106 = vlaneseq
  %v107 = vshrl.u32 %v106, 7
  %v108 = vsub.s32 %v105, %v107
  %v109 = vrot.slane %v72, %v108
  %v110 = vlaneseq
  %v111 = vshrl.u32 %v110, 7
  %v112 = vsub.s32 %v105, %v111
  %v113 = vrot.slane %v73, %v112
  %v114 = vlaneseq
  %v115 = vshrl.u32 %v114, 7
  %v116 = vsub.s32 %v105, %v115
  %v117 = vrot.slane %v74, %v116
  %v118 = vlaneseq
  %v119 = vshrl.u32 %v118, 7
  %v120 = vsub.s32 %v105, %v119
  %v121 = vrot.slane %v75, %v120
  %v122 = vlaneseq
  %v123 = vshrl.u32 %v122, 7
  %v124 = vsub.s32 %v105, %v123
  %v125 = vrot.slane %v76, %v124
  %v126 = vlaneseq
  %v127 = vshrl.u32 %v126, 7
  %v128 = vsub.s32 %v105, %v127
  %v129 = vrot.slane %v77, %v128
  %v130 = vlaneseq
  %v131 = vshrl.u32 %v130, 7
  %v132 = vsub.s32 %v105, %v131
  %v133 = vrot.slane %v78, %v132
  %v134 = vlaneseq
  %v135 = vshrl.u32 %v134, 7
  %v136 = vsub.s32 %v105, %v135
  %v137 = vrot.slane %v79, %v136
  %v138 = vlaneseq
  %v139 = vshrl.u32 %v138, 7
  %v140 = vsub.s32 %v105, %v139
  %v141 = vrot.slane %v80, %v140
  %v142 = vlaneseq
  %v143 = vshrl.u32 %v142, 7
  %v144 = vsub.s32 %v105, %v143
  %v145 = vrot.slane %v81, %v144
  %v146 = vlaneseq
  %v147 = vshrl.u32 %v146, 7
  %v148 = vsub.s32 %v105, %v147
  %v149 = vrot.slane %v82, %v148
  %v150 = vlaneseq
  %v151 = vshrl.u32 %v150, 7
  %v152 = vsub.s32 %v105, %v151
  %v153 = vrot.slane %v83, %v152
  %vm154 = vcmask 1041409
  %v155 = vsel %vm154, %v113, %v109
  %vm156 = vcmask 1042434
  %v157 = vsel %vm156, %v117, %v155
  %vm158 = vcmask 1043459
  %v159 = vsel %vm158, %v121, %v157
  %vm160 = vcmask 1044484
  %v161 = vsel %vm160, %v125, %v159
  %vm162 = vcmask 1045509
  %v163 = vsel %vm162, %v129, %v161
  %vm164 = vcmask 1046534
  %v165 = vsel %vm164, %v133, %v163
  %vm166 = vcmask 1047559
  %v167 = vsel %vm166, %v137, %v165
  %v168 = vsel %vm154, %v145, %v141
  %v169 = vsel %vm156, %v149, %v168
  %v170 = vsel %vm158, %v153, %v169
  %vm171 = vcmask 31744
  %v172 = vsel %vm171, %v167, 0
  %v174 = vsel %vm171, %v170, 0
  %vm176 = vcmask 1043456
  %v178 = vsel %vm176, %v84, 0
  %180 = vmatprep.subr.mxu0 0.0
  %181 = vmatpush1.msra.mxu0 %v178
  %182 = vmatprep.subr.mxu0 0.0
  %183 = vmatpush1.msra.mxu0 0.0
  %184 = vmatprep.subr.mxu0 0.0
  %185 = vmatpush1.msra.mxu0 0.0
  %186 = vmatprep.subr.mxu0 0.0
  %187 = vmatpush1.msra.mxu0 0.0
  %188 = vmatprep.subr.mxu0 0.0
  %189 = vmatpush1.msra.mxu0 0.0
  %190 = vmatprep.subr.mxu0 0.0
  %191 = vmatpush1.msra.mxu0 0.0
  %192 = vmatprep.subr.mxu0 0.0
  %193 = vmatpush1.msra.mxu0 0.0
  %194 = vmatprep.subr.mxu0 0.0
  %195 = vmatpush1.msra.mxu0 0.0
  %196 = vmatprep.subr.mxu0 0.0
  %197 = vmatpush1.msra.mxu0 0.0
  %198 = vmatprep.subr.mxu0 0.0
  %199 = vmatpush1.msra.mxu0 0.0
  %200 = vmatprep.subr.mxu0 0.0
  %201 = vmatpush1.msra.mxu0 0.0
  %202 = vmatprep.subr.mxu0 0.0
  %203 = vmatpush1.msra.mxu0 0.0
  %204 = vmatprep.subr.mxu0 0.0
  %205 = vmatpush1.msra.mxu0 0.0
  %206 = vmatprep.subr.mxu0 0.0
  %207 = vmatpush1.msra.mxu0 0.0
  %208 = vmatprep.subr.mxu0 0.0
  %209 = vmatpush1.msra.mxu0 0.0
  %210 = vmatprep.subr.mxu0 0.0
  %211 = vmatpush1.msra.mxu0 0.0
  %212 = vmatprep.subr.mxu0 0.0
  %213 = vmatpush1.msra.mxu0 0.0
  %214 = vmatprep.subr.mxu0 0.0
  %215 = vmatpush1.msra.mxu0 0.0
  %216 = vmatprep.subr.mxu0 0.0
  %217 = vmatpush1.msra.mxu0 0.0
  %218 = vmatprep.subr.mxu0 0.0
  %219 = vmatpush1.msra.mxu0 0.0
  %220 = vmatprep.subr.mxu0 0.0
  %221 = vmatpush1.msra.mxu0 0.0
  %222 = vmatprep.subr.mxu0 0.0
  %223 = vmatpush1.msra.mxu0 0.0
  %224 = vmatprep.subr.mxu0 0.0
  %225 = vmatpush1.msra.mxu0 0.0
  %226 = vmatprep.subr.mxu0 0.0
  %227 = vmatpush1.msra.mxu0 0.0
  %228 = vmatprep.subr.mxu0 0.0
  %229 = vmatpush1.msra.mxu0 0.0
  %230 = vmatprep.subr.mxu0 0.0
  %231 = vmatpush1.msra.mxu0 0.0
  %232 = vmatprep.subr.mxu0 0.0
  %233 = vmatpush1.msra.mxu0 0.0
  %234 = vmatprep.subr.mxu0 0.0
  %235 = vmatpush1.msra.mxu0 0.0
  %236 = vmatprep.subr.mxu0 0.0
  %237 = vmatpush1.msra.mxu0 0.0
  %238 = vmatprep.subr.mxu0 0.0
  %239 = vmatpush1.msra.mxu0 0.0
  %240 = vmatprep.subr.mxu0 0.0
  %241 = vmatpush1.msra.mxu0 0.0
  %242 = vmatprep.subr.mxu0 0.0
  %243 = vmatpush1.msra.mxu0 0.0
  %244 = vmatprep.mubr.f32.mxu0 0.0
  %245 = vmatmul.mubr.f32.gmra.mrb[0].mxu0 %v172
  %v246 = vpop.f32.mrb[0].mxu0
  %v247 = vadd.f32 %v90, %v246
  %v248 = vpop.f32.mrb[0].mxu0
  %249 = vmatprep.mubr.f32.mxu0 0.0
  %250 = vmatmul.mubr.f32.gmra.mrb[0].mxu0 %v174
  %v251 = vpop.f32.mrb[0].mxu0
  %v252 = vadd.f32 %v90, %v251
  %v253 = vpop.f32.mrb[0].mxu0
  %254 = vdwg.mxu0
  %v255 = vmax.f32 %v247, 0.0
  %v256 = vmax.f32 %v252, 0.0
  %v257 = vld [vmem:[%s3] sm:$0xff]
  %v258 = vld [vmem:[%s3 + $0x8] sm:$0xff]
  %v259 = vld [vmem:[%s3 + $0x10] sm:$0xff]
  %v260 = vld [vmem:[%s3 + $0x18] sm:$0xff]
  %v261 = vld [vmem:[%s4] sm:$0x1]
  %v263 = vlaneseq
  %v264 = vshrl.u32 %v263, 7
  %v265 = vsub.s32 0, %v264
  %v266 = vrot.slane %v261, %v265
  %vm268 = vcmask 261120
  %v270 = vsel %vm268, %v255, 0
  %v273 = vsel %vm268, %v256, 0
  %275 = vmatprep.subr.mxu0 0.0
  %276 = vmatpush1.msra.mxu0 %v257
  %277 = vmatprep.subr.mxu0 0.0
  %278 = vmatpush1.msra.mxu0 %v258
  %279 = vmatprep.subr.mxu0 0.0
  %280 = vmatpush1.msra.mxu0 %v259
  %281 = vmatprep.subr.mxu0 0.0
  %282 = vmatpush1.msra.mxu0 %v260
  %283 = vmatprep.subr.mxu0 0.0
  %284 = vmatpush1.msra.mxu0 0.0
  %285 = vmatprep.subr.mxu0 0.0
  %286 = vmatpush1.msra.mxu0 0.0
  %287 = vmatprep.subr.mxu0 0.0
  %288 = vmatpush1.msra.mxu0 0.0
  %289 = vmatprep.subr.mxu0 0.0
  %290 = vmatpush1.msra.mxu0 0.0
  %291 = vmatprep.subr.mxu0 0.0
  %292 = vmatpush1.msra.mxu0 0.0
  %293 = vmatprep.subr.mxu0 0.0
  %294 = vmatpush1.msra.mxu0 0.0
  %295 = vmatprep.subr.mxu0 0.0
  %296 = vmatpush1.msra.mxu0 0.0
  %297 = vmatprep.subr.mxu0 0.0
  %298 = vmatpush1.msra.mxu0 0.0
  %299 = vmatprep.subr.mxu0 0.0
  %300 = vmatpush1.msra.mxu0 0.0
  %301 = vmatprep.subr.mxu0 0.0
  %302 = vmatpush1.msra.mxu0 0.0
  %303 = vmatprep.subr.mxu0 0.0
  %304 = vmatpush1.msra.mxu0 0.0
  %305 = vmatprep.subr.mxu0 0.0
  %306 = vmatpush1.msra.mxu0 0.0
  %307 = vmatprep.subr.mxu0 0.0
  %308 = vmatpush1.msra.mxu0 0.0
  %309 = vmatprep.subr.mxu0 0.0
  %310 = vmatpush1.msra.mxu0 0.0
  %311 = vmatprep.subr.mxu0 0.0
  %312 = vmatpush1.msra.mxu0 0.0
  %313 = vmatprep.subr.mxu0 0.0
  %314 = vmatpush1.msra.mxu0 0.0
  %315 = vmatprep.subr.mxu0 0.0
  %316 = vmatpush1.msra.mxu0 0.0
  %317 = vmatprep.subr.mxu0 0.0
  %318 = vmatpush1.msra.mxu0 0.0
  %319 = vmatprep.subr.mxu0 0.0
  %320 = vmatpush1.msra.mxu0 0.0
  %321 = vmatprep.subr.mxu0 0.0
  %322 = vmatpush1.msra.mxu0 0.0
  %323 = vmatprep.subr.mxu0 0.0
  %324 = vmatpush1.msra.mxu0 0.0
  %325 = vmatprep.subr.mxu0 0.0
  %326 = vmatpush1.msra.mxu0 0.0
  %327 = vmatprep.subr.mxu0 0.0
  %328 = vmatpush1.msra.mxu0 0.0
  %329 = vmatprep.subr.mxu0 0.0
  %330 = vmatpush1.msra.mxu0 0.0
  %331 = vmatprep.subr.mxu0 0.0
  %332 = vmatpush1.msra.mxu0 0.0
  %333 = vmatprep.subr.mxu0 0.0
  %334 = vmatpush1.msra.mxu0 0.0
  %335 = vmatprep.subr.mxu0 0.0
  %336 = vmatpush1.msra.mxu0 0.0
  %337 = vmatprep.subr.mxu0 0.0
  %338 = vmatpush1.msra.mxu0 0.0
  %339 = vmatprep.mubr.f32.mxu0 0.0
  %340 = vmatmul.mubr.f32.gmra.mrb[0].mxu0 %v270
  %v341 = vpop.f32.mrb[0].mxu0
  %v342 = vadd.f32 %v266, %v341
  %v343 = vpop.f32.mrb[0].mxu0
  %344 = vmatprep.mubr.f32.mxu0 0.0
  %345 = vmatmul.mubr.f32.gmra.mrb[0].mxu0 %v273
  %v346 = vpop.f32.mrb[0].mxu0
  %v347 = vadd.f32 %v266, %v346
  %v348 = vpop.f32.mrb[0].mxu0
  %349 = vdwg.mxu0
  %vm350 = vcmask 293888
  %351 = vst.msk [vmem:[%s5] sm:$0xff] %vm350, %v342
  %vm352 = vcmask 289792
  %353 = vst.msk [vmem:[%s5 + $0x8] sm:$0xf] %vm352, %v347
  %s354 = scalar_lea.vmem %s1, 4
  %v355 = vld [vmem:[%s354] sm:$0xf]
  %s356 = scalar_lea.vmem %s2, 1
  %v357 = vld [vmem:[%s356] sm:$0x1]
  %v359 = vlaneseq
  %v360 = vshrl.u32 %v359, 7
  %v361 = vsub.s32 0, %v360
  %v362 = vrot.slane %v357, %v361
  %v365 = vsel %vm176, %v355, 0
  %367 = vmatprep.subr.mxu0 0.0
  %368 = vmatpush1.msra.mxu0 %v365
  %369 = vmatprep.subr.mxu0 0.0
  %370 = vmatpush1.msra.mxu0 0.0
  %371 = vmatprep.subr.mxu0 0.0
  %372 = vmatpush1.msra.mxu0 0.0
  %373 = vmatprep.subr.mxu0 0.0
  %374 = vmatpush1.msra.mxu0 0.0
  %375 = vmatprep.subr.mxu0 0.0
  %376 = vmatpush1.msra.mxu0 0.0
  %377 = vmatprep.subr.mxu0 0.0
  %378 = vmatpush1.msra.mxu0 0.0
  %379 = vmatprep.subr.mxu0 0.0
  %380 = vmatpush1.msra.mxu0 0.0
  %381 = vmatprep.subr.mxu0 0.0
  %382 = vmatpush1.msra.mxu0 0.0
  %383 = vmatprep.subr.mxu0 0.0
  %384 = vmatpush1.msra.mxu0 0.0
  %385 = vmatprep.subr.mxu0 0.0
  %386 = vmatpush1.msra.mxu0 0.0
  %387 = vmatprep.subr.mxu0 0.0
  %388 = vmatpush1.msra.mxu0 0.0
  %389 = vmatprep.subr.mxu0 0.0
  %390 = vmatpush1.msra.mxu0 0.0
  %391 = vmatprep.subr.mxu0 0.0
  %392 = vmatpush1.msra.mxu0 0.0
  %393 = vmatprep.subr.mxu0 0.0
  %394 = vmatpush1.msra.mxu0 0.0
  %395 = vmatprep.subr.mxu0 0.0
  %396 = vmatpush1.msra.mxu0 0.0
  %397 = vmatprep.subr.mxu0 0.0
  %398 = vmatpush1.msra.mxu0 0.0
  %399 = vmatprep.subr.mxu0 0.0
  %400 = vmatpush1.msra.mxu0 0.0
  %401 = vmatprep.subr.mxu0 0.0
  %402 = vmatpush1.msra.mxu0 0.0
  %403 = vmatprep.subr.mxu0 0.0
  %404 = vmatpush1.msra.mxu0 0.0
  %405 = vmatprep.subr.mxu0 0.0
  %406 = vmatpush1.msra.mxu0 0.0
  %407 = vmatprep.subr.mxu0 0.0
  %408 = vmatpush1.msra.mxu0 0.0
  %409 = vmatprep.subr.mxu0 0.0
  %410 = vmatpush1.msra.mxu0 0.0
  %411 = vmatprep.subr.mxu0 0.0
  %412 = vmatpush1.msra.mxu0 0.0
  %413 = vmatprep.subr.mxu0 0.0
  %414 = vmatpush1.msra.mxu0 0.0
  %415 = vmatprep.subr.mxu0 0.0
  %416 = vmatpush1.msra.mxu0 0.0
  %417 = vmatprep.subr.mxu0 0.0
  %418 = vmatpush1.msra.mxu0 0.0
  %419 = vmatprep.subr.mxu0 0.0
  %420 = vmatpush1.msra.mxu0 0.0
  %421 = vmatprep.subr.mxu0 0.0
  %422 = vmatpush1.msra.mxu0 0.0
  %423 = vmatprep.subr.mxu0 0.0
  %424 = vmatpush1.msra.mxu0 0.0
  %425 = vmatprep.subr.mxu0 0.0
  %426 = vmatpush1.msra.mxu0 0.0
  %427 = vmatprep.subr.mxu0 0.0
  %428 = vmatpush1.msra.mxu0 0.0
  %429 = vmatprep.subr.mxu0 0.0
  %430 = vmatpush1.msra.mxu0 0.0
  %431 = vmatprep.mubr.f32.mxu0 0.0
  %432 = vmatmul.mubr.f32.gmra.mrb[0].mxu0 %v172
  %v433 = vpop.f32.mrb[0].mxu0
  %v434 = vadd.f32 %v362, %v433
  %v435 = vpop.f32.mrb[0].mxu0
  %436 = vmatprep.mubr.f32.mxu0 0.0
  %437 = vmatmul.mubr.f32.gmra.mrb[0].mxu0 %v174
  %v438 = vpop.f32.mrb[0].mxu0
  %v439 = vadd.f32 %v362, %v438
  %v440 = vpop.f32.mrb[0].mxu0
  %441 = vdwg.mxu0
  %v442 = vmax.f32 %v434, 0.0
  %v443 = vmax.f32 %v439, 0.0
  %s444 = scalar_lea.vmem %s3, 32
  %v445 = vld [vmem:[%s444] sm:$0xff]
  %v446 = vld [vmem:[%s444 + $0x8] sm:$0xff]
  %v447 = vld [vmem:[%s444 + $0x10] sm:$0xff]
  %v448 = vld [vmem:[%s444 + $0x18] sm:$0xff]
  %s449 = scalar_lea.vmem %s4, 1
  %v450 = vld [vmem:[%s449] sm:$0x1]
  %v452 = vlaneseq
  %v453 = vshrl.u32 %v452, 7
  %v454 = vsub.s32 0, %v453
  %v455 = vrot.slane %v450, %v454
  %v458 = vsel %vm268, %v442, 0
  %v461 = vsel %vm268, %v443, 0
  %463 = vmatprep.subr.mxu0 0.0
  %464 = vmatpush1.msra.mxu0 %v445
  %465 = vmatprep.subr.mxu0 0.0
  %466 = vmatpush1.msra.mxu0 %v446
  %467 = vmatprep.subr.mxu0 0.0
  %468 = vmatpush1.msra.mxu0 %v447
  %469 = vmatprep.subr.mxu0 0.0
  %470 = vmatpush1.msra.mxu0 %v448
  %471 = vmatprep.subr.mxu0 0.0
  %472 = vmatpush1.msra.mxu0 0.0
  %473 = vmatprep.subr.mxu0 0.0
  %474 = vmatpush1.msra.mxu0 0.0
  %475 = vmatprep.subr.mxu0 0.0
  %476 = vmatpush1.msra.mxu0 0.0
  %477 = vmatprep.subr.mxu0 0.0
  %478 = vmatpush1.msra.mxu0 0.0
  %479 = vmatprep.subr.mxu0 0.0
  %480 = vmatpush1.msra.mxu0 0.0
  %481 = vmatprep.subr.mxu0 0.0
  %482 = vmatpush1.msra.mxu0 0.0
  %483 = vmatprep.subr.mxu0 0.0
  %484 = vmatpush1.msra.mxu0 0.0
  %485 = vmatprep.subr.mxu0 0.0
  %486 = vmatpush1.msra.mxu0 0.0
  %487 = vmatprep.subr.mxu0 0.0
  %488 = vmatpush1.msra.mxu0 0.0
  %489 = vmatprep.subr.mxu0 0.0
  %490 = vmatpush1.msra.mxu0 0.0
  %491 = vmatprep.subr.mxu0 0.0
  %492 = vmatpush1.msra.mxu0 0.0
  %493 = vmatprep.subr.mxu0 0.0
  %494 = vmatpush1.msra.mxu0 0.0
  %495 = vmatprep.subr.mxu0 0.0
  %496 = vmatpush1.msra.mxu0 0.0
  %497 = vmatprep.subr.mxu0 0.0
  %498 = vmatpush1.msra.mxu0 0.0
  %499 = vmatprep.subr.mxu0 0.0
  %500 = vmatpush1.msra.mxu0 0.0
  %501 = vmatprep.subr.mxu0 0.0
  %502 = vmatpush1.msra.mxu0 0.0
  %503 = vmatprep.subr.mxu0 0.0
  %504 = vmatpush1.msra.mxu0 0.0
  %505 = vmatprep.subr.mxu0 0.0
  %506 = vmatpush1.msra.mxu0 0.0
  %507 = vmatprep.subr.mxu0 0.0
  %508 = vmatpush1.msra.mxu0 0.0
  %509 = vmatprep.subr.mxu0 0.0
  %510 = vmatpush1.msra.mxu0 0.0
  %511 = vmatprep.subr.mxu0 0.0
  %512 = vmatpush1.msra.mxu0 0.0
  %513 = vmatprep.subr.mxu0 0.0
  %514 = vmatpush1.msra.mxu0 0.0
  %515 = vmatprep.subr.mxu0 0.0
  %516 = vmatpush1.msra.mxu0 0.0
  %517 = vmatprep.subr.mxu0 0.0
  %518 = vmatpush1.msra.mxu0 0.0
  %519 = vmatprep.subr.mxu0 0.0
  %520 = vmatpush1.msra.mxu0 0.0
  %521 = vmatprep.subr.mxu0 0.0
  %522 = vmatpush1.msra.mxu0 0.0
  %523 = vmatprep.subr.mxu0 0.0
  %524 = vmatpush1.msra.mxu0 0.0
  %525 = vmatprep.subr.mxu0 0.0
  %526 = vmatpush1.msra.mxu0 0.0
  %527 = vmatprep.mubr.f32.mxu0 0.0
  %528 = vmatmul.mubr.f32.gmra.mrb[0].mxu0 %v458
  %v529 = vpop.f32.mrb[0].mxu0
  %v530 = vadd.f32 %v455, %v529
  %v531 = vpop.f32.mrb[0].mxu0
  %532 = vmatprep.mubr.f32.mxu0 0.0
  %533 = vmatmul.mubr.f32.gmra.mrb[0].mxu0 %v461
  %v534 = vpop.f32.mrb[0].mxu0
  %v535 = vadd.f32 %v455, %v534
  %v536 = vpop.f32.mrb[0].mxu0
  %537 = vdwg.mxu0
  %538 = vst.msk [vmem:[%s6] sm:$0xff] %vm350, %v530
  %539 = vst.msk [vmem:[%s6 + $0x8] sm:$0xf] %vm352, %v535
  // Predicated region
  $region22: #{hcrd_forward.72} parent=0 // pred_check
    _
  $region23: #{hcrd_forward.72} parent=0 // pred_check_branch
    %541 = sbr.rel (0) target = $region25
  $region24: #{hcrd_forward.72} parent=0 // pred_region
    _
  $region25: #{hcrd_forward.72} parent=0 // pred_fallthru
    _
  // Predicated region
  $region26: #{hcrd_forward.72} parent=0 // pred_check
    _
  $region27: #{hcrd_forward.72} parent=0 // pred_check_branch
    %543 = sbr.rel (0) target = $region29
  $region28: #{hcrd_forward.72} parent=0 // pred_region
    _
  $region29: #{hcrd_forward.72} parent=0 // pred_fallthru
    _
  // Predicated region
  $region30: #{hcrd_forward.72} parent=0 // pred_check
    _
  $region31: #{hcrd_forward.72} parent=0 // pred_check_branch
    %545 = sbr.rel (0) target = $region33
  $region32: #{hcrd_forward.72} parent=0 // pred_region
    _
  $region33: #{hcrd_forward.72} parent=0 // pred_fallthru
    _
  // Predicated region
  $region34: #{hcrd_forward.72} parent=0 // pred_check
    _
  $region35: #{hcrd_forward.72} parent=0 // pred_check_branch
    %547 = sbr.rel (0) target = $region37
  $region36: #{hcrd_forward.72} parent=0 // pred_region
    _
  $region37: #{hcrd_forward.72} parent=0 // pred_fallthru
    _

// kernel: tile.59
$region0: #{tile.59}
  %s0 = inlined_call_operand.vmem [shape: s32[4,2], index: 0, kind: input, shape index: {}]
  %s1 = inlined_call_operand.vmem [shape: s32[1,8], index: 1, kind: output, shape index: {}]
  $region1: #{tile.59} parent=0
    #allocation0 [shape = 'u8[4096]{0}', space=vmem, size = 0x1000, scoped, tag = 'scoped mem for output reshape']
    #allocation1 [shape = 'u8[4096]{0}', space=vmem, size = 0x1000, scoped, tag = 'scoped mem for input reshape']
    %s3 = sshllo.u32 0, 4
    %v4 = vld [vmem:[%s0] sm:%s3]
    %5 = vst [vmem:[#allocation1] sm:%s3] %v4
    %v6 = vld [vmem:[#allocation1] sm:$0x1]
    %vm7 = vcmask 15360
    %8 = vst.msk [vmem:[#allocation0] sm:$0x1] %vm7, %v6
    %s9 = scalar_lea.vmem [#allocation1], 3
    %v10 = vld [vmem:[%s9] sm:$0x1]
    %11 = vrot.lane.b32.xlu0 %v10, 6
    %v12 = vpop.permute.xlu0 %11
    %vm13 = vcmask 64560
    %14 = vst.msk [vmem:[#allocation0] sm:$0x1] %vm13, %v12
    %s15 = scalar_lea.vmem [#allocation1], 2
    %v16 = vld [vmem:[%s15] sm:$0x1]
    %17 = vrot.lane.b32.xlu0 %v16, 4
    %v18 = vpop.permute.xlu0 %17
    %vm19 = vcmask 48160
    %20 = vst.msk [vmem:[#allocation0] sm:$0x1] %vm19, %v18
    %s21 = scalar_lea.vmem [#allocation1], 1
    %v22 = vld [vmem:[%s21] sm:$0x1]
    %23 = vrot.lane.b32.xlu0 %v22, 2
    %v24 = vpop.permute.xlu0 %23
    %vm25 = vcmask 31760
    %26 = vst.msk [vmem:[#allocation0] sm:$0x1] %vm25, %v24
    %s28 = sshllo.u32 0, 1
    %v30 = vld [vmem:[#allocation0] sm:%s28]
    %s31 = sshllo.u32 0, 1
    %32 = vst [vmem:[%s1] sm:%s31] %v30

// kernel: hcrd_forward.75
$region0: #{hcrd_forward.75}
  #allocation0 [shape = 'u32[]', space=smem, size = 0x4, offset = 0x4, fixed_abs, tag = 'smem constant byte address 0x4 - core index']
  #allocation1 [shape = 'u32[144,128]{1,0:T(1,128)}', space=vmem, size = 0x12000, scoped, tag = 'internal scratch']
  %s0 = inlined_call_operand.vmem [shape: f32[4,16], index: 0, kind: input, shape index: {}]
  %s1 = inlined_call_operand.vmem [shape: f32[8,16], index: 1, kind: input, shape index: {}]
  %s2 = inlined_call_operand.vmem [shape: s32[4,2], index: 2, kind: input, shape index: {}]
  %s3 = inlined_call_operand.vmem [shape: s32[3,4], index: 3, kind: input, shape index: {}]
  %s4 = inlined_call_operand.vmem [shape: s32[1,8], index: 4, kind: input, shape index: {}]
  %s5 = inlined_call_operand.vmem [shape: f32[2], index: 5, kind: input, shape index: {}]
  %s6 = inlined_call_operand.vmem [shape: f32[1,128], index: 6, kind: output, shape index: {}]
  %s7 = sld [smem:[#allocation0]]
  $region38: #{hcrd_forward.75} parent=0
    _
  %s9 = ssub.s32 1, %s7
  %s10 = scalar_select 0, %s9, %s7
  $region1: #{hcrd_forward.75} parent=0
    #allocation2 [shape = 'u8[512]{0}', space=smem, size = 0x200, scoped, tag = 'input window, operand 5, single buffered']
    #allocation3 [shape = 's32[1]{0}', space=sflag, size = 0x4, scoped, tag = 'scoped memory for hcrd_forward.75']
    %11 = vsyncpa [#allocation3], 0
    // Predicated region
    $region2: #{hcrd_forward.75} parent=1 // pred_check
      _
    $region3: #{hcrd_forward.75} parent=1 // pred_check_branch
      %13 = sbr.rel (0) target = $region5
    $region4: #{hcrd_forward.75} parent=1 // pred_region
      _
    $region5: #{hcrd_forward.75} parent=1 // pred_fallthru
      _
    // Predicated region
    $region6: #{hcrd_forward.75} parent=1 // pred_check
      _
    $region7: #{hcrd_forward.75} parent=1 // pred_check_branch
      %15 = sbr.rel (0) target = $region9
    $region8: #{hcrd_forward.75} parent=1 // pred_region
      _
    $region9: #{hcrd_forward.75} parent=1 // pred_fallthru
      _
    // Predicated region
    $region10: #{hcrd_forward.75} parent=1 // pred_check
      _
    $region11: #{hcrd_forward.75} parent=1 // pred_check_branch
      %17 = sbr.rel (0) target = $region13
    $region12: #{hcrd_forward.75} parent=1 // pred_region
      _
    $region13: #{hcrd_forward.75} parent=1 // pred_fallthru
      _
    // Predicated region
    $region14: #{hcrd_forward.75} parent=1 // pred_check
      _
    $region15: #{hcrd_forward.75} parent=1 // pred_check_branch
      %19 = sbr.rel (0) target = $region17
    $region16: #{hcrd_forward.75} parent=1 // pred_region
      _
    $region17: #{hcrd_forward.75} parent=1 // pred_fallthru
      _
    // Predicated region
    $region18: #{hcrd_forward.75} parent=1 // pred_check
      _
    $region19: #{hcrd_forward.75} parent=1 // pred_check_branch
      %21 = sbr.rel (0) target = $region21
    $region20: #{hcrd_forward.75} parent=1 // pred_region
      _
    $region21: #{hcrd_forward.75} parent=1 // pred_fallthru
      _
    // Predicated region
    $region22: #{hcrd_forward.75} parent=1 // pred_check
      _
    $region23: #{hcrd_forward.75} parent=1 // pred_check_branch
      %23 = sbr.rel (0) target = $region25
    $region24: #{hcrd_forward.75} parent=1 // pred_region
      %s25 = ssub.s32 16, 16
      %26 = vsyncadd [#allocation3], %s25
      %s28 = sshll.u32 %s5, 4
      %s29 = int_to_ptr.vmem [resolvable:$true] %s28
      %31 = dma.vmem_to_smem %s29, 16, [#allocation2], [#allocation3]
    $region25: #{hcrd_forward.75} parent=1 // pred_fallthru
      _
    // Predicated region
    $region26: #{hcrd_forward.75} parent=1 // pred_check
      _
    $region27: #{hcrd_forward.75} parent=1 // pred_check_branch
      %33 = sbr.rel (0) target = $region29
    $region28: #{hcrd_forward.75} parent=1 // pred_region
      %34 = dma.done [#allocation3], 16
    $region29: #{hcrd_forward.75} parent=1 // pred_fallthru
      _
    %35 = sfence
    %v36 = vld [vmem:[%s0] sm:$0xf]
    %v37 = vld [vmem:[%s2] sm:$0xf]
    %v38 = vld [vmem:[%s3] sm:$0x7]
    %v39 = vlaneseq
    %v40 = vshrl.u32 %v39, 7
    %v41 = vlaneseq
    %v42 = vand.u32 %v41, 127
    %vm43 = vcmp.ne.s32.totalorder %v40, %v42
    %v44 = vsel %vm43, 1, 0
    %v45 = vcvt.s32.f32 %v44
    %vm46 = vcmp.lt.s32.totalorder %v40, 2
    %v47 = vsel %vm46, 1, 0
    %v48 = vcvt.s32.f32 %v47
    %49 = vset.pattern.permute.xlu0 0
    %50 = vperm.xlu0 %49, %v37
    %v51 = vpop.permute.xlu0 %50
    %v52 = vlaneseq
    %v53 = vshrl.u32 %v52, 7
    %v54 = vsub.s32 0, %v53
    %v55 = vrot.slane %v38, %v54
    %vm56 = vcmp.eq.s32.totalorder %v51, %v55
    %v57 = vsel %vm56, 1, 0
    %v58 = vcvt.s32.f32 %v57
    %v59 = vmul.f32 %v58, %v45
    %60 = vset.pattern.permute.xlu0 1
    %61 = vperm.xlu0 %60, %v37
    %v62 = vpop.permute.xlu0 %61
    %v63 = vlaneseq
    %v64 = vshrl.u32 %v63, 7
    %v65 = vsub.s32 1, %v64
    %v66 = vrot.slane %v38, %v65
    %vm67 = vcmp.eq.s32.totalorder %v62, %v66
    %v68 = vsel %vm67, 1, 0
    %v69 = vcvt.s32.f32 %v68
    %v70 = vmul.f32 %v48, %v69
    %v71 = vsub.f32 1.0, %v48
    %v72 = vlaneseq
    %v73 = vshrl.u32 %v72, 7
    %v74 = vsub.s32 2, %v73
    %v75 = vrot.slane %v38, %v74
    %vm76 = vcmp.eq.s32.totalorder %v62, %v75
    %v77 = vsel %vm76, 1, 0
    %v78 = vcvt.s32.f32 %v77
    %v79 = vmul.f32 %v71, %v78
    %v80 = vadd.f32 %v70, %v79
    %v81 = vmul.f32 %v80, %v45
    %vm82 = vcmask 130048
    %v84 = vsel %vm82, %v36, 0
    %86 = vmatprep.subr.mxu0 0.0
    %87 = vmatpush1.xpose.msra.mxu0 %v84
    %88 = vmatprep.subr.mxu0 0.0
    %89 = vmatpush1.xpose.msra.mxu0 0.0
    %90 = vmatprep.subr.mxu0 0.0
    %91 = vmatpush1.xpose.msra.mxu0 0.0
    %92 = vmatprep.subr.mxu0 0.0
    %93 = vmatpush1.xpose.msra.mxu0 0.0
    %94 = vmatprep.subr.mxu0 0.0
    %95 = vmatpush1.xpose.msra.mxu0 0.0
    %96 = vmatprep.subr.mxu0 0.0
    %97 = vmatpush1.xpose.msra.mxu0 0.0
    %98 = vmatprep.subr.mxu0 0.0
    %99 = vmatpush1.xpose.msra.mxu0 0.0
    %100 = vmatprep.subr.mxu0 0.0
    %101 = vmatpush1.xpose.msra.mxu0 0.0
    %102 = vmatprep.subr.mxu0 0.0
    %103 = vmatpush1.xpose.msra.mxu0 0.0
    %104 = vmatprep.subr.mxu0 0.0
    %105 = vmatpush1.xpose.msra.mxu0 0.0
    %106 = vmatprep.subr.mxu0 0.0
    %107 = vmatpush1.xpose.msra.mxu0 0.0
    %108 = vmatprep.subr.mxu0 0.0
    %109 = vmatpush1.xpose.msra.mxu0 0.0
    %110 = vmatprep.subr.mxu0 0.0
    %111 = vmatpush1.xpose.msra.mxu0 0.0
    %112 = vmatprep.subr.mxu0 0.0
    %113 = vmatpush1.xpose.msra.mxu0 0.0
    %114 = vmatprep.subr.mxu0 0.0
    %115 = vmatpush1.xpose.msra.mxu0 0.0
    %116 = vmatprep.subr.mxu0 0.0
    %117 = vmatpush1.xpose.msra.mxu0 0.0
    %118 = vmatprep.subr.mxu0 0.0
    %119 = vmatpush1.xpose.msra.mxu0 0.0
    %120 = vmatprep.subr.mxu0 0.0
    %121 = vmatpush1.xpose.msra.mxu0 0.0
    %122 = vmatprep.subr.mxu0 0.0
    %123 = vmatpush1.xpose.msra.mxu0 0.0
    %124 = vmatprep.subr.mxu0 0.0
    %125 = vmatpush1.xpose.msra.mxu0 0.0
    %126 = vmatprep.subr.mxu0 0.0
    %127 = vmatpush1.xpose.msra.mxu0 0.0
    %128 = vmatprep.subr.mxu0 0.0
    %129 = vmatpush1.xpose.msra.mxu0 0.0
    %130 = vmatprep.subr.mxu0 0.0
    %131 = vmatpush1.xpose.msra.mxu0 0.0
    %132 = vmatprep.subr.mxu0 0.0
    %133 = vmatpush1.xpose.msra.mxu0 0.0
    %134 = vmatprep.subr.mxu0 0.0
    %135 = vmatpush1.xpose.msra.mxu0 0.0
    %136 = vmatprep.subr.mxu0 0.0
    %137 = vmatpush1.xpose.msra.mxu0 0.0
    %138 = vmatprep.subr.mxu0 0.0
    %139 = vmatpush1.xpose.msra.mxu0 0.0
    %140 = vmatprep.subr.mxu0 0.0
    %141 = vmatpush1.xpose.msra.mxu0 0.0
    %142 = vmatprep.subr.mxu0 0.0
    %143 = vmatpush1.xpose.msra.mxu0 0.0
    %144 = vmatprep.subr.mxu0 0.0
    %145 = vmatpush1.xpose.msra.mxu0 0.0
    %146 = vmatprep.subr.mxu0 0.0
    %147 = vmatpush1.xpose.msra.mxu0 0.0
    %148 = vmatprep.subr.mxu0 0.0
    %149 = vmatpush1.xpose.msra.mxu0 0.0
    %150 = vmatprep.mubr.f32.mxu0 0.0
    %151 = vmatmul.mubr.f32.gmra.mrb[0].mxu0 %v84
    %v152 = vpop.f32.mrb[0].mxu0
    %v153 = vadd.f32 0.0, %v152
    %v154 = vpop.f32.mrb[0].mxu0
    %155 = vdwg.mxu0
    %v156 = vmul.f32 %v153, 10.0
    %v157 = vld [vmem:[%s1] sm:$0xff]
    %v158 = vld [vmem:[%s4] sm:$0x1]
    %v160 = vsel %vm82, %v157, 0
    %162 = vmatprep.subr.mxu0 0.0
    %163 = vmatpush1.xpose.msra.mxu0 %v160
    %164 = vmatprep.subr.mxu0 0.0
    %165 = vmatpush1.xpose.msra.mxu0 0.0
    %166 = vmatprep.subr.mxu0 0.0
    %167 = vmatpush1.xpose.msra.mxu0 0.0
    %168 = vmatprep.subr.mxu0 0.0
    %169 = vmatpush1.xpose.msra.mxu0 0.0
    %170 = vmatprep.subr.mxu0 0.0
    %171 = vmatpush1.xpose.msra.mxu0 0.0
    %172 = vmatprep.subr.mxu0 0.0
    %173 = vmatpush1.xpose.msra.mxu0 0.0
    %174 = vmatprep.subr.mxu0 0.0
    %175 = vmatpush1.xpose.msra.mxu0 0.0
    %176 = vmatprep.subr.mxu0 0.0
    %177 = vmatpush1.xpose.msra.mxu0 0.0
    %178 = vmatprep.subr.mxu0 0.0
    %179 = vmatpush1.xpose.msra.mxu0 0.0
    %180 = vmatprep.subr.mxu0 0.0
    %181 = vmatpush1.xpose.msra.mxu0 0.0
    %182 = vmatprep.subr.mxu0 0.0
    %183 = vmatpush1.xpose.msra.mxu0 0.0
    %184 = vmatprep.subr.mxu0 0.0
    %185 = vmatpush1.xpose.msra.mxu0 0.0
    %186 = vmatprep.subr.mxu0 0.0
    %187 = vmatpush1.xpose.msra.mxu0 0.0
    %188 = vmatprep.subr.mxu0 0.0
    %189 = vmatpush1.xpose.msra.mxu0 0.0
    %190 = vmatprep.subr.mxu0 0.0
    %191 = vmatpush1.xpose.msra.mxu0 0.0
    %192 = vmatprep.subr.mxu0 0.0
    %193 = vmatpush1.xpose.msra.mxu0 0.0
    %194 = vmatprep.subr.mxu0 0.0
    %195 = vmatpush1.xpose.msra.mxu0 0.0
    %196 = vmatprep.subr.mxu0 0.0
    %197 = vmatpush1.xpose.msra.mxu0 0.0
    %198 = vmatprep.subr.mxu0 0.0
    %199 = vmatpush1.xpose.msra.mxu0 0.0
    %200 = vmatprep.subr.mxu0 0.0
    %201 = vmatpush1.xpose.msra.mxu0 0.0
    %202 = vmatprep.subr.mxu0 0.0
    %203 = vmatpush1.xpose.msra.mxu0 0.0
    %204 = vmatprep.subr.mxu0 0.0
    %205 = vmatpush1.xpose.msra.mxu0 0.0
    %206 = vmatprep.subr.mxu0 0.0
    %207 = vmatpush1.xpose.msra.mxu0 0.0
    %208 = vmatprep.subr.mxu0 0.0
    %209 = vmatpush1.xpose.msra.mxu0 0.0
    %210 = vmatprep.subr.mxu0 0.0
    %211 = vmatpush1.xpose.msra.mxu0 0.0
    %212 = vmatprep.subr.mxu0 0.0
    %213 = vmatpush1.xpose.msra.mxu0 0.0
    %214 = vmatprep.subr.mxu0 0.0
    %215 = vmatpush1.xpose.msra.mxu0 0.0
    %216 = vmatprep.subr.mxu0 0.0
    %217 = vmatpush1.xpose.msra.mxu0 0.0
    %218 = vmatprep.subr.mxu0 0.0
    %219 = vmatpush1.xpose.msra.mxu0 0.0
    %220 = vmatprep.subr.mxu0 0.0
    %221 = vmatpush1.xpose.msra.mxu0 0.0
    %222 = vmatprep.subr.mxu0 0.0
    %223 = vmatpush1.xpose.msra.mxu0 0.0
    %224 = vmatprep.subr.mxu0 0.0
    %225 = vmatpush1.xpose.msra.mxu0 0.0
    %226 = vmatprep.mubr.f32.mxu0 0.0
    %227 = vmatmul.mubr.f32.gmra.mrb[0].mxu0 %v84
    %v228 = vpop.f32.mrb[0].mxu0
    %v229 = vadd.f32 0.0, %v228
    %v230 = vpop.f32.mrb[0].mxu0
    %231 = vdwg.mxu0
    %v232 = vmul.f32 %v229, 10.0
    %vm233 = vcmask 27648
    %v234 = vsel %vm233, %v156, -inf
    %235 = vmax.xlane.f32.xlu0 %v234
    %v236 = vpop.xlane.xlu0 %235
    %vm237 = vcmask 60416
    %v238 = vsel %vm237, %v232, -inf
    %239 = vmax.xlane.f32.xlu0 %v238
    %v240 = vpop.xlane.xlu0 %239
    %v241 = vmax.f32 %v236, %v240
    %v242 = vsub.f32 %v156, %v241
    %v243 = vsub.f32 %v232, %v241
    %v244 = vmul.f32 %v242, 1.442695
    %v245 = vpow.pop %v244
    %v246 = vmul.f32 %v245, %v45
    %v247 = vsel %vm233, %v246, 0.0
    %248 = vadd.xlane.f32.xlu0 %v247
    %v249 = vpop.xlane.xlu0 %248
    %v250 = vmul.f32 %v243, 1.442695
    %v251 = vpow.pop %v250
    %v252 = vsel %vm237, %v251, 0.0
    %253 = vadd.xlane.f32.xlu0 %v252
    %v254 = vpop.xlane.xlu0 %253
    %v255 = vadd.f32 %v249, %v254
    %v256 = vlaneseq
    %v257 = vshrl.u32 %v256, 7
    %v258 = vsub.s32 0, %v257
    %v259 = vrot.slane %v158, %v258
    %vm260 = vcmp.eq.s32.totalorder %v51, %v259
    %v261 = vsel %vm260, 1, 0
    %v262 = vcvt.s32.f32 %v261
    %vm263 = vcmp.eq.s32.totalorder %v62, %v259
    %v264 = vsel %vm263, 1, 0
    %v265 = vcvt.s32.f32 %v264
    %v266 = vmul.f32 %v59, %v242
    %v267 = vsel %vm233, %v266, 0.0
    %268 = vadd.xlane.f32.xlu0 %v267
    %v269 = vpop.xlane.xlu0 %268
    %v270 = vmul.f32 %v262, %v243
    %v271 = vsel %vm237, %v270, 0.0
    %272 = vadd.xlane.f32.xlu0 %v271
    %v273 = vpop.xlane.xlu0 %272
    %v274 = vadd.f32 %v269, %v273
    %v275 = vmul.f32 %v81, %v242
    %v276 = vsel %vm233, %v275, 0.0
    %277 = vadd.xlane.f32.xlu0 %v276
    %v278 = vpop.xlane.xlu0 %277
    %v279 = vmul.f32 %v265, %v243
    %v280 = vsel %vm237, %v279, 0.0
    %281 = vadd.xlane.f32.xlu0 %v280
    %v282 = vpop.xlane.xlu0 %281
    %v283 = vadd.f32 %v278, %v282
    %v284 = vsel %vm233, %v59, 0.0
    %285 = vadd.xlane.f32.xlu0 %v284
    %v286 = vpop.xlane.xlu0 %285
    %v287 = vsel %vm237, %v262, 0.0
    %288 = vadd.xlane.f32.xlu0 %v287
    %v289 = vpop.xlane.xlu0 %288
    %v290 = vadd.f32 %v286, %v289
    %v291 = vsel %vm233, %v81, 0.0
    %292 = vadd.xlane.f32.xlu0 %v291
    %v293 = vpop.xlane.xlu0 %292
    %v294 = vsel %vm237, %v265, 0.0
    %295 = vadd.xlane.f32.xlu0 %v294
    %v296 = vpop.xlane.xlu0 %295
    %v297 = vadd.f32 %v293, %v296
    %v298 = vadd.f32 %v255, 1e-12
    %v299 = vlog2.pop %v298
    %v300 = vmul.f32 %v299, 0.6931472
    %v301 = vmul.f32 %v290, %v300
    %v302 = vsub.f32 %v274, %v301
    %v303 = vmax.f32 %v290, 1e-12
    %v304 = vrcp.pop %v303
    %v305 = vmul.f32 %v302, %v304
    %v306 = vmul.f32 %v297, %v300
    %v307 = vsub.f32 %v283, %v306
    %v308 = vmax.f32 %v297, 1e-12
    %v309 = vrcp.pop %v308
    %v310 = vmul.f32 %v307, %v309
    %s311 = sld [smem:[#allocation2]]
    %s312 = sld [smem:[#allocation2 + $0x1]]
    %v313 = vstv %s311
    %v314 = vmul.f32 %v48, %v313
    %v315 = vstv %s312
    %v316 = vmul.f32 %v71, %v315
    %v317 = vadd.f32 %v314, %v316
    %v318 = vsub.f32 0.0, %v317
    %v319 = vmul.f32 %v318, %v305
    %v320 = vsub.f32 1.0, %v317
    %v321 = vmul.f32 %v320, %v310
    %v322 = vsub.f32 %v319, %v321
    %vm323 = vcmask 1043456
    %v324 = vsel %vm323, %v322, 0.0
    %v325 = vrot.slane %v324, 4
    %v326 = vadd.f32 %v324, %v325
    %v327 = vrot.slane %v326, 2
    %v328 = vadd.f32 %v326, %v327
    %v329 = vrot.slane %v328, 1
    %v330 = vadd.f32 %v328, %v329
    %v331 = vmul.f32 %v330, 0.25
    %vm332 = vcmp.eq.s32.totalorder %v42, 0
    %v333 = vsel %vm332, %v331, 0.0
    %v334 = vadd.f32 %v333, 0.0
    %335 = vst [vmem:[%s6] sm:$0x1] %v334
    // Predicated region
    $region30: #{hcrd_forward.75} parent=1 // pred_check
      _
    $region31: #{hcrd_forward.75} parent=1 // pred_check_branch
      %337 = sbr.rel (0) target = $region33
    $region32: #{hcrd_forward.75} parent=1 // pred_region
      _
    $region33: #{hcrd_forward.75} parent=1 // pred_fallthru
      _
    // Predicated region
    $region34: #{hcrd_forward.75} parent=1 // pred_check
      _
    $region35: #{hcrd_forward.75} parent=1 // pred_check_branch
      %339 = sbr.rel (0) target = $region37
    $region36: #{hcrd_forward.75} parent=1 // pred_region
      _
    $region37: #{hcrd_forward.75} parent=1 // pred_fallthru
      _
    %340 = vsyncpa [#allocation3], 1

// kernel: hcrd_forward.73
$region0: #{hcrd_forward.73}
  #allocation0 [shape = 'u32[]', space=smem, size = 0x4, offset = 0x4, fixed_abs, tag = 'smem constant byte address 0x4 - core index']
  #allocation1 [shape = 'u32[144,128]{1,0:T(1,128)}', space=vmem, size = 0x12000, scoped, tag = 'internal scratch']
  %s0 = inlined_call_operand.vmem [shape: f32[8,16], index: 0, kind: input, shape index: {}]
  %s1 = inlined_call_operand.vmem [shape: f32[8,16], index: 1, kind: input, shape index: {}]
  %s2 = inlined_call_operand.vmem [shape: f32[8,4], index: 2, kind: input, shape index: {}]
  %s3 = inlined_call_operand.vmem [shape: f32[8,4], index: 3, kind: input, shape index: {}]
  %s4 = inlined_call_operand.vmem [shape: f32[8,16], index: 4, kind: input, shape index: {}]
  %s5 = inlined_call_operand.vmem [shape: f32[8,16], index: 5, kind: input, shape index: {}]
  %s6 = inlined_call_operand.vmem [shape: f32[4,16], index: 6, kind: input, shape index: {}]
  %s7 = inlined_call_operand.vmem [shape: f32[4,16], index: 7, kind: input, shape index: {}]
  %s8 = inlined_call_operand.vmem [shape: f32[2,4], index: 8, kind: input, shape index: {}]
  %s9 = inlined_call_operand.vmem [shape: f32[2,4], index: 9, kind: input, shape index: {}]
  %s10 = inlined_call_operand.vmem [shape: s32[8,1], index: 10, kind: input, shape index: {}]
  %s11 = inlined_call_operand.vmem [shape: s32[1,8], index: 11, kind: input, shape index: {}]
  %s12 = inlined_call_operand.vmem [shape: s32[8,1], index: 12, kind: input, shape index: {}]
  %s13 = inlined_call_operand.vmem [shape: s32[2,1], index: 13, kind: input, shape index: {}]
  %s14 = inlined_call_operand.vmem [shape: f32[1,128], index: 14, kind: output, shape index: {}]
  %s15 = sld [smem:[#allocation0]]
  $region66: #{hcrd_forward.73} parent=0
    _
  %s17 = ssub.s32 1, %s15
  %s18 = scalar_select 0, %s17, %s15
  // Predicated region
  $region2: #{hcrd_forward.73} parent=0 // pred_check
    _
  $region3: #{hcrd_forward.73} parent=0 // pred_check_branch
    %20 = sbr.rel (0) target = $region5
  $region4: #{hcrd_forward.73} parent=0 // pred_region
    _
  $region5: #{hcrd_forward.73} parent=0 // pred_fallthru
    _
  // Predicated region
  $region6: #{hcrd_forward.73} parent=0 // pred_check
    _
  $region7: #{hcrd_forward.73} parent=0 // pred_check_branch
    %22 = sbr.rel (0) target = $region9
  $region8: #{hcrd_forward.73} parent=0 // pred_region
    _
  $region9: #{hcrd_forward.73} parent=0 // pred_fallthru
    _
  // Predicated region
  $region10: #{hcrd_forward.73} parent=0 // pred_check
    _
  $region11: #{hcrd_forward.73} parent=0 // pred_check_branch
    %24 = sbr.rel (0) target = $region13
  $region12: #{hcrd_forward.73} parent=0 // pred_region
    _
  $region13: #{hcrd_forward.73} parent=0 // pred_fallthru
    _
  // Predicated region
  $region14: #{hcrd_forward.73} parent=0 // pred_check
    _
  $region15: #{hcrd_forward.73} parent=0 // pred_check_branch
    %26 = sbr.rel (0) target = $region17
  $region16: #{hcrd_forward.73} parent=0 // pred_region
    _
  $region17: #{hcrd_forward.73} parent=0 // pred_fallthru
    _
  // Predicated region
  $region18: #{hcrd_forward.73} parent=0 // pred_check
    _
  $region19: #{hcrd_forward.73} parent=0 // pred_check_branch
    %28 = sbr.rel (0) target = $region21
  $region20: #{hcrd_forward.73} parent=0 // pred_region
    _
  $region21: #{hcrd_forward.73} parent=0 // pred_fallthru
    _
  // Predicated region
  $region22: #{hcrd_forward.73} parent=0 // pred_check
    _
  $region23: #{hcrd_forward.73} parent=0 // pred_check_branch
    %30 = sbr.rel (0) target = $region25
  $region24: #{hcrd_forward.73} parent=0 // pred_region
    _
  $region25: #{hcrd_forward.73} parent=0 // pred_fallthru
    _
  // Predicated region
  $region26: #{hcrd_forward.73} parent=0 // pred_check
    _
  $region27: #{hcrd_forward.73} parent=0 // pred_check_branch
    %32 = sbr.rel (0) target = $region29
  $region28: #{hcrd_forward.73} parent=0 // pred_region
    _
  $region29: #{hcrd_forward.73} parent=0 // pred_fallthru
    _
  // Predicated region
  $region30: #{hcrd_forward.73} parent=0 // pred_check
    _
  $region31: #{hcrd_forward.73} parent=0 // pred_check_branch
    %34 = sbr.rel (0) target = $region33
  $region32: #{hcrd_forward.73} parent=0 // pred_region
    _
  $region33: #{hcrd_forward.73} parent=0 // pred_fallthru
    _
  // Predicated region
  $region34: #{hcrd_forward.73} parent=0 // pred_check
    _
  $region35: #{hcrd_forward.73} parent=0 // pred_check_branch
    %36 = sbr.rel (0) target = $region37
  $region36: #{hcrd_forward.73} parent=0 // pred_region
    _
  $region37: #{hcrd_forward.73} parent=0 // pred_fallthru
    _
  // Predicated region
  $region38: #{hcrd_forward.73} parent=0 // pred_check
    _
  $region39: #{hcrd_forward.73} parent=0 // pred_check_branch
    %38 = sbr.rel (0) target = $region41
  $region40: #{hcrd_forward.73} parent=0 // pred_region
    _
  $region41: #{hcrd_forward.73} parent=0 // pred_fallthru
    _
  // Predicated region
  $region42: #{hcrd_forward.73} parent=0 // pred_check
    _
  $region43: #{hcrd_forward.73} parent=0 // pred_check_branch
    %40 = sbr.rel (0) target = $region45
  $region44: #{hcrd_forward.73} parent=0 // pred_region
    _
  $region45: #{hcrd_forward.73} parent=0 // pred_fallthru
    _
  // Predicated region
  $region46: #{hcrd_forward.73} parent=0 // pred_check
    _
  $region47: #{hcrd_forward.73} parent=0 // pred_check_branch
    %42 = sbr.rel (0) target = $region49
  $region48: #{hcrd_forward.73} parent=0 // pred_region
    _
  $region49: #{hcrd_forward.73} parent=0 // pred_fallthru
    _
  // Predicated region
  $region50: #{hcrd_forward.73} parent=0 // pred_check
    _
  $region51: #{hcrd_forward.73} parent=0 // pred_check_branch
    %44 = sbr.rel (0) target = $region53
  $region52: #{hcrd_forward.73} parent=0 // pred_region
    _
  $region53: #{hcrd_forward.73} parent=0 // pred_fallthru
    _
  // Predicated region
  $region54: #{hcrd_forward.73} parent=0 // pred_check
    _
  $region55: #{hcrd_forward.73} parent=0 // pred_check_branch
    %46 = sbr.rel (0) target = $region57
  $region56: #{hcrd_forward.73} parent=0 // pred_region
    _
  $region57: #{hcrd_forward.73} parent=0 // pred_fallthru
    _
  %v47 = vld [vmem:[%s0] sm:$0xff]
  %v48 = vlaneseq
  %v49 = vshrl.u32 %v48, 7
  %v50 = vlaneseq
  %v51 = vand.u32 %v50, 127
  %vm52 = vcmp.ne.s32.totalorder %v49, %v51
  %v53 = vsel %vm52, 1, 0
  %v54 = vcvt.s32.f32 %v53
  %v55 = vld [vmem:[%s10] sm:$0xff]
  %v56 = vld [vmem:[%s11] sm:$0x1]
  %57 = vset.pattern.permute.xlu0 0
  %58 = vperm.xlu0 %57, %v55
  %v59 = vpop.permute.xlu0 %58
  %v60 = vlaneseq
  %v61 = vshrl.u32 %v60, 7
  %v62 = vsub.s32 0, %v61
  %v63 = vrot.slane %v56, %v62
  %vm64 = vcmp.eq.s32.totalorder %v59, %v63
  %v65 = vsel %vm64, 1, 0
  %v66 = vcvt.s32.f32 %v65
  %v67 = vmul.f32 %v66, %v54
  %vm68 = vcmask 130048
  %v70 = vsel %vm68, %v47, 0
  %72 = vmatprep.subr.mxu0 0.0
  %73 = vmatpush1.xpose.msra.mxu0 %v70
  %74 = vmatprep.subr.mxu0 0.0
  %75 = vmatpush1.xpose.msra.mxu0 0.0
  %76 = vmatprep.subr.mxu0 0.0
  %77 = vmatpush1.xpose.msra.mxu0 0.0
  %78 = vmatprep.subr.mxu0 0.0
  %79 = vmatpush1.xpose.msra.mxu0 0.0
  %80 = vmatprep.subr.mxu0 0.0
  %81 = vmatpush1.xpose.msra.mxu0 0.0
  %82 = vmatprep.subr.mxu0 0.0
  %83 = vmatpush1.xpose.msra.mxu0 0.0
  %84 = vmatprep.subr.mxu0 0.0
  %85 = vmatpush1.xpose.msra.mxu0 0.0
  %86 = vmatprep.subr.mxu0 0.0
  %87 = vmatpush1.xpose.msra.mxu0 0.0
  %88 = vmatprep.subr.mxu0 0.0
  %89 = vmatpush1.xpose.msra.mxu0 0.0
  %90 = vmatprep.subr.mxu0 0.0
  %91 = vmatpush1.xpose.msra.mxu0 0.0
  %92 = vmatprep.subr.mxu0 0.0
  %93 = vmatpush1.xpose.msra.mxu0 0.0
  %94 = vmatprep.subr.mxu0 0.0
  %95 = vmatpush1.xpose.msra.mxu0 0.0
  %96 = vmatprep.subr.mxu0 0.0
  %97 = vmatpush1.xpose.msra.mxu0 0.0
  %98 = vmatprep.subr.mxu0 0.0
  %99 = vmatpush1.xpose.msra.mxu0 0.0
  %100 = vmatprep.subr.mxu0 0.0
  %101 = vmatpush1.xpose.msra.mxu0 0.0
  %102 = vmatprep.subr.mxu0 0.0
  %103 = vmatpush1.xpose.msra.mxu0 0.0
  %104 = vmatprep.subr.mxu0 0.0
  %105 = vmatpush1.xpose.msra.mxu0 0.0
  %106 = vmatprep.subr.mxu0 0.0
  %107 = vmatpush1.xpose.msra.mxu0 0.0
  %108 = vmatprep.subr.mxu0 0.0
  %109 = vmatpush1.xpose.msra.mxu0 0.0
  %110 = vmatprep.subr.mxu0 0.0
  %111 = vmatpush1.xpose.msra.mxu0 0.0
  %112 = vmatprep.subr.mxu0 0.0
  %113 = vmatpush1.xpose.msra.mxu0 0.0
  %114 = vmatprep.subr.mxu0 0.0
  %115 = vmatpush1.xpose.msra.mxu0 0.0
  %116 = vmatprep.subr.mxu0 0.0
  %117 = vmatpush1.xpose.msra.mxu0 0.0
  %118 = vmatprep.subr.mxu0 0.0
  %119 = vmatpush1.xpose.msra.mxu0 0.0
  %120 = vmatprep.subr.mxu0 0.0
  %121 = vmatpush1.xpose.msra.mxu0 0.0
  %122 = vmatprep.subr.mxu0 0.0
  %123 = vmatpush1.xpose.msra.mxu0 0.0
  %124 = vmatprep.subr.mxu0 0.0
  %125 = vmatpush1.xpose.msra.mxu0 0.0
  %126 = vmatprep.subr.mxu0 0.0
  %127 = vmatpush1.xpose.msra.mxu0 0.0
  %128 = vmatprep.subr.mxu0 0.0
  %129 = vmatpush1.xpose.msra.mxu0 0.0
  %130 = vmatprep.subr.mxu0 0.0
  %131 = vmatpush1.xpose.msra.mxu0 0.0
  %132 = vmatprep.subr.mxu0 0.0
  %133 = vmatpush1.xpose.msra.mxu0 0.0
  %134 = vmatprep.subr.mxu0 0.0
  %135 = vmatpush1.xpose.msra.mxu0 0.0
  %136 = vmatprep.mubr.f32.mxu0 0.0
  %137 = vmatmul.mubr.f32.gmra.mrb[0].mxu0 %v70
  %v138 = vpop.f32.mrb[0].mxu0
  %v139 = vadd.f32 0.0, %v138
  %v140 = vpop.f32.mrb[0].mxu0
  %141 = vdwg.mxu0
  %v142 = vmul.f32 %v139, 10.0
  %vm143 = vcmask 64512
  %v144 = vsel %vm143, %v142, -inf
  %145 = vmax.xlane.f32.xlu0 %v144
  %v146 = vpop.xlane.xlu0 %145
  %v147 = vsub.f32 %v142, %v146
  %v148 = vmul.f32 %v147, 1.442695
  %v149 = vpow.pop %v148
  %v150 = vmul.f32 %v149, %v54
  %v151 = vsel %vm143, %v150, 0.0
  %152 = vadd.xlane.f32.xlu0 %v151
  %v153 = vpop.xlane.xlu0 %152
  %v154 = vadd.f32 %v153, 1e-12
  %v155 = vlog2.pop %v154
  %v156 = vmul.f32 %v155, 0.6931472
  %v157 = vsub.f32 %v147, %v156
  %v158 = vsel %vm143, %v67, 0.0
  %159 = vadd.xlane.f32.xlu0 %v158
  %v160 = vpop.xlane.xlu0 %159
  %v161 = vmul.f32 %v67, %v157
  %v162 = vsel %vm143, %v161, 0.0
  %163 = vadd.xlane.f32.xlu0 %v162
  %v164 = vpop.xlane.xlu0 %163
  %v165 = vmax.f32 %v160, 1e-12
  %v166 = vrcp.pop %v165
  %v167 = vmul.f32 %v164, %v166
  %v168 = vrot.slane %v167, 4
  %v169 = vadd.f32 %v167, %v168
  %v170 = vrot.slane %v169, 2
  %v171 = vadd.f32 %v169, %v170
  %v172 = vrot.slane %v171, 1
  %v173 = vadd.f32 %v171, %v172
  %v174 = vsub.f32 0.0, %v173
  %v175 = vmul.f32 %v174, 0.125
  %v176 = vld [vmem:[%s1] sm:$0xff]
  %v177 = vsel %vm68, %v47, -inf
  %178 = vmax.xlane.f32.xlu0 %v177
  %v179 = vpop.xlane.xlu0 %178
  %v180 = vsub.f32 %v47, %v179
  %v181 = vmul.f32 %v180, 1.442695
  %v182 = vpow.pop %v181
  %v183 = vsel %vm68, %v182, 0.0
  %184 = vadd.xlane.f32.xlu0 %v183
  %v185 = vpop.xlane.xlu0 %184
  %v186 = vrcp.pop %v185
  %v187 = vmul.f32 %v182, %v186
  %v188 = vsel %vm68, %v176, -inf
  %189 = vmax.xlane.f32.xlu0 %v188
  %v190 = vpop.xlane.xlu0 %189
  %v191 = vsub.f32 %v176, %v190
  %v192 = vmul.f32 %v191, 1.442695
  %v193 = vpow.pop %v192
  %v194 = vsel %vm68, %v193, 0.0
  %195 = vadd.xlane.f32.xlu0 %v194
  %v196 = vpop.xlane.xlu0 %195
  %v197 = vrcp.pop %v196
  %v198 = vmul.f32 %v193, %v197
  %v199 = vsel %vm68, %v187, 0.0
  %200 = vadd.xlane.f32.xlu0 %v199
  %v201 = vpop.xlane.xlu0 %200
  %v202 = vrcp.pop 16.0
  %v203 = vmul.f32 %v201, %v202
  %v204 = vsub.f32 %v187, %v203
  %v205 = vsel %vm68, %v198, 0.0
  %206 = vadd.xlane.f32.xlu0 %v205
  %v207 = vpop.xlane.xlu0 %206
  %v208 = vmul.f32 %v207, %v202
  %v209 = vsub.f32 %v198, %v208
  %v210 = vmul.f32 %v204, %v209
  %v211 = vsel %vm68, %v210, 0.0
  %212 = vadd.xlane.f32.xlu0 %v211
  %v213 = vpop.xlane.xlu0 %212
  %v214 = vmul.f32 %v204, %v204
  %v215 = vsel %vm68, %v214, 0.0
  %216 = vadd.xlane.f32.xlu0 %v215
  %v217 = vpop.xlane.xlu0 %216
  %v218 = vmul.f32 %v209, %v209
  %v219 = vsel %vm68, %v218, 0.0
  %220 = vadd.xlane.f32.xlu0 %v219
  %v221 = vpop.xlane.xlu0 %220
  %v222 = vmul.f32 %v217, %v221
  %v223 = vadd.f32 %v222, 1e-08
  %v224 = vrsqrt.pop %v223
  %v225 = vmul.f32 %v213, %v224
  %v226 = vrot.slane %v225, 4
  %v227 = vadd.f32 %v225, %v226
  %v228 = vrot.slane %v227, 2
  %v229 = vadd.f32 %v227, %v228
  %v230 = vrot.slane %v229, 1
  %v231 = vadd.f32 %v229, %v230
  %v232 = vmul.f32 %v231, 0.125
  %v233 = vsub.f32 1.0, %v232
  %v234 = vrot.slane %v199, 4
  %v235 = vadd.f32 %v199, %v234
  %v236 = vrot.slane %v235, 2
  %v237 = vadd.f32 %v235, %v236
  %v238 = vrot.slane %v237, 1
  %v239 = vadd.f32 %v237, %v238
  %v240 = vrcp.pop 8.0
  %v241 = vmul.f32 %v239, %v240
  %v242 = vsub.f32 %v187, %v241
  %v243 = vrot.slane %v205, 4
  %v244 = vadd.f32 %v205, %v243
  %v245 = vrot.slane %v244, 2
  %v246 = vadd.f32 %v244, %v245
  %v247 = vrot.slane %v246, 1
  %v248 = vadd.f32 %v246, %v247
  %v249 = vmul.f32 %v248, %v240
  %v250 = vsub.f32 %v198, %v249
  %v251 = vmul.f32 %v242, %v250
  %v252 = vsel %vm68, %v251, 0.0
  %v253 = vrot.slane %v252, 4
  %v254 = vadd.f32 %v252, %v253
  %v255 = vrot.slane %v254, 2
  %v256 = vadd.f32 %v254, %v255
  %v257 = vrot.slane %v256, 1
  %v258 = vadd.f32 %v256, %v257
  %v259 = vmul.f32 %v242, %v242
  %v260 = vsel %vm68, %v259, 0.0
  %v261 = vrot.slane %v260, 4
  %v262 = vadd.f32 %v260, %v261
  %v263 = vrot.slane %v262, 2
  %v264 = vadd.f32 %v262, %v263
  %v265 = vrot.slane %v264, 1
  %v266 = vadd.f32 %v264, %v265
  %v267 = vmul.f32 %v250, %v250
  %v268 = vsel %vm68, %v267, 0.0
  %v269 = vrot.slane %v268, 4
  %v270 = vadd.f32 %v268, %v269
  %v271 = vrot.slane %v270, 2
  %v272 = vadd.f32 %v270, %v271
  %v273 = vrot.slane %v272, 1
  %v274 = vadd.f32 %v272, %v273
  %v275 = vmul.f32 %v266, %v274
  %v276 = vadd.f32 %v275, 1e-08
  %v277 = vrsqrt.pop %v276
  %v278 = vmul.f32 %v258, %v277
  %v279 = vsel %vm68, %v278, 0.0
  %280 = vadd.xlane.f32.xlu0 %v279
  %v281 = vpop.xlane.xlu0 %280
  %v282 = vmul.f32 %v281, 0.0625
  %v283 = vsub.f32 1.0, %v282
  %v284 = vadd.f32 %v233, %v283
  %v285 = vld [vmem:[%s2] sm:$0xff]
  %v286 = vld [vmem:[%s3] sm:$0xff]
  %v287 = vmul.f32 %v285, %v285
  %vm288 = vcmask 31744
  %v289 = vsel %vm288, %v287, 0.0
  %290 = vadd.xlane.f32.xlu0 %v289
  %v291 = vpop.xlane.xlu0 %290
  %v292 = vadd.f32 %v291, 1e-24
  %v293 = vrsqrt.pop %v292
  %v294 = vmul.f32 %v285, %v293
  %v295 = vmul.f32 %v286, %v286
  %v296 = vsel %vm288, %v295, 0.0
  %297 = vadd.xlane.f32.xlu0 %v296
  %v298 = vpop.xlane.xlu0 %297
  %v299 = vadd.f32 %v298, 1e-24
  %v300 = vrsqrt.pop %v299
  %v301 = vmul.f32 %v286, %v300
  %v302 = vsel %vm288, %v294, -inf
  %303 = vmax.xlane.f32.xlu0 %v302
  %v304 = vpop.xlane.xlu0 %303
  %v305 = vsub.f32 %v294, %v304
  %v306 = vmul.f32 %v305, 1.442695
  %v307 = vpow.pop %v306
  %v308 = vsel %vm288, %v307, 0.0
  %309 = vadd.xlane.f32.xlu0 %v308
  %v310 = vpop.xlane.xlu0 %309
  %v311 = vlog2.pop %v310
  %v312 = vmul.f32 %v311, 0.6931472
  %v313 = vsub.f32 %v305, %v312
  %v314 = vsel %vm288, %v301, -inf
  %315 = vmax.xlane.f32.xlu0 %v314
  %v316 = vpop.xlane.xlu0 %315
  %v317 = vsub.f32 %v301, %v316
  %v318 = vmul.f32 %v317, 1.442695
  %v319 = vpow.pop %v318
  %v320 = vsel %vm288, %v319, 0.0
  %321 = vadd.xlane.f32.xlu0 %v320
  %v322 = vpop.xlane.xlu0 %321
  %v323 = vrcp.pop %v322
  %v324 = vmul.f32 %v319, %v323
  %v325 = vlog2.pop %v322
  %v326 = vmul.f32 %v325, 0.6931472
  %v327 = vsub.f32 %v317, %v326
  %v328 = vsub.f32 %v327, %v313
  %v329 = vmul.f32 %v324, %v328
  %v330 = vsel %vm288, %v329, 0.0
  %331 = vadd.xlane.f32.xlu0 %v330
  %v332 = vpop.xlane.xlu0 %331
  %v333 = vrot.slane %v332, 4
  %v334 = vadd.f32 %v332, %v333
  %v335 = vrot.slane %v334, 2
  %v336 = vadd.f32 %v334, %v335
  %v337 = vrot.slane %v336, 1
  %v338 = vadd.f32 %v336, %v337
  %v339 = vmul.f32 %v338, 0.125
  %v340 = vadd.f32 %v284, %v339
  %v341 = vld [vmem:[%s4] sm:$0xff]
  %v342 = vld [vmem:[%s5] sm:$0xff]
  %v343 = vmul.f32 %v341, %v341
  %v344 = vsel %vm68, %v343, 0.0
  %345 = vadd.xlane.f32.xlu0 %v344
  %v346 = vpop.xlane.xlu0 %345
  %v347 = vadd.f32 %v346, 1e-24
  %v348 = vrsqrt.pop %v347
  %v349 = vmul.f32 %v341, %v348
  %v350 = vmul.f32 %v342, %v342
  %v351 = vsel %vm68, %v350, 0.0
  %352 = vadd.xlane.f32.xlu0 %v351
  %v353 = vpop.xlane.xlu0 %352
  %v354 = vadd.f32 %v353, 1e-24
  %v355 = vrsqrt.pop %v354
  %v356 = vmul.f32 %v342, %v355
  %v357 = vsel %vm68, %v349, -inf
  %358 = vmax.xlane.f32.xlu0 %v357
  %v359 = vpop.xlane.xlu0 %358
  %v360 = vsub.f32 %v349, %v359
  %v361 = vmul.f32 %v360, 1.442695
  %v362 = vpow.pop %v361
  %v363 = vsel %vm68, %v362, 0.0
  %364 = vadd.xlane.f32.xlu0 %v363
  %v365 = vpop.xlane.xlu0 %364
  %v366 = vlog2.pop %v365
  %v367 = vmul.f32 %v366, 0.6931472
  %v368 = vsub.f32 %v360, %v367
  %v369 = vsel %vm68, %v356, -inf
  %370 = vmax.xlane.f32.xlu0 %v369
  %v371 = vpop.xlane.xlu0 %370
  %v372 = vsub.f32 %v356, %v371
  %v373 = vmul.f32 %v372, 1.442695
  %v374 = vpow.pop %v373
  %v375 = vsel %vm68, %v374, 0.0
  %376 = vadd.xlane.f32.xlu0 %v375
  %v377 = vpop.xlane.xlu0 %376
  %v378 = vrcp.pop %v377
  %v379 = vmul.f32 %v374, %v378
  %v380 = vlog2.pop %v377
  %v381 = vmul.f32 %v380, 0.6931472
  %v382 = vsub.f32 %v372, %v381
  %v383 = vsub.f32 %v382, %v368
  %v384 = vmul.f32 %v379, %v383
  %v385 = vsel %vm68, %v384, 0.0
  %386 = vadd.xlane.f32.xlu0 %v385
  %v387 = vpop.xlane.xlu0 %386
  %v388 = vrot.slane %v387, 4
  %v389 = vadd.f32 %v387, %v388
  %v390 = vrot.slane %v389, 2
  %v391 = vadd.f32 %v389, %v390
  %v392 = vrot.slane %v391, 1
  %v393 = vadd.f32 %v391, %v392
  %v394 = vmul.f32 %v393, 0.125
  %v395 = vadd.f32 %v340, %v394
  %v396 = vld [vmem:[%s6] sm:$0xf]
  %v397 = vld [vmem:[%s7] sm:$0xf]
  %vm398 = vcmask 125952
  %v399 = vsel %vm398, %v396, -inf
  %400 = vmax.xlane.f32.xlu0 %v399
  %v401 = vpop.xlane.xlu0 %400
  %v402 = vsub.f32 %v396, %v401
  %v403 = vmul.f32 %v402, 1.442695
  %v404 = vpow.pop %v403
  %v405 = vsel %vm398, %v404, 0.0
  %406 = vadd.xlane.f32.xlu0 %v405
  %v407 = vpop.xlane.xlu0 %406
  %v408 = vrcp.pop %v407
  %v409 = vmul.f32 %v404, %v408
  %v410 = vsel %vm398, %v397, -inf
  %411 = vmax.xlane.f32.xlu0 %v410
  %v412 = vpop.xlane.xlu0 %411
  %v413 = vsub.f32 %v397, %v412
  %v414 = vmul.f32 %v413, 1.442695
  %v415 = vpow.pop %v414
  %v416 = vsel %vm398, %v415, 0.0
  %417 = vadd.xlane.f32.xlu0 %v416
  %v418 = vpop.xlane.xlu0 %417
  %v419 = vrcp.pop %v418
  %v420 = vmul.f32 %v415, %v419
  %v421 = vsel %vm398, %v409, 0.0
  %422 = vadd.xlane.f32.xlu0 %v421
  %v423 = vpop.xlane.xlu0 %422
  %v424 = vmul.f32 %v423, %v202
  %v425 = vsub.f32 %v409, %v424
  %v426 = vsel %vm398, %v420, 0.0
  %427 = vadd.xlane.f32.xlu0 %v426
  %v428 = vpop.xlane.xlu0 %427
  %v429 = vmul.f32 %v428, %v202
  %v430 = vsub.f32 %v420, %v429
  %v431 = vmul.f32 %v425, %v430
  %v432 = vsel %vm398, %v431, 0.0
  %433 = vadd.xlane.f32.xlu0 %v432
  %v434 = vpop.xlane.xlu0 %433
  %v435 = vmul.f32 %v425, %v425
  %v436 = vsel %vm398, %v435, 0.0
  %437 = vadd.xlane.f32.xlu0 %v436
  %v438 = vpop.xlane.xlu0 %437
  %v439 = vmul.f32 %v430, %v430
  %v440 = vsel %vm398, %v439, 0.0
  %441 = vadd.xlane.f32.xlu0 %v440
  %v442 = vpop.xlane.xlu0 %441
  %v443 = vmul.f32 %v438, %v442
  %v444 = vadd.f32 %v443, 1e-08
  %v445 = vrsqrt.pop %v444
  %v446 = vmul.f32 %v434, %v445
  %vm447 = vcmask 1043456
  %v448 = vsel %vm447, %v446, 0.0
  %v449 = vrot.slane %v448, 4
  %v450 = vadd.f32 %v448, %v449
  %v451 = vrot.slane %v450, 2
  %v452 = vadd.f32 %v450, %v451
  %v453 = vrot.slane %v452, 1
  %v454 = vadd.f32 %v452, %v453
  %v455 = vmul.f32 %v454, 0.25
  %v456 = vsub.f32 1.0, %v455
  %v457 = vrot.slane %v421, 4
  %v458 = vadd.f32 %v421, %v457
  %v459 = vrot.slane %v458, 2
  %v460 = vadd.f32 %v458, %v459
  %v461 = vrot.slane %v460, 1
  %v462 = vadd.f32 %v460, %v461
  %v463 = vrcp.pop 4.0
  %v464 = vmul.f32 %v462, %v463
  %v465 = vsub.f32 %v409, %v464
  %v466 = vrot.slane %v426, 4
  %v467 = vadd.f32 %v426, %v466
  %v468 = vrot.slane %v467, 2
  %v469 = vadd.f32 %v467, %v468
  %v470 = vrot.slane %v469, 1
  %v471 = vadd.f32 %v469, %v470
  %v472 = vmul.f32 %v471, %v463
  %v473 = vsub.f32 %v420, %v472
  %v474 = vmul.f32 %v465, %v473
  %v475 = vsel %vm398, %v474, 0.0
  %v476 = vrot.slane %v475, 4
  %v477 = vadd.f32 %v475, %v476
  %v478 = vrot.slane %v477, 2
  %v479 = vadd.f32 %v477, %v478
  %v480 = vrot.slane %v479, 1
  %v481 = vadd.f32 %v479, %v480
  %v482 = vmul.f32 %v465, %v465
  %v483 = vsel %vm398, %v482, 0.0
  %v484 = vrot.slane %v483, 4
  %v485 = vadd.f32 %v483, %v484
  %v486 = vrot.slane %v485, 2
  %v487 = vadd.f32 %v485, %v486
  %v488 = vrot.slane %v487, 1
  %v489 = vadd.f32 %v487, %v488
  %v490 = vmul.f32 %v473, %v473
  %v491 = vsel %vm398, %v490, 0.0
  %v492 = vrot.slane %v491, 4
  %v493 = vadd.f32 %v491, %v492
  %v494 = vrot.slane %v493, 2
  %v495 = vadd.f32 %v493, %v494
  %v496 = vrot.slane %v495, 1
  %v497 = vadd.f32 %v495, %v496
  %v498 = vmul.f32 %v489, %v497
  %v499 = vadd.f32 %v498, 1e-08
  %v500 = vrsqrt.pop %v499
  %v501 = vmul.f32 %v481, %v500
  %v502 = vsel %vm68, %v501, 0.0
  %503 = vadd.xlane.f32.xlu0 %v502
  %v504 = vpop.xlane.xlu0 %503
  %v505 = vmul.f32 %v504, 0.0625
  %v506 = vsub.f32 1.0, %v505
  %v507 = vadd.f32 %v456, %v506
  %v508 = vadd.f32 %v395, %v507
  %v509 = vld [vmem:[%s12] sm:$0xff]
  %510 = vset.pattern.permute.xlu0 0
  %511 = vperm.xlu0 %510, %v509
  %v512 = vpop.permute.xlu0 %511
  %vm513 = vcmp.eq.s32.totalorder %v51, %v512
  %v514 = vsel %vm513, 1, 0
  %v515 = vcvt.s32.f32 %v514
  %v516 = vld [vmem:[%s8] sm:$0x3]
  %v517 = vld [vmem:[%s13] sm:$0x3]
  %518 = vset.pattern.permute.xlu0 0
  %519 = vperm.xlu0 %518, %v517
  %v520 = vpop.permute.xlu0 %519
  %vm521 = vcmp.eq.s32.totalorder %v51, %v520
  %v522 = vsel %vm521, 1, 0
  %v523 = vcvt.s32.f32 %v522
  %v524 = vmul.f32 %v516, 0.25
  %v525 = vld [vmem:[%s9] sm:$0x3]
  %v526 = vmul.f32 %v525, 0.25
  %vm527 = vcmask 25600
  %v528 = vsel %vm527, %v524, -inf
  %529 = vmax.xlane.f32.xlu0 %v528
  %v530 = vpop.xlane.xlu0 %529
  %v531 = vsub.f32 %v524, %v530
  %v532 = vmul.f32 %v531, 1.442695
  %v533 = vpow.pop %v532
  %v534 = vsel %vm527, %v533, 0.0
  %535 = vadd.xlane.f32.xlu0 %v534
  %v536 = vpop.xlane.xlu0 %535
  %v537 = vlog2.pop %v536
  %v538 = vmul.f32 %v537, 0.6931472
  %v539 = vsub.f32 %v531, %v538
  %v540 = vsel %vm527, %v526, -inf
  %541 = vmax.xlane.f32.xlu0 %v540
  %v542 = vpop.xlane.xlu0 %541
  %v543 = vsub.f32 %v526, %v542
  %v544 = vmul.f32 %v543, 1.442695
  %v545 = vpow.pop %v544
  %v546 = vsel %vm527, %v545, 0.0
  %547 = vadd.xlane.f32.xlu0 %v546
  %v548 = vpop.xlane.xlu0 %547
  %v549 = vrcp.pop %v548
  %v550 = vmul.f32 %v545, %v549
  %v551 = vlog2.pop %v548
  %v552 = vmul.f32 %v551, 0.6931472
  %v553 = vsub.f32 %v543, %v552
  %v554 = vsub.f32 %v553, %v539
  %v555 = vmul.f32 %v550, %v554
  %v556 = vsel %vm527, %v555, 0.0
  %557 = vadd.xlane.f32.xlu0 %v556
  %v558 = vpop.xlane.xlu0 %557
  %vm559 = vcmask 1041408
  %v560 = vsel %vm559, %v558, 0.0
  %v561 = vrot.slane %v560, 4
  %v562 = vadd.f32 %v560, %v561
  %v563 = vrot.slane %v562, 2
  %v564 = vadd.f32 %v562, %v563
  %v565 = vrot.slane %v564, 1
  %v566 = vadd.f32 %v564, %v565
  %v567 = vmul.f32 %v566, 0.5
  %v568 = vsel %vm68, %v341, -inf
  %569 = vmax.xlane.f32.xlu0 %v568
  %v570 = vpop.xlane.xlu0 %569
  %v571 = vsub.f32 %v341, %v570
  %v572 = vmul.f32 %v571, 1.442695
  %v573 = vpow.pop %v572
  %v574 = vsel %vm68, %v573, 0.0
  %575 = vadd.xlane.f32.xlu0 %v574
  %v576 = vpop.xlane.xlu0 %575
  %v577 = vlog2.pop %v576
  %v578 = vmul.f32 %v577, 0.6931472
  %v579 = vadd.f32 %v578, %v570
  %v580 = vsub.f32 %v341, %v579
  %v581 = vmul.f32 %v515, %v580
  %v582 = vsel %vm68, %v581, 0.0
  %583 = vadd.xlane.f32.xlu0 %v582
  %v584 = vpop.xlane.xlu0 %583
  %v585 = vsub.f32 0.0, %v584
  %v586 = vrot.slane %v585, 4
  %v587 = vadd.f32 %v585, %v586
  %v588 = vrot.slane %v587, 2
  %v589 = vadd.f32 %v587, %v588
  %v590 = vrot.slane %v589, 1
  %v591 = vadd.f32 %v589, %v590
  %v592 = vmul.f32 %v591, 0.125
  %v593 = vsel %vm527, %v516, -inf
  %594 = vmax.xlane.f32.xlu0 %v593
  %v595 = vpop.xlane.xlu0 %594
  %v596 = vsub.f32 %v516, %v595
  %v597 = vmul.f32 %v596, 1.442695
  %v598 = vpow.pop %v597
  %v599 = vsel %vm527, %v598, 0.0
  %600 = vadd.xlane.f32.xlu0 %v599
  %v601 = vpop.xlane.xlu0 %600
  %v602 = vlog2.pop %v601
  %v603 = vmul.f32 %v602, 0.6931472
  %v604 = vadd.f32 %v603, %v595
  %v605 = vsub.f32 %v516, %v604
  %v606 = vmul.f32 %v523, %v605
  %v607 = vsel %vm527, %v606, 0.0
  %608 = vadd.xlane.f32.xlu0 %v607
  %v609 = vpop.xlane.xlu0 %608
  %v610 = vsub.f32 0.0, %v609
  %v611 = vsel %vm559, %v610, 0.0
  %v612 = vrot.slane %v611, 4
  %v613 = vadd.f32 %v611, %v612
  %v614 = vrot.slane %v613, 2
  %v615 = vadd.f32 %v613, %v614
  %v616 = vrot.slane %v615, 1
  %v617 = vadd.f32 %v615, %v616
  %v618 = vmul.f32 %v617, 0.5
  %v619 = vadd.f32 %v592, %v618
  %v620 = vmul.f32 %v567, 16.0
  %v621 = vadd.f32 %v619, %v620
  %vm622 = vcmp.eq.s32.totalorder %v51, 0
  %v623 = vsel %vm622, %v175, 0.0
  %v624 = vadd.f32 %v623, 0.0
  %vm625 = vcmp.eq.s32.totalorder %v51, 1
  %v626 = vsel %vm625, %v508, 0.0
  %v627 = vadd.f32 %v624, %v626
  %vm628 = vcmp.eq.s32.totalorder %v51, 2
  %v629 = vsel %vm628, %v621, 0.0
  %v630 = vadd.f32 %v627, %v629
  %631 = vst [vmem:[%s14] sm:$0x1] %v630
  // Predicated region
  $region58: #{hcrd_forward.73} parent=0 // pred_check
    _
  $region59: #{hcrd_forward.73} parent=0 // pred_check_branch
    %633 = sbr.rel (0) target = $region61
  $region60: #{hcrd_forward.73} parent=0 // pred_region
    _
  $region61: #{hcrd_forward.73} parent=0 // pred_fallthru
    _
  // Predicated region
  $region62: #{hcrd_forward.73} parent=0 // pred_check
    _
  $region63: #{hcrd_forward.73} parent=0 // pred_check_branch
    %635 = sbr.rel (0) target = $region65
  $region64: #{hcrd_forward.73} parent=0 // pred_region
    _
  $region65: #{hcrd_forward.73} parent=0 // pred_fallthru
    _

</llo_original>
